<compile_context>
chip_gen: v7x
topology: tpu7x:2x2x1
jax: 0.10.0
libtpu: 0.0.40
codegen_flags: <defaults>
</compile_context>

<pallas_src>
import functools
import math

import jax
import jax.numpy as jnp
from jax import lax
from jax.experimental import pallas as pl
from jax.experimental.pallas import tpu as pltpu


_VMEM_LIMIT = 64 * 1024 * 1024  # safe upper bound across v5e/v6e/v7x


# ----------------------------------------------------------------------------
# Helpers
# ----------------------------------------------------------------------------
def _cp(*sems):
    return pltpu.CompilerParams(dimension_semantics=sems,
                                vmem_limit_bytes=_VMEM_LIMIT)


def _choose_row_tile(m, target=512):
    """Row tile: multiple of 8, <= target, and >= 2 grid steps when possible
    (so both v7x TensorCores get work)."""
    if m <= 8:
        return 8
    cap = m // 2 if m >= 16 else m
    tm = min(target, cap)
    return max(8, (tm // 8) * 8)


def _choose_col_tile(n, target=1024):
    """Column (N / hidden) tile: full dim if small, else a multiple of 128
    that divides n (keeps the (8,128) block constraint and lane-dense stores)."""
    if n <= target:
        return n
    if n % 128 != 0:
        return n  # full dim is always a legal block
    t = (target // 128) * 128
    while t >= 128:
        if n % t == 0:
            return t
        t -= 128
    return n


def _pad_rows(x, m_pad):
    m = x.shape[0]
    if m == m_pad:
        return x
    return jnp.pad(x, ((0, m_pad - m), (0, 0)))


def _norm_f32(y, alpha, bias, eps):
    """torch-style Norm on fp32 rows: alpha*(y-mean)/(std_unbiased+eps)+bias.

    The divide is replaced by an EUP reciprocal (set approx=False for a
    bit-closer match to the PyTorch reference)."""
    d = y.shape[-1]
    mean = jnp.mean(y, axis=-1, keepdims=True)
    c = y - mean
    var = jnp.sum(c * c, axis=-1, keepdims=True) * (1.0 / max(d - 1, 1))
    inv = pl.reciprocal(jnp.sqrt(var) + eps, approx=True)
    return alpha * c * inv + bias


def _head_attention(q, k, v):
    """Single-head attention on VMEM tiles (scale pre-folded into q weights)."""
    s = lax.dot_general(q, k, dimension_numbers=(((1,), (1,)), ((), ())),
                        preferred_element_type=jnp.float32)       # (Sq, Sk)
    s = s - jnp.max(s, axis=-1, keepdims=True)
    p = jnp.exp(s)
    p = p * pl.reciprocal(jnp.sum(p, axis=-1, keepdims=True), approx=True)
    return jnp.dot(p.astype(v.dtype), v, preferred_element_type=jnp.float32)


# ----------------------------------------------------------------------------
# Kernels
# ----------------------------------------------------------------------------
def _linear_kernel(x_ref, w_ref, b_ref, o_ref):
    # o = x @ w + b   (row tile x N tile)
    acc = jnp.dot(x_ref[...], w_ref[...], preferred_element_type=jnp.float32)
    o_ref[...] = (acc + b_ref[...].astype(jnp.float32)).astype(o_ref.dtype)


def _self_attn_kernel(qkv_ref, o_ref, *, n_head, dh, dm):
    # one batch per grid step; qkv token-major (S, 3D), columns = [Q | K | V],
    # each head-major inside.  Per-head slicing happens in VMEM/vregs; the
    # context is written back token-major (S, D) -> lane-dense HBM writeback.
    qkv = qkv_ref[0]                                              # (S, 3D)
    for h in range(n_head):                                       # small H, unrolled
        c0 = h * dh
        q = qkv[:, c0:c0 + dh]
        k = qkv[:, dm + c0:dm + c0 + dh]
        v = qkv[:, 2 * dm + c0:2 * dm + c0 + dh]
        o_ref[0, :, c0:c0 + dh] = _head_attention(q, k, v).astype(o_ref.dtype)


def _cross_attn_kernel(q_ref, kv_ref, o_ref, *, n_head, dh, dm):
    # q token-major (St, D), kv token-major (Ss, 2D) = [K | V]
    qa = q_ref[0]
    kva = kv_ref[0]
    for h in range(n_head):
        c0 = h * dh
        q = qa[:, c0:c0 + dh]
        k = kva[:, c0:c0 + dh]
        v = kva[:, dm + c0:dm + c0 + dh]
        o_ref[0, :, c0:c0 + dh] = _head_attention(q, k, v).astype(o_ref.dtype)


def _linear_addnorm_kernel(x_ref, w_ref, b_ref, r_ref, a_ref, g_ref, o_ref,
                           *, eps):
    # o = Norm(resid + x @ w + b)   (attention output projection epilogue)
    y = jnp.dot(x_ref[...], w_ref[...], preferred_element_type=jnp.float32)
    y = y + b_ref[...].astype(jnp.float32) + r_ref[...].astype(jnp.float32)
    o_ref[...] = _norm_f32(y, a_ref[...].astype(jnp.float32),
                           g_ref[...].astype(jnp.float32), eps
                           ).astype(o_ref.dtype)


def _ffn_addnorm_kernel(x_ref, w1_ref, b1_ref, w2_ref, b2_ref, a_ref, g_ref,
                        o_ref, acc_ref, *, eps):
    # o = Norm(x + relu(x @ w1 + b1) @ w2 + b2), hidden dim tiled on grid axis 1
    j = pl.program_id(1)

    @pl.when(j == 0)
    def _():
        acc_ref[...] = jnp.zeros_like(acc_ref)

    x = x_ref[...]
    h = jnp.dot(x, w1_ref[...], preferred_element_type=jnp.float32)
    h = jnp.maximum(h + b1_ref[...].astype(jnp.float32), 0.0)
    # NOTE: for bf16 activations this rounds the fp32 intermediate before the
    # second MXU pass; exact for fp32 activations.
    acc_ref[...] += jnp.dot(h.astype(x.dtype), w2_ref[...],
                            preferred_element_type=jnp.float32)

    @pl.when(j == pl.num_programs(1) - 1)
    def _():
        y = (acc_ref[...] + b2_ref[...].astype(jnp.float32)
             + x.astype(jnp.float32))
        o_ref[...] = _norm_f32(y, a_ref[...].astype(jnp.float32),
                               g_ref[...].astype(jnp.float32), eps
                               ).astype(o_ref.dtype)


# ----------------------------------------------------------------------------
# Wrappers
# ----------------------------------------------------------------------------
def linear(x2d, w, b, *, row_target=512, col_target=1024):
    """y = x @ w + b, row-tiled and N-tiled (both axes parallel)."""
    M, K = x2d.shape
    N = w.shape[1]
    tm = _choose_row_tile(M, row_target)
    m_pad = pl.cdiv(M, tm) * tm
    tn = _choose_col_tile(N, col_target)
    out = pl.pallas_call(
        _linear_kernel,
        out_shape=jax.ShapeDtypeStruct((m_pad, N), x2d.dtype),
        grid=(m_pad // tm, N // tn),
        in_specs=[pl.BlockSpec((tm, K), lambda i, j: (i, 0)),
                  pl.BlockSpec((K, tn), lambda i, j: (0, j)),
                  pl.BlockSpec((1, tn), lambda i, j: (0, j))],
        out_specs=pl.BlockSpec((tm, tn), lambda i, j: (i, j)),
        compiler_params=_cp("parallel", "parallel"),
    )(_pad_rows(x2d, m_pad), w, b)
    return out[:M] if m_pad != M else out


def self_attention(qkv_bsd, n_head):
    """Per-batch self-attention on a token-major fused QKV slab (B, S, 3D)."""
    B, S, threeD = qkv_bsd.shape
    D = threeD // 3
    dh = D // n_head
    return pl.pallas_call(
        functools.partial(_self_attn_kernel, n_head=n_head, dh=dh, dm=D),
        out_shape=jax.ShapeDtypeStruct((B, S, D), qkv_bsd.dtype),
        grid=(B,),
        in_specs=[pl.BlockSpec((1, S, threeD), lambda b: (b, 0, 0))],
        out_specs=pl.BlockSpec((1, S, D), lambda b: (b, 0, 0)),
        compiler_params=_cp("parallel"),
    )(qkv_bsd)


def cross_attention(q_bsd, kv_bsd, n_head):
    """Per-batch cross-attention: q (B, St, D), kv (B, Ss, 2D) token-major."""
    B, St, D = q_bsd.shape
    Ss = kv_bsd.shape[1]
    dh = D // n_head
    return pl.pallas_call(
        functools.partial(_cross_attn_kernel, n_head=n_head, dh=dh, dm=D),
        out_shape=jax.ShapeDtypeStruct((B, St, D), q_bsd.dtype),
        grid=(B,),
        in_specs=[pl.BlockSpec((1, St, D), lambda b: (b, 0, 0)),
                  pl.BlockSpec((1, Ss, 2 * D), lambda b: (b, 0, 0))],
        out_specs=pl.BlockSpec((1, St, D), lambda b: (b, 0, 0)),
        compiler_params=_cp("parallel"),
    )(q_bsd, kv_bsd)


def linear_add_norm(x2d, w, b, resid2d, alpha, bias, eps=1e-6, row_target=512):
    """Fused output projection + residual add + Norm (full K = D contraction)."""
    M, K = x2d.shape
    N = w.shape[1]
    tm = _choose_row_tile(M, row_target)
    m_pad = pl.cdiv(M, tm) * tm
    out = pl.pallas_call(
        functools.partial(_linear_addnorm_kernel, eps=eps),
        out_shape=jax.ShapeDtypeStruct((m_pad, N), resid2d.dtype),
        grid=(m_pad // tm,),
        in_specs=[pl.BlockSpec((tm, K), lambda i: (i, 0)),
                  pl.BlockSpec((K, N), lambda i: (0, 0)),
                  pl.BlockSpec((1, N), lambda i: (0, 0)),
                  pl.BlockSpec((tm, N), lambda i: (i, 0)),
                  pl.BlockSpec((1, N), lambda i: (0, 0)),
                  pl.BlockSpec((1, N), lambda i: (0, 0))],
        out_specs=pl.BlockSpec((tm, N), lambda i: (i, 0)),
        compiler_params=_cp("parallel"),
    )(_pad_rows(x2d, m_pad), w, b, _pad_rows(resid2d, m_pad), alpha, bias)
    return out[:M] if m_pad != M else out


def ffn_add_norm(x2d, w1, b1, w2, b2, alpha, bias, eps=1e-6,
                 row_target=256, hid_target=512):
    """Fused linear1 -> ReLU -> linear2 -> residual -> Norm, hidden-dim tiled."""
    M, D = x2d.shape
    Hd = w1.shape[1]
    tm = _choose_row_tile(M, row_target)
    m_pad = pl.cdiv(M, tm) * tm
    th = _choose_col_tile(Hd, hid_target)
    out = pl.pallas_call(
        functools.partial(_ffn_addnorm_kernel, eps=eps),
        out_shape=jax.ShapeDtypeStruct((m_pad, D), x2d.dtype),
        grid=(m_pad // tm, Hd // th),
        in_specs=[pl.BlockSpec((tm, D), lambda i, j: (i, 0)),
                  pl.BlockSpec((D, th), lambda i, j: (0, j)),
                  pl.BlockSpec((1, th), lambda i, j: (0, j)),
                  pl.BlockSpec((th, D), lambda i, j: (j, 0)),
                  pl.BlockSpec((1, D), lambda i, j: (0, 0)),
                  pl.BlockSpec((1, D), lambda i, j: (0, 0)),
                  pl.BlockSpec((1, D), lambda i, j: (0, 0))],
        out_specs=pl.BlockSpec((tm, D), lambda i, j: (i, 0)),
        scratch_shapes=[pltpu.VMEM((tm, D), jnp.float32)],
        compiler_params=_cp("parallel", "arbitrary"),
    )(_pad_rows(x2d, m_pad), w1, b1, w2, b2, alpha, bias)
    return out[:M] if m_pad != M else out


# ----------------------------------------------------------------------------
# Decoder layer forward (dropout = identity / eval mode)
# ----------------------------------------------------------------------------
def decoder_layer(inp_decode, inp_memory, params, n_head):
    B, St, D = inp_decode.shape
    Ss = inp_memory.shape[1]
    x0 = inp_decode.reshape(B * St, D)
    mem2d = inp_memory.reshape(B * Ss, D)

    # --- masked self-attention + add & norm1 (mask_tgt is None here) ---
    pa = params["mask_attention"]
    qkv = linear(x0, pa["w_qkv"], pa["b_qkv"])                    # (B*St, 3D)
    ctx = self_attention(qkv.reshape(B, St, 3 * D), n_head)       # (B, St, D)
    x1 = linear_add_norm(ctx.reshape(B * St, D), pa["wo"], pa["bo"], x0,
                         params["norm1_alpha"], params["norm1_bias"])

    # --- cross-attention + add & norm2 (mask_src is None here) ---
    pc = params["att"]
    q = linear(x1, pc["wq"], pc["bq"])                            # (B*St, D)
    kv = linear(mem2d, pc["w_kv"], pc["b_kv"])                    # (B*Ss, 2D)
    ctx = cross_attention(q.reshape(B, St, D), kv.reshape(B, Ss, 2 * D), n_head)
    x2 = linear_add_norm(ctx.reshape(B * St, D), pc["wo"], pc["bo"], x1,
                         params["norm2_alpha"], params["norm2_bias"])

    # --- feed-forward + add & norm3 (residual = x2, fully fused) ---
    out = ffn_add_norm(x2, params["w1"], params["b1"],
                       params["w2"], params["b2"],
                       params["norm3_alpha"], params["norm3_bias"])
    return out.reshape(B, St, D)


# ----------------------------------------------------------------------------
# Deterministic parameter construction
# (1/sqrt(Dh) is folded into the Q projection weights & biases here, so the
#  attention kernels do no runtime scaling; forward equals the PyTorch module
#  evaluated with the corresponding unscaled Q weights.)
# ----------------------------------------------------------------------------
def init_params(key, d_model, n_head, n_hidden, dtype=jnp.float32):
    assert d_model % n_head == 0
    dh = d_model // n_head
    q_scale = 1.0 / math.sqrt(dh)
    keys = jax.random.split(key, 12)
    it = iter(keys)

    def w(shape, scale=0.02):
        return jax.random.normal(next(it), shape, jnp.float32) * scale

    cast = lambda x: x.astype(dtype)
    zeros = lambda n: jnp.zeros((1, n), dtype)
    ones = lambda n: jnp.ones((1, n), dtype)

    # self-attention: fused [Q | K | V] projection, Q columns pre-scaled
    w_qkv = cast(jnp.concatenate(
        [w((d_model, d_model)) * q_scale,
         w((d_model, d_model)),
         w((d_model, d_model))], axis=1))
    # cross-attention: Q projection (pre-scaled) + fused [K | V] of memory
    wq_c = cast(w((d_model, d_model)) * q_scale)
    w_kv = cast(jnp.concatenate(
        [w((d_model, d_model)), w((d_model, d_model))], axis=1))

    return {
        "mask_attention": {
            "w_qkv": w_qkv, "b_qkv": zeros(3 * d_model),
            "wo": cast(w((d_model, d_model))), "bo": zeros(d_model),
        },
        "att": {
            "wq": wq_c, "bq": zeros(d_model),
            "w_kv": w_kv, "b_kv": zeros(2 * d_model),
            "wo": cast(w((d_model, d_model))), "bo": zeros(d_model),
        },
        "w1": cast(w((d_model, n_hidden))), "b1": zeros(n_hidden),
        "w2": cast(w((n_hidden, d_model))), "b2": zeros(d_model),
        "norm1_alpha": ones(d_model), "norm1_bias": zeros(d_model),
        "norm2_alpha": ones(d_model), "norm2_bias": zeros(d_model),
        "norm3_alpha": ones(d_model), "norm3_bias": zeros(d_model),
    }


# ----------------------------------------------------------------------------
# Main
# ----------------------------------------------------------------------------
if __name__ == "__main__":
    B, S_tgt, S_src = 2, 8, 8
    d_model, n_head, n_hidden = 32, 4, 64

    key = jax.random.PRNGKey(0)
    k_dec, k_mem, k_par = jax.random.split(key, 3)

    inp_decode = jax.random.normal(k_dec, (B, S_tgt, d_model), jnp.float32)
    inp_memory = jax.random.normal(k_mem, (B, S_src, d_model), jnp.float32)
    params = init_params(k_par, d_model, n_head, n_hidden)

    fwd = jax.jit(functools.partial(decoder_layer, n_head=n_head))
    out = fwd(inp_decode, inp_memory, params)
    jax.block_until_ready(out)

    assert out.shape == (B, S_tgt, d_model)
    assert bool(jnp.all(jnp.isfinite(out)))
    print("KERNEL_OK")
</pallas_src>

<mosaic_0001>
module attributes {stable_mosaic.version = 11 : i64} {
  func.func @_self_attn_kernel(%arg0: i32, %arg1: memref<1x8x96xf32, #tpu.memory_space<vmem>>, %arg2: memref<1x8x32xf32, #tpu.memory_space<vmem>>) attributes {dimension_semantics = [#tpu.dimension_semantics<parallel>], iteration_bounds = array<i64: 2>, scalar_prefetch = 0 : i64, scratch_operands = 0 : i64, tpu.core_type = #tpu.core_type<tc>, window_params = [{transform_indices = @transform_0, window_bounds = array<i64: 1, 8, 96>}, {transform_indices = @transform_1, window_bounds = array<i64: 1, 8, 32>}]} {
    %c0 = arith.constant 0 : index
    %c0_0 = arith.constant 0 : index
    %c0_1 = arith.constant 0 : index
    %0 = vector.load %arg1[%c0, %c0_0, %c0_1] : memref<1x8x96xf32, #tpu.memory_space<vmem>>, vector<1x8x96xf32>
    %1 = vector.shape_cast %0 : vector<1x8x96xf32> to vector<8x96xf32>
    %2 = vector.extract_strided_slice %1 {offsets = [0, 0], sizes = [8, 8], strides = [1, 1]} : vector<8x96xf32> to vector<8x8xf32>
    %3 = vector.extract_strided_slice %1 {offsets = [0, 32], sizes = [8, 8], strides = [1, 1]} : vector<8x96xf32> to vector<8x8xf32>
    %4 = vector.extract_strided_slice %1 {offsets = [0, 64], sizes = [8, 8], strides = [1, 1]} : vector<8x96xf32> to vector<8x8xf32>
    %cst = arith.constant dense<0.000000e+00> : vector<8x8xf32>
    %5 = tpu.matmul %2, %3, %cst {dimension_numbers = #tpu.dot_dimension_numbers<[1], [1], [0], [0], [0, 0, 1, 0], [], []>} : vector<8x8xf32>, vector<8x8xf32>, vector<8x8xf32> -> vector<8x8xf32>
    %cst_2 = arith.constant dense<0xFF800000> : vector<8xf32>
    %6 = vector.multi_reduction <maximumf>, %5, %cst_2 [1] : vector<8x8xf32> to vector<8xf32>
    %7 = vector.shape_cast %6 : vector<8xf32> to vector<8x1xf32>
    %8 = vector.broadcast %7 : vector<8x1xf32> to vector<8x8xf32>
    %9 = arith.subf %5, %8 : vector<8x8xf32>
    %10 = math.exp %9 : vector<8x8xf32>
    %cst_3 = arith.constant dense<0.000000e+00> : vector<8xf32>
    %11 = vector.multi_reduction <add>, %10, %cst_3 [1] : vector<8x8xf32> to vector<8xf32>
    %12 = vector.shape_cast %11 : vector<8xf32> to vector<8x1xf32>
    %13 = tpu.reciprocal %12 {approx = true} : vector<8x1xf32> -> vector<8x1xf32>
    %14 = vector.broadcast %13 : vector<8x1xf32> to vector<8x8xf32>
    %15 = arith.mulf %10, %14 : vector<8x8xf32>
    %cst_4 = arith.constant dense<0.000000e+00> : vector<8x8xf32>
    %16 = tpu.matmul %15, %4, %cst_4 {dimension_numbers = #tpu.dot_dimension_numbers<[1], [0], [0], [1], [0, 0, 1, 1], [], []>} : vector<8x8xf32>, vector<8x8xf32>, vector<8x8xf32> -> vector<8x8xf32>
    %c0_5 = arith.constant 0 : index
    %c0_6 = arith.constant 0 : index
    %c0_7 = arith.constant 0 : index
    %17 = vector.load %arg2[%c0_5, %c0_6, %c0_7] : memref<1x8x32xf32, #tpu.memory_space<vmem>>, vector<1x8x8xf32>
    %18 = vector.shape_cast %17 : vector<1x8x8xf32> to vector<8x8xf32>
    %19 = vector.shape_cast %16 : vector<8x8xf32> to vector<1x8x8xf32>
    tpu.vector_store %arg2[%c0_5, %c0_6, %c0_7], %19 {strides = array<i32>} : memref<1x8x32xf32, #tpu.memory_space<vmem>>, vector<1x8x8xf32>,
    %20 = vector.extract_strided_slice %1 {offsets = [0, 8], sizes = [8, 8], strides = [1, 1]} : vector<8x96xf32> to vector<8x8xf32>
    %21 = vector.extract_strided_slice %1 {offsets = [0, 40], sizes = [8, 8], strides = [1, 1]} : vector<8x96xf32> to vector<8x8xf32>
    %22 = vector.extract_strided_slice %1 {offsets = [0, 72], sizes = [8, 8], strides = [1, 1]} : vector<8x96xf32> to vector<8x8xf32>
    %cst_8 = arith.constant dense<0.000000e+00> : vector<8x8xf32>
    %23 = tpu.matmul %20, %21, %cst_8 {dimension_numbers = #tpu.dot_dimension_numbers<[1], [1], [0], [0], [0, 0, 1, 0], [], []>} : vector<8x8xf32>, vector<8x8xf32>, vector<8x8xf32> -> vector<8x8xf32>
    %cst_9 = arith.constant dense<0xFF800000> : vector<8xf32>
    %24 = vector.multi_reduction <maximumf>, %23, %cst_9 [1] : vector<8x8xf32> to vector<8xf32>
    %25 = vector.shape_cast %24 : vector<8xf32> to vector<8x1xf32>
    %26 = vector.broadcast %25 : vector<8x1xf32> to vector<8x8xf32>
    %27 = arith.subf %23, %26 : vector<8x8xf32>
    %28 = math.exp %27 : vector<8x8xf32>
    %cst_10 = arith.constant dense<0.000000e+00> : vector<8xf32>
    %29 = vector.multi_reduction <add>, %28, %cst_10 [1] : vector<8x8xf32> to vector<8xf32>
    %30 = vector.shape_cast %29 : vector<8xf32> to vector<8x1xf32>
    %31 = tpu.reciprocal %30 {approx = true} : vector<8x1xf32> -> vector<8x1xf32>
    %32 = vector.broadcast %31 : vector<8x1xf32> to vector<8x8xf32>
    %33 = arith.mulf %28, %32 : vector<8x8xf32>
    %cst_11 = arith.constant dense<0.000000e+00> : vector<8x8xf32>
    %34 = tpu.matmul %33, %22, %cst_11 {dimension_numbers = #tpu.dot_dimension_numbers<[1], [0], [0], [1], [0, 0, 1, 1], [], []>} : vector<8x8xf32>, vector<8x8xf32>, vector<8x8xf32> -> vector<8x8xf32>
    %c0_12 = arith.constant 0 : index
    %c0_13 = arith.constant 0 : index
    %c8 = arith.constant 8 : index
    %35 = vector.load %arg2[%c0_12, %c0_13, %c8] : memref<1x8x32xf32, #tpu.memory_space<vmem>>, vector<1x8x8xf32>
    %36 = vector.shape_cast %35 : vector<1x8x8xf32> to vector<8x8xf32>
    %37 = vector.shape_cast %34 : vector<8x8xf32> to vector<1x8x8xf32>
    tpu.vector_store %arg2[%c0_12, %c0_13, %c8], %37 {strides = array<i32>} : memref<1x8x32xf32, #tpu.memory_space<vmem>>, vector<1x8x8xf32>,
    %38 = vector.extract_strided_slice %1 {offsets = [0, 16], sizes = [8, 8], strides = [1, 1]} : vector<8x96xf32> to vector<8x8xf32>
    %39 = vector.extract_strided_slice %1 {offsets = [0, 48], sizes = [8, 8], strides = [1, 1]} : vector<8x96xf32> to vector<8x8xf32>
    %40 = vector.extract_strided_slice %1 {offsets = [0, 80], sizes = [8, 8], strides = [1, 1]} : vector<8x96xf32> to vector<8x8xf32>
    %cst_14 = arith.constant dense<0.000000e+00> : vector<8x8xf32>
    %41 = tpu.matmul %38, %39, %cst_14 {dimension_numbers = #tpu.dot_dimension_numbers<[1], [1], [0], [0], [0, 0, 1, 0], [], []>} : vector<8x8xf32>, vector<8x8xf32>, vector<8x8xf32> -> vector<8x8xf32>
    %cst_15 = arith.constant dense<0xFF800000> : vector<8xf32>
    %42 = vector.multi_reduction <maximumf>, %41, %cst_15 [1] : vector<8x8xf32> to vector<8xf32>
    %43 = vector.shape_cast %42 : vector<8xf32> to vector<8x1xf32>
    %44 = vector.broadcast %43 : vector<8x1xf32> to vector<8x8xf32>
    %45 = arith.subf %41, %44 : vector<8x8xf32>
    %46 = math.exp %45 : vector<8x8xf32>
    %cst_16 = arith.constant dense<0.000000e+00> : vector<8xf32>
    %47 = vector.multi_reduction <add>, %46, %cst_16 [1] : vector<8x8xf32> to vector<8xf32>
    %48 = vector.shape_cast %47 : vector<8xf32> to vector<8x1xf32>
    %49 = tpu.reciprocal %48 {approx = true} : vector<8x1xf32> -> vector<8x1xf32>
    %50 = vector.broadcast %49 : vector<8x1xf32> to vector<8x8xf32>
    %51 = arith.mulf %46, %50 : vector<8x8xf32>
    %cst_17 = arith.constant dense<0.000000e+00> : vector<8x8xf32>
    %52 = tpu.matmul %51, %40, %cst_17 {dimension_numbers = #tpu.dot_dimension_numbers<[1], [0], [0], [1], [0, 0, 1, 1], [], []>} : vector<8x8xf32>, vector<8x8xf32>, vector<8x8xf32> -> vector<8x8xf32>
    %c0_18 = arith.constant 0 : index
    %c0_19 = arith.constant 0 : index
    %c16 = arith.constant 16 : index
    %53 = vector.load %arg2[%c0_18, %c0_19, %c16] : memref<1x8x32xf32, #tpu.memory_space<vmem>>, vector<1x8x8xf32>
    %54 = vector.shape_cast %53 : vector<1x8x8xf32> to vector<8x8xf32>
    %55 = vector.shape_cast %52 : vector<8x8xf32> to vector<1x8x8xf32>
    tpu.vector_store %arg2[%c0_18, %c0_19, %c16], %55 {strides = array<i32>} : memref<1x8x32xf32, #tpu.memory_space<vmem>>, vector<1x8x8xf32>,
    %56 = vector.extract_strided_slice %1 {offsets = [0, 24], sizes = [8, 8], strides = [1, 1]} : vector<8x96xf32> to vector<8x8xf32>
    %57 = vector.extract_strided_slice %1 {offsets = [0, 56], sizes = [8, 8], strides = [1, 1]} : vector<8x96xf32> to vector<8x8xf32>
    %58 = vector.extract_strided_slice %1 {offsets = [0, 88], sizes = [8, 8], strides = [1, 1]} : vector<8x96xf32> to vector<8x8xf32>
    %cst_20 = arith.constant dense<0.000000e+00> : vector<8x8xf32>
    %59 = tpu.matmul %56, %57, %cst_20 {dimension_numbers = #tpu.dot_dimension_numbers<[1], [1], [0], [0], [0, 0, 1, 0], [], []>} : vector<8x8xf32>, vector<8x8xf32>, vector<8x8xf32> -> vector<8x8xf32>
    %cst_21 = arith.constant dense<0xFF800000> : vector<8xf32>
    %60 = vector.multi_reduction <maximumf>, %59, %cst_21 [1] : vector<8x8xf32> to vector<8xf32>
    %61 = vector.shape_cast %60 : vector<8xf32> to vector<8x1xf32>
    %62 = vector.broadcast %61 : vector<8x1xf32> to vector<8x8xf32>
    %63 = arith.subf %59, %62 : vector<8x8xf32>
    %64 = math.exp %63 : vector<8x8xf32>
    %cst_22 = arith.constant dense<0.000000e+00> : vector<8xf32>
    %65 = vector.multi_reduction <add>, %64, %cst_22 [1] : vector<8x8xf32> to vector<8xf32>
    %66 = vector.shape_cast %65 : vector<8xf32> to vector<8x1xf32>
    %67 = tpu.reciprocal %66 {approx = true} : vector<8x1xf32> -> vector<8x1xf32>
    %68 = vector.broadcast %67 : vector<8x1xf32> to vector<8x8xf32>
    %69 = arith.mulf %64, %68 : vector<8x8xf32>
    %cst_23 = arith.constant dense<0.000000e+00> : vector<8x8xf32>
    %70 = tpu.matmul %69, %58, %cst_23 {dimension_numbers = #tpu.dot_dimension_numbers<[1], [0], [0], [1], [0, 0, 1, 1], [], []>} : vector<8x8xf32>, vector<8x8xf32>, vector<8x8xf32> -> vector<8x8xf32>
    %c0_24 = arith.constant 0 : index
    %c0_25 = arith.constant 0 : index
    %c24 = arith.constant 24 : index
    %71 = vector.load %arg2[%c0_24, %c0_25, %c24] : memref<1x8x32xf32, #tpu.memory_space<vmem>>, vector<1x8x8xf32>
    %72 = vector.shape_cast %71 : vector<1x8x8xf32> to vector<8x8xf32>
    %73 = vector.shape_cast %70 : vector<8x8xf32> to vector<1x8x8xf32>
    tpu.vector_store %arg2[%c0_24, %c0_25, %c24], %73 {strides = array<i32>} : memref<1x8x32xf32, #tpu.memory_space<vmem>>, vector<1x8x8xf32>,
    return
  }
  func.func @transform_0(%arg0: i32) -> (i32, i32, i32) {
    %c0_i32 = arith.constant 0 : i32
    %c0_i32_0 = arith.constant 0 : i32
    %c0_i32_1 = arith.constant 0 : i32
    return %arg0, %c0_i32, %c0_i32_0 : i32, i32, i32
  }
  func.func @transform_1(%arg0: i32) -> (i32, i32, i32) {
    %c0_i32 = arith.constant 0 : i32
    %c0_i32_0 = arith.constant 0 : i32
    %c0_i32_1 = arith.constant 0 : i32
    return %arg0, %c0_i32, %c0_i32_0 : i32, i32, i32
  }
}

module attributes {stable_mosaic.version = 11 : i64} {
  func.func @_linear_kernel(%arg0: i32, %arg1: i32, %arg2: memref<8x32xf32, #tpu.memory_space<vmem>>, %arg3: memref<32x32xf32, #tpu.memory_space<vmem>>, %arg4: memref<1x32xf32, #tpu.memory_space<vmem>>, %arg5: memref<8x32xf32, #tpu.memory_space<vmem>>) attributes {dimension_semantics = [#tpu.dimension_semantics<parallel>, #tpu.dimension_semantics<parallel>], iteration_bounds = array<i64: 2, 1>, scalar_prefetch = 0 : i64, scratch_operands = 0 : i64, tpu.core_type = #tpu.core_type<tc>, window_params = [{transform_indices = @transform_0, window_bounds = array<i64: 8, 32>}, {transform_indices = @transform_1, window_bounds = array<i64: 32, 32>}, {transform_indices = @transform_2, window_bounds = array<i64: 1, 32>}, {transform_indices = @transform_3, window_bounds = array<i64: 8, 32>}]} {
    %c0 = arith.constant 0 : index
    %c0_0 = arith.constant 0 : index
    %0 = vector.load %arg2[%c0, %c0_0] : memref<8x32xf32, #tpu.memory_space<vmem>>, vector<8x32xf32>
    %c0_1 = arith.constant 0 : index
    %c0_2 = arith.constant 0 : index
    %1 = vector.load %arg3[%c0_1, %c0_2] : memref<32x32xf32, #tpu.memory_space<vmem>>, vector<32x32xf32>
    %cst = arith.constant dense<0.000000e+00> : vector<8x32xf32>
    %2 = tpu.matmul %0, %1, %cst {dimension_numbers = #tpu.dot_dimension_numbers<[1], [0], [0], [1], [0, 0, 1, 1], [], []>} : vector<8x32xf32>, vector<32x32xf32>, vector<8x32xf32> -> vector<8x32xf32>
    %c0_3 = arith.constant 0 : index
    %c0_4 = arith.constant 0 : index
    %3 = vector.load %arg4[%c0_3, %c0_4] : memref<1x32xf32, #tpu.memory_space<vmem>>, vector<1x32xf32>
    %4 = vector.broadcast %3 : vector<1x32xf32> to vector<8x32xf32>
    %5 = arith.addf %2, %4 : vector<8x32xf32>
    %c0_5 = arith.constant 0 : index
    %c0_6 = arith.constant 0 : index
    %6 = vector.load %arg5[%c0_5, %c0_6] : memref<8x32xf32, #tpu.memory_space<vmem>>, vector<8x32xf32>
    tpu.vector_store %arg5[%c0_5, %c0_6], %5 {strides = array<i32>} : memref<8x32xf32, #tpu.memory_space<vmem>>, vector<8x32xf32>,
    return
  }
  func.func @transform_0(%arg0: i32, %arg1: i32) -> (i32, i32) {
    %c0_i32 = arith.constant 0 : i32
    %c0_i32_0 = arith.constant 0 : i32
    return %arg0, %c0_i32 : i32, i32
  }
  func.func @transform_1(%arg0: i32, %arg1: i32) -> (i32, i32) {
    %c0_i32 = arith.constant 0 : i32
    %c0_i32_0 = arith.constant 0 : i32
    return %c0_i32, %arg1 : i32, i32
  }
  func.func @transform_2(%arg0: i32, %arg1: i32) -> (i32, i32) {
    %c0_i32 = arith.constant 0 : i32
    %c0_i32_0 = arith.constant 0 : i32
    return %c0_i32, %arg1 : i32, i32
  }
  func.func @transform_3(%arg0: i32, %arg1: i32) -> (i32, i32) {
    %c0_i32 = arith.constant 0 : i32
    return %arg0, %arg1 : i32, i32
  }
}

module attributes {stable_mosaic.version = 11 : i64} {
  func.func @_linear_addnorm_kernel(%arg0: i32, %arg1: memref<8x32xf32, #tpu.memory_space<vmem>>, %arg2: memref<32x32xf32, #tpu.memory_space<vmem>>, %arg3: memref<1x32xf32, #tpu.memory_space<vmem>>, %arg4: memref<8x32xf32, #tpu.memory_space<vmem>>, %arg5: memref<1x32xf32, #tpu.memory_space<vmem>>, %arg6: memref<1x32xf32, #tpu.memory_space<vmem>>, %arg7: memref<8x32xf32, #tpu.memory_space<vmem>>) attributes {dimension_semantics = [#tpu.dimension_semantics<parallel>], iteration_bounds = array<i64: 2>, scalar_prefetch = 0 : i64, scratch_operands = 0 : i64, tpu.core_type = #tpu.core_type<tc>, window_params = [{transform_indices = @transform_0, window_bounds = array<i64: 8, 32>}, {pipeline_mode = #tpu.pipeline_mode<synchronous>, transform_indices = @transform_1, window_bounds = array<i64: 32, 32>}, {pipeline_mode = #tpu.pipeline_mode<synchronous>, transform_indices = @transform_2, window_bounds = array<i64: 1, 32>}, {transform_indices = @transform_3, window_bounds = array<i64: 8, 32>}, {pipeline_mode = #tpu.pipeline_mode<synchronous>, transform_indices = @transform_4, window_bounds = array<i64: 1, 32>}, {pipeline_mode = #tpu.pipeline_mode<synchronous>, transform_indices = @transform_5, window_bounds = array<i64: 1, 32>}, {transform_indices = @transform_6, window_bounds = array<i64: 8, 32>}]} {
    %c0 = arith.constant 0 : index
    %c0_0 = arith.constant 0 : index
    %0 = vector.load %arg1[%c0, %c0_0] : memref<8x32xf32, #tpu.memory_space<vmem>>, vector<8x32xf32>
    %c0_1 = arith.constant 0 : index
    %c0_2 = arith.constant 0 : index
    %1 = vector.load %arg2[%c0_1, %c0_2] : memref<32x32xf32, #tpu.memory_space<vmem>>, vector<32x32xf32>
    %cst = arith.constant dense<0.000000e+00> : vector<8x32xf32>
    %2 = tpu.matmul %0, %1, %cst {dimension_numbers = #tpu.dot_dimension_numbers<[1], [0], [0], [1], [0, 0, 1, 1], [], []>} : vector<8x32xf32>, vector<32x32xf32>, vector<8x32xf32> -> vector<8x32xf32>
    %c0_3 = arith.constant 0 : index
    %c0_4 = arith.constant 0 : index
    %3 = vector.load %arg3[%c0_3, %c0_4] : memref<1x32xf32, #tpu.memory_space<vmem>>, vector<1x32xf32>
    %4 = vector.broadcast %3 : vector<1x32xf32> to vector<8x32xf32>
    %5 = arith.addf %2, %4 : vector<8x32xf32>
    %c0_5 = arith.constant 0 : index
    %c0_6 = arith.constant 0 : index
    %6 = vector.load %arg4[%c0_5, %c0_6] : memref<8x32xf32, #tpu.memory_space<vmem>>, vector<8x32xf32>
    %7 = arith.addf %5, %6 : vector<8x32xf32>
    %c0_7 = arith.constant 0 : index
    %c0_8 = arith.constant 0 : index
    %8 = vector.load %arg5[%c0_7, %c0_8] : memref<1x32xf32, #tpu.memory_space<vmem>>, vector<1x32xf32>
    %c0_9 = arith.constant 0 : index
    %c0_10 = arith.constant 0 : index
    %9 = vector.load %arg6[%c0_9, %c0_10] : memref<1x32xf32, #tpu.memory_space<vmem>>, vector<1x32xf32>
    %cst_11 = arith.constant dense<0.000000e+00> : vector<8xf32>
    %10 = vector.multi_reduction <add>, %7, %cst_11 [1] : vector<8x32xf32> to vector<8xf32>
    %11 = vector.shape_cast %10 : vector<8xf32> to vector<8x1xf32>
    %cst_12 = arith.constant 3.200000e+01 : f32
    %12 = vector.broadcast %cst_12 : f32 to vector<8x1xf32>
    %13 = arith.divf %11, %12 : vector<8x1xf32>
    %14 = vector.broadcast %13 : vector<8x1xf32> to vector<8x32xf32>
    %15 = arith.subf %7, %14 : vector<8x32xf32>
    %16 = arith.mulf %15, %15 : vector<8x32xf32>
    %cst_13 = arith.constant dense<0.000000e+00> : vector<8xf32>
    %17 = vector.multi_reduction <add>, %16, %cst_13 [1] : vector<8x32xf32> to vector<8xf32>
    %18 = vector.shape_cast %17 : vector<8xf32> to vector<8x1xf32>
    %cst_14 = arith.constant 0.0322580636 : f32
    %19 = vector.broadcast %cst_14 : f32 to vector<8x1xf32>
    %20 = arith.mulf %18, %19 : vector<8x1xf32>
    %21 = math.sqrt %20 : vector<8x1xf32>
    %cst_15 = arith.constant 9.99999997E-7 : f32
    %22 = vector.broadcast %cst_15 : f32 to vector<8x1xf32>
    %23 = arith.addf %21, %22 : vector<8x1xf32>
    %24 = tpu.reciprocal %23 {approx = true} : vector<8x1xf32> -> vector<8x1xf32>
    %25 = vector.broadcast %8 : vector<1x32xf32> to vector<8x32xf32>
    %26 = arith.mulf %25, %15 : vector<8x32xf32>
    %27 = vector.broadcast %24 : vector<8x1xf32> to vector<8x32xf32>
    %28 = arith.mulf %26, %27 : vector<8x32xf32>
    %29 = vector.broadcast %9 : vector<1x32xf32> to vector<8x32xf32>
    %30 = arith.addf %28, %29 : vector<8x32xf32>
    %c0_16 = arith.constant 0 : index
    %c0_17 = arith.constant 0 : index
    %31 = vector.load %arg7[%c0_16, %c0_17] : memref<8x32xf32, #tpu.memory_space<vmem>>, vector<8x32xf32>
    tpu.vector_store %arg7[%c0_16, %c0_17], %30 {strides = array<i32>} : memref<8x32xf32, #tpu.memory_space<vmem>>, vector<8x32xf32>,
    return
  }
  func.func @transform_0(%arg0: i32) -> (i32, i32) {
    %c0_i32 = arith.constant 0 : i32
    %c0_i32_0 = arith.constant 0 : i32
    return %arg0, %c0_i32 : i32, i32
  }
  func.func @transform_1(%arg0: i32) -> (i32, i32) {
    %c0_i32 = arith.constant 0 : i32
    %c0_i32_0 = arith.constant 0 : i32
    %c0_i32_1 = arith.constant 0 : i32
    return %c0_i32, %c0_i32_0 : i32, i32
  }
  func.func @transform_2(%arg0: i32) -> (i32, i32) {
    %c0_i32 = arith.constant 0 : i32
    %c0_i32_0 = arith.constant 0 : i32
    %c0_i32_1 = arith.constant 0 : i32
    return %c0_i32, %c0_i32_0 : i32, i32
  }
  func.func @transform_3(%arg0: i32) -> (i32, i32) {
    %c0_i32 = arith.constant 0 : i32
    %c0_i32_0 = arith.constant 0 : i32
    return %arg0, %c0_i32 : i32, i32
  }
  func.func @transform_4(%arg0: i32) -> (i32, i32) {
    %c0_i32 = arith.constant 0 : i32
    %c0_i32_0 = arith.constant 0 : i32
    %c0_i32_1 = arith.constant 0 : i32
    return %c0_i32, %c0_i32_0 : i32, i32
  }
  func.func @transform_5(%arg0: i32) -> (i32, i32) {
    %c0_i32 = arith.constant 0 : i32
    %c0_i32_0 = arith.constant 0 : i32
    %c0_i32_1 = arith.constant 0 : i32
    return %c0_i32, %c0_i32_0 : i32, i32
  }
  func.func @transform_6(%arg0: i32) -> (i32, i32) {
    %c0_i32 = arith.constant 0 : i32
    %c0_i32_0 = arith.constant 0 : i32
    return %arg0, %c0_i32 : i32, i32
  }
}

module attributes {stable_mosaic.version = 11 : i64} {
  func.func @_linear_kernel(%arg0: i32, %arg1: i32, %arg2: memref<8x32xf32, #tpu.memory_space<vmem>>, %arg3: memref<32x96xf32, #tpu.memory_space<vmem>>, %arg4: memref<1x96xf32, #tpu.memory_space<vmem>>, %arg5: memref<8x96xf32, #tpu.memory_space<vmem>>) attributes {dimension_semantics = [#tpu.dimension_semantics<parallel>, #tpu.dimension_semantics<parallel>], iteration_bounds = array<i64: 2, 1>, scalar_prefetch = 0 : i64, scratch_operands = 0 : i64, tpu.core_type = #tpu.core_type<tc>, window_params = [{transform_indices = @transform_0, window_bounds = array<i64: 8, 32>}, {transform_indices = @transform_1, window_bounds = array<i64: 32, 96>}, {transform_indices = @transform_2, window_bounds = array<i64: 1, 96>}, {transform_indices = @transform_3, window_bounds = array<i64: 8, 96>}]} {
    %c0 = arith.constant 0 : index
    %c0_0 = arith.constant 0 : index
    %0 = vector.load %arg2[%c0, %c0_0] : memref<8x32xf32, #tpu.memory_space<vmem>>, vector<8x32xf32>
    %c0_1 = arith.constant 0 : index
    %c0_2 = arith.constant 0 : index
    %1 = vector.load %arg3[%c0_1, %c0_2] : memref<32x96xf32, #tpu.memory_space<vmem>>, vector<32x96xf32>
    %cst = arith.constant dense<0.000000e+00> : vector<8x96xf32>
    %2 = tpu.matmul %0, %1, %cst {dimension_numbers = #tpu.dot_dimension_numbers<[1], [0], [0], [1], [0, 0, 1, 1], [], []>} : vector<8x32xf32>, vector<32x96xf32>, vector<8x96xf32> -> vector<8x96xf32>
    %c0_3 = arith.constant 0 : index
    %c0_4 = arith.constant 0 : index
    %3 = vector.load %arg4[%c0_3, %c0_4] : memref<1x96xf32, #tpu.memory_space<vmem>>, vector<1x96xf32>
    %4 = vector.broadcast %3 : vector<1x96xf32> to vector<8x96xf32>
    %5 = arith.addf %2, %4 : vector<8x96xf32>
    %c0_5 = arith.constant 0 : index
    %c0_6 = arith.constant 0 : index
    %6 = vector.load %arg5[%c0_5, %c0_6] : memref<8x96xf32, #tpu.memory_space<vmem>>, vector<8x96xf32>
    tpu.vector_store %arg5[%c0_5, %c0_6], %5 {strides = array<i32>} : memref<8x96xf32, #tpu.memory_space<vmem>>, vector<8x96xf32>,
    return
  }
  func.func @transform_0(%arg0: i32, %arg1: i32) -> (i32, i32) {
    %c0_i32 = arith.constant 0 : i32
    %c0_i32_0 = arith.constant 0 : i32
    return %arg0, %c0_i32 : i32, i32
  }
  func.func @transform_1(%arg0: i32, %arg1: i32) -> (i32, i32) {
    %c0_i32 = arith.constant 0 : i32
    %c0_i32_0 = arith.constant 0 : i32
    return %c0_i32, %arg1 : i32, i32
  }
  func.func @transform_2(%arg0: i32, %arg1: i32) -> (i32, i32) {
    %c0_i32 = arith.constant 0 : i32
    %c0_i32_0 = arith.constant 0 : i32
    return %c0_i32, %arg1 : i32, i32
  }
  func.func @transform_3(%arg0: i32, %arg1: i32) -> (i32, i32) {
    %c0_i32 = arith.constant 0 : i32
    return %arg0, %arg1 : i32, i32
  }
}

module attributes {stable_mosaic.version = 11 : i64} {
  func.func @_cross_attn_kernel(%arg0: i32, %arg1: memref<1x8x32xf32, #tpu.memory_space<vmem>>, %arg2: memref<1x8x64xf32, #tpu.memory_space<vmem>>, %arg3: memref<1x8x32xf32, #tpu.memory_space<vmem>>) attributes {dimension_semantics = [#tpu.dimension_semantics<parallel>], iteration_bounds = array<i64: 2>, scalar_prefetch = 0 : i64, scratch_operands = 0 : i64, tpu.core_type = #tpu.core_type<tc>, window_params = [{transform_indices = @transform_0, window_bounds = array<i64: 1, 8, 32>}, {transform_indices = @transform_1, window_bounds = array<i64: 1, 8, 64>}, {transform_indices = @transform_2, window_bounds = array<i64: 1, 8, 32>}]} {
    %c0 = arith.constant 0 : index
    %c0_0 = arith.constant 0 : index
    %c0_1 = arith.constant 0 : index
    %0 = vector.load %arg1[%c0, %c0_0, %c0_1] : memref<1x8x32xf32, #tpu.memory_space<vmem>>, vector<1x8x32xf32>
    %1 = vector.shape_cast %0 : vector<1x8x32xf32> to vector<8x32xf32>
    %c0_2 = arith.constant 0 : index
    %c0_3 = arith.constant 0 : index
    %c0_4 = arith.constant 0 : index
    %2 = vector.load %arg2[%c0_2, %c0_3, %c0_4] : memref<1x8x64xf32, #tpu.memory_space<vmem>>, vector<1x8x64xf32>
    %3 = vector.shape_cast %2 : vector<1x8x64xf32> to vector<8x64xf32>
    %4 = vector.extract_strided_slice %1 {offsets = [0, 0], sizes = [8, 8], strides = [1, 1]} : vector<8x32xf32> to vector<8x8xf32>
    %5 = vector.extract_strided_slice %3 {offsets = [0, 0], sizes = [8, 8], strides = [1, 1]} : vector<8x64xf32> to vector<8x8xf32>
    %6 = vector.extract_strided_slice %3 {offsets = [0, 32], sizes = [8, 8], strides = [1, 1]} : vector<8x64xf32> to vector<8x8xf32>
    %cst = arith.constant dense<0.000000e+00> : vector<8x8xf32>
    %7 = tpu.matmul %4, %5, %cst {dimension_numbers = #tpu.dot_dimension_numbers<[1], [1], [0], [0], [0, 0, 1, 0], [], []>} : vector<8x8xf32>, vector<8x8xf32>, vector<8x8xf32> -> vector<8x8xf32>
    %cst_5 = arith.constant dense<0xFF800000> : vector<8xf32>
    %8 = vector.multi_reduction <maximumf>, %7, %cst_5 [1] : vector<8x8xf32> to vector<8xf32>
    %9 = vector.shape_cast %8 : vector<8xf32> to vector<8x1xf32>
    %10 = vector.broadcast %9 : vector<8x1xf32> to vector<8x8xf32>
    %11 = arith.subf %7, %10 : vector<8x8xf32>
    %12 = math.exp %11 : vector<8x8xf32>
    %cst_6 = arith.constant dense<0.000000e+00> : vector<8xf32>
    %13 = vector.multi_reduction <add>, %12, %cst_6 [1] : vector<8x8xf32> to vector<8xf32>
    %14 = vector.shape_cast %13 : vector<8xf32> to vector<8x1xf32>
    %15 = tpu.reciprocal %14 {approx = true} : vector<8x1xf32> -> vector<8x1xf32>
    %16 = vector.broadcast %15 : vector<8x1xf32> to vector<8x8xf32>
    %17 = arith.mulf %12, %16 : vector<8x8xf32>
    %cst_7 = arith.constant dense<0.000000e+00> : vector<8x8xf32>
    %18 = tpu.matmul %17, %6, %cst_7 {dimension_numbers = #tpu.dot_dimension_numbers<[1], [0], [0], [1], [0, 0, 1, 1], [], []>} : vector<8x8xf32>, vector<8x8xf32>, vector<8x8xf32> -> vector<8x8xf32>
    %c0_8 = arith.constant 0 : index
    %c0_9 = arith.constant 0 : index
    %c0_10 = arith.constant 0 : index
    %19 = vector.load %arg3[%c0_8, %c0_9, %c0_10] : memref<1x8x32xf32, #tpu.memory_space<vmem>>, vector<1x8x8xf32>
    %20 = vector.shape_cast %19 : vector<1x8x8xf32> to vector<8x8xf32>
    %21 = vector.shape_cast %18 : vector<8x8xf32> to vector<1x8x8xf32>
    tpu.vector_store %arg3[%c0_8, %c0_9, %c0_10], %21 {strides = array<i32>} : memref<1x8x32xf32, #tpu.memory_space<vmem>>, vector<1x8x8xf32>,
    %22 = vector.extract_strided_slice %1 {offsets = [0, 8], sizes = [8, 8], strides = [1, 1]} : vector<8x32xf32> to vector<8x8xf32>
    %23 = vector.extract_strided_slice %3 {offsets = [0, 8], sizes = [8, 8], strides = [1, 1]} : vector<8x64xf32> to vector<8x8xf32>
    %24 = vector.extract_strided_slice %3 {offsets = [0, 40], sizes = [8, 8], strides = [1, 1]} : vector<8x64xf32> to vector<8x8xf32>
    %cst_11 = arith.constant dense<0.000000e+00> : vector<8x8xf32>
    %25 = tpu.matmul %22, %23, %cst_11 {dimension_numbers = #tpu.dot_dimension_numbers<[1], [1], [0], [0], [0, 0, 1, 0], [], []>} : vector<8x8xf32>, vector<8x8xf32>, vector<8x8xf32> -> vector<8x8xf32>
    %cst_12 = arith.constant dense<0xFF800000> : vector<8xf32>
    %26 = vector.multi_reduction <maximumf>, %25, %cst_12 [1] : vector<8x8xf32> to vector<8xf32>
    %27 = vector.shape_cast %26 : vector<8xf32> to vector<8x1xf32>
    %28 = vector.broadcast %27 : vector<8x1xf32> to vector<8x8xf32>
    %29 = arith.subf %25, %28 : vector<8x8xf32>
    %30 = math.exp %29 : vector<8x8xf32>
    %cst_13 = arith.constant dense<0.000000e+00> : vector<8xf32>
    %31 = vector.multi_reduction <add>, %30, %cst_13 [1] : vector<8x8xf32> to vector<8xf32>
    %32 = vector.shape_cast %31 : vector<8xf32> to vector<8x1xf32>
    %33 = tpu.reciprocal %32 {approx = true} : vector<8x1xf32> -> vector<8x1xf32>
    %34 = vector.broadcast %33 : vector<8x1xf32> to vector<8x8xf32>
    %35 = arith.mulf %30, %34 : vector<8x8xf32>
    %cst_14 = arith.constant dense<0.000000e+00> : vector<8x8xf32>
    %36 = tpu.matmul %35, %24, %cst_14 {dimension_numbers = #tpu.dot_dimension_numbers<[1], [0], [0], [1], [0, 0, 1, 1], [], []>} : vector<8x8xf32>, vector<8x8xf32>, vector<8x8xf32> -> vector<8x8xf32>
    %c0_15 = arith.constant 0 : index
    %c0_16 = arith.constant 0 : index
    %c8 = arith.constant 8 : index
    %37 = vector.load %arg3[%c0_15, %c0_16, %c8] : memref<1x8x32xf32, #tpu.memory_space<vmem>>, vector<1x8x8xf32>
    %38 = vector.shape_cast %37 : vector<1x8x8xf32> to vector<8x8xf32>
    %39 = vector.shape_cast %36 : vector<8x8xf32> to vector<1x8x8xf32>
    tpu.vector_store %arg3[%c0_15, %c0_16, %c8], %39 {strides = array<i32>} : memref<1x8x32xf32, #tpu.memory_space<vmem>>, vector<1x8x8xf32>,
    %40 = vector.extract_strided_slice %1 {offsets = [0, 16], sizes = [8, 8], strides = [1, 1]} : vector<8x32xf32> to vector<8x8xf32>
    %41 = vector.extract_strided_slice %3 {offsets = [0, 16], sizes = [8, 8], strides = [1, 1]} : vector<8x64xf32> to vector<8x8xf32>
    %42 = vector.extract_strided_slice %3 {offsets = [0, 48], sizes = [8, 8], strides = [1, 1]} : vector<8x64xf32> to vector<8x8xf32>
    %cst_17 = arith.constant dense<0.000000e+00> : vector<8x8xf32>
    %43 = tpu.matmul %40, %41, %cst_17 {dimension_numbers = #tpu.dot_dimension_numbers<[1], [1], [0], [0], [0, 0, 1, 0], [], []>} : vector<8x8xf32>, vector<8x8xf32>, vector<8x8xf32> -> vector<8x8xf32>
    %cst_18 = arith.constant dense<0xFF800000> : vector<8xf32>
    %44 = vector.multi_reduction <maximumf>, %43, %cst_18 [1] : vector<8x8xf32> to vector<8xf32>
    %45 = vector.shape_cast %44 : vector<8xf32> to vector<8x1xf32>
    %46 = vector.broadcast %45 : vector<8x1xf32> to vector<8x8xf32>
    %47 = arith.subf %43, %46 : vector<8x8xf32>
    %48 = math.exp %47 : vector<8x8xf32>
    %cst_19 = arith.constant dense<0.000000e+00> : vector<8xf32>
    %49 = vector.multi_reduction <add>, %48, %cst_19 [1] : vector<8x8xf32> to vector<8xf32>
    %50 = vector.shape_cast %49 : vector<8xf32> to vector<8x1xf32>
    %51 = tpu.reciprocal %50 {approx = true} : vector<8x1xf32> -> vector<8x1xf32>
    %52 = vector.broadcast %51 : vector<8x1xf32> to vector<8x8xf32>
    %53 = arith.mulf %48, %52 : vector<8x8xf32>
    %cst_20 = arith.constant dense<0.000000e+00> : vector<8x8xf32>
    %54 = tpu.matmul %53, %42, %cst_20 {dimension_numbers = #tpu.dot_dimension_numbers<[1], [0], [0], [1], [0, 0, 1, 1], [], []>} : vector<8x8xf32>, vector<8x8xf32>, vector<8x8xf32> -> vector<8x8xf32>
    %c0_21 = arith.constant 0 : index
    %c0_22 = arith.constant 0 : index
    %c16 = arith.constant 16 : index
    %55 = vector.load %arg3[%c0_21, %c0_22, %c16] : memref<1x8x32xf32, #tpu.memory_space<vmem>>, vector<1x8x8xf32>
    %56 = vector.shape_cast %55 : vector<1x8x8xf32> to vector<8x8xf32>
    %57 = vector.shape_cast %54 : vector<8x8xf32> to vector<1x8x8xf32>
    tpu.vector_store %arg3[%c0_21, %c0_22, %c16], %57 {strides = array<i32>} : memref<1x8x32xf32, #tpu.memory_space<vmem>>, vector<1x8x8xf32>,
    %58 = vector.extract_strided_slice %1 {offsets = [0, 24], sizes = [8, 8], strides = [1, 1]} : vector<8x32xf32> to vector<8x8xf32>
    %59 = vector.extract_strided_slice %3 {offsets = [0, 24], sizes = [8, 8], strides = [1, 1]} : vector<8x64xf32> to vector<8x8xf32>
    %60 = vector.extract_strided_slice %3 {offsets = [0, 56], sizes = [8, 8], strides = [1, 1]} : vector<8x64xf32> to vector<8x8xf32>
    %cst_23 = arith.constant dense<0.000000e+00> : vector<8x8xf32>
    %61 = tpu.matmul %58, %59, %cst_23 {dimension_numbers = #tpu.dot_dimension_numbers<[1], [1], [0], [0], [0, 0, 1, 0], [], []>} : vector<8x8xf32>, vector<8x8xf32>, vector<8x8xf32> -> vector<8x8xf32>
    %cst_24 = arith.constant dense<0xFF800000> : vector<8xf32>
    %62 = vector.multi_reduction <maximumf>, %61, %cst_24 [1] : vector<8x8xf32> to vector<8xf32>
    %63 = vector.shape_cast %62 : vector<8xf32> to vector<8x1xf32>
    %64 = vector.broadcast %63 : vector<8x1xf32> to vector<8x8xf32>
    %65 = arith.subf %61, %64 : vector<8x8xf32>
    %66 = math.exp %65 : vector<8x8xf32>
    %cst_25 = arith.constant dense<0.000000e+00> : vector<8xf32>
    %67 = vector.multi_reduction <add>, %66, %cst_25 [1] : vector<8x8xf32> to vector<8xf32>
    %68 = vector.shape_cast %67 : vector<8xf32> to vector<8x1xf32>
    %69 = tpu.reciprocal %68 {approx = true} : vector<8x1xf32> -> vector<8x1xf32>
    %70 = vector.broadcast %69 : vector<8x1xf32> to vector<8x8xf32>
    %71 = arith.mulf %66, %70 : vector<8x8xf32>
    %cst_26 = arith.constant dense<0.000000e+00> : vector<8x8xf32>
    %72 = tpu.matmul %71, %60, %cst_26 {dimension_numbers = #tpu.dot_dimension_numbers<[1], [0], [0], [1], [0, 0, 1, 1], [], []>} : vector<8x8xf32>, vector<8x8xf32>, vector<8x8xf32> -> vector<8x8xf32>
    %c0_27 = arith.constant 0 : index
    %c0_28 = arith.constant 0 : index
    %c24 = arith.constant 24 : index
    %73 = vector.load %arg3[%c0_27, %c0_28, %c24] : memref<1x8x32xf32, #tpu.memory_space<vmem>>, vector<1x8x8xf32>
    %74 = vector.shape_cast %73 : vector<1x8x8xf32> to vector<8x8xf32>
    %75 = vector.shape_cast %72 : vector<8x8xf32> to vector<1x8x8xf32>
    tpu.vector_store %arg3[%c0_27, %c0_28, %c24], %75 {strides = array<i32>} : memref<1x8x32xf32, #tpu.memory_space<vmem>>, vector<1x8x8xf32>,
    return
  }
  func.func @transform_0(%arg0: i32) -> (i32, i32, i32) {
    %c0_i32 = arith.constant 0 : i32
    %c0_i32_0 = arith.constant 0 : i32
    %c0_i32_1 = arith.constant 0 : i32
    return %arg0, %c0_i32, %c0_i32_0 : i32, i32, i32
  }
  func.func @transform_1(%arg0: i32) -> (i32, i32, i32) {
    %c0_i32 = arith.constant 0 : i32
    %c0_i32_0 = arith.constant 0 : i32
    %c0_i32_1 = arith.constant 0 : i32
    return %arg0, %c0_i32, %c0_i32_0 : i32, i32, i32
  }
  func.func @transform_2(%arg0: i32) -> (i32, i32, i32) {
    %c0_i32 = arith.constant 0 : i32
    %c0_i32_0 = arith.constant 0 : i32
    %c0_i32_1 = arith.constant 0 : i32
    return %arg0, %c0_i32, %c0_i32_0 : i32, i32, i32
  }
}

module attributes {stable_mosaic.version = 11 : i64} {
  func.func @_ffn_addnorm_kernel(%arg0: i32, %arg1: i32, %arg2: memref<8x32xf32, #tpu.memory_space<vmem>>, %arg3: memref<32x64xf32, #tpu.memory_space<vmem>>, %arg4: memref<1x64xf32, #tpu.memory_space<vmem>>, %arg5: memref<64x32xf32, #tpu.memory_space<vmem>>, %arg6: memref<1x32xf32, #tpu.memory_space<vmem>>, %arg7: memref<1x32xf32, #tpu.memory_space<vmem>>, %arg8: memref<1x32xf32, #tpu.memory_space<vmem>>, %arg9: memref<8x32xf32, #tpu.memory_space<vmem>>, %arg10: memref<8x32xf32, #tpu.memory_space<vmem>>) attributes {dimension_semantics = [#tpu.dimension_semantics<parallel>, #tpu.dimension_semantics<arbitrary>], iteration_bounds = array<i64: 2, 1>, scalar_prefetch = 0 : i64, scratch_operands = 1 : i64, tpu.core_type = #tpu.core_type<tc>, window_params = [{transform_indices = @transform_0, window_bounds = array<i64: 8, 32>}, {transform_indices = @transform_1, window_bounds = array<i64: 32, 64>}, {transform_indices = @transform_2, window_bounds = array<i64: 1, 64>}, {transform_indices = @transform_3, window_bounds = array<i64: 64, 32>}, {pipeline_mode = #tpu.pipeline_mode<synchronous>, transform_indices = @transform_4, window_bounds = array<i64: 1, 32>}, {pipeline_mode = #tpu.pipeline_mode<synchronous>, transform_indices = @transform_5, window_bounds = array<i64: 1, 32>}, {pipeline_mode = #tpu.pipeline_mode<synchronous>, transform_indices = @transform_6, window_bounds = array<i64: 1, 32>}, {transform_indices = @transform_7, window_bounds = array<i64: 8, 32>}]} {
    %c0_i32 = arith.constant 0 : i32
    %0 = arith.cmpi eq, %arg1, %c0_i32 : i32
    %1 = arith.extui %0 : i1 to i32
    %c0_i32_0 = arith.constant 0 : i32
    %2 = arith.cmpi ne, %1, %c0_i32_0 : i32
    scf.if %2 {
      %cst_16 = arith.constant 0.000000e+00 : f32
      %19 = vector.broadcast %cst_16 : f32 to vector<8x32xf32>
      %c0_17 = arith.constant 0 : index
      %c0_18 = arith.constant 0 : index
      %20 = vector.load %arg10[%c0_17, %c0_18] : memref<8x32xf32, #tpu.memory_space<vmem>>, vector<8x32xf32>
      tpu.vector_store %arg10[%c0_17, %c0_18], %19 {strides = array<i32>} : memref<8x32xf32, #tpu.memory_space<vmem>>, vector<8x32xf32>,
    } else {
    }
    %c0 = arith.constant 0 : index
    %c0_1 = arith.constant 0 : index
    %3 = vector.load %arg2[%c0, %c0_1] : memref<8x32xf32, #tpu.memory_space<vmem>>, vector<8x32xf32>
    %c0_2 = arith.constant 0 : index
    %c0_3 = arith.constant 0 : index
    %4 = vector.load %arg3[%c0_2, %c0_3] : memref<32x64xf32, #tpu.memory_space<vmem>>, vector<32x64xf32>
    %cst = arith.constant dense<0.000000e+00> : vector<8x64xf32>
    %5 = tpu.matmul %3, %4, %cst {dimension_numbers = #tpu.dot_dimension_numbers<[1], [0], [0], [1], [0, 0, 1, 1], [], []>} : vector<8x32xf32>, vector<32x64xf32>, vector<8x64xf32> -> vector<8x64xf32>
    %c0_4 = arith.constant 0 : index
    %c0_5 = arith.constant 0 : index
    %6 = vector.load %arg4[%c0_4, %c0_5] : memref<1x64xf32, #tpu.memory_space<vmem>>, vector<1x64xf32>
    %7 = vector.broadcast %6 : vector<1x64xf32> to vector<8x64xf32>
    %8 = arith.addf %5, %7 : vector<8x64xf32>
    %cst_6 = arith.constant 0.000000e+00 : f32
    %9 = vector.broadcast %cst_6 : f32 to vector<8x64xf32>
    %10 = arith.maximumf %8, %9 : vector<8x64xf32>
    %c0_7 = arith.constant 0 : index
    %c0_8 = arith.constant 0 : index
    %11 = vector.load %arg10[%c0_7, %c0_8] : memref<8x32xf32, #tpu.memory_space<vmem>>, vector<8x32xf32>
    %c0_9 = arith.constant 0 : index
    %c0_10 = arith.constant 0 : index
    %12 = vector.load %arg5[%c0_9, %c0_10] : memref<64x32xf32, #tpu.memory_space<vmem>>, vector<64x32xf32>
    %cst_11 = arith.constant dense<0.000000e+00> : vector<8x32xf32>
    %13 = tpu.matmul %10, %12, %cst_11 {dimension_numbers = #tpu.dot_dimension_numbers<[1], [0], [0], [1], [0, 0, 1, 1], [], []>} : vector<8x64xf32>, vector<64x32xf32>, vector<8x32xf32> -> vector<8x32xf32>
    %14 = arith.addf %11, %13 : vector<8x32xf32>
    %c0_12 = arith.constant 0 : index
    %c0_13 = arith.constant 0 : index
    %15 = vector.load %arg10[%c0_12, %c0_13] : memref<8x32xf32, #tpu.memory_space<vmem>>, vector<8x32xf32>
    tpu.vector_store %arg10[%c0_12, %c0_13], %14 {strides = array<i32>} : memref<8x32xf32, #tpu.memory_space<vmem>>, vector<8x32xf32>,
    %c0_i32_14 = arith.constant 0 : i32
    %16 = arith.cmpi eq, %arg1, %c0_i32_14 : i32
    %17 = arith.extui %16 : i1 to i32
    %c0_i32_15 = arith.constant 0 : i32
    %18 = arith.cmpi ne, %17, %c0_i32_15 : i32
    scf.if %18 {
      %c0_16 = arith.constant 0 : index
      %c0_17 = arith.constant 0 : index
      %19 = vector.load %arg10[%c0_16, %c0_17] : memref<8x32xf32, #tpu.memory_space<vmem>>, vector<8x32xf32>
      %c0_18 = arith.constant 0 : index
      %c0_19 = arith.constant 0 : index
      %20 = vector.load %arg6[%c0_18, %c0_19] : memref<1x32xf32, #tpu.memory_space<vmem>>, vector<1x32xf32>
      %21 = vector.broadcast %20 : vector<1x32xf32> to vector<8x32xf32>
      %22 = arith.addf %19, %21 : vector<8x32xf32>
      %23 = arith.addf %22, %3 : vector<8x32xf32>
      %c0_20 = arith.constant 0 : index
      %c0_21 = arith.constant 0 : index
      %24 = vector.load %arg7[%c0_20, %c0_21] : memref<1x32xf32, #tpu.memory_space<vmem>>, vector<1x32xf32>
      %c0_22 = arith.constant 0 : index
      %c0_23 = arith.constant 0 : index
      %25 = vector.load %arg8[%c0_22, %c0_23] : memref<1x32xf32, #tpu.memory_space<vmem>>, vector<1x32xf32>
      %cst_24 = arith.constant dense<0.000000e+00> : vector<8xf32>
      %26 = vector.multi_reduction <add>, %23, %cst_24 [1] : vector<8x32xf32> to vector<8xf32>
      %27 = vector.shape_cast %26 : vector<8xf32> to vector<8x1xf32>
      %cst_25 = arith.constant 3.200000e+01 : f32
      %28 = vector.broadcast %cst_25 : f32 to vector<8x1xf32>
      %29 = arith.divf %27, %28 : vector<8x1xf32>
      %30 = vector.broadcast %29 : vector<8x1xf32> to vector<8x32xf32>
      %31 = arith.subf %23, %30 : vector<8x32xf32>
      %32 = arith.mulf %31, %31 : vector<8x32xf32>
      %cst_26 = arith.constant dense<0.000000e+00> : vector<8xf32>
      %33 = vector.multi_reduction <add>, %32, %cst_26 [1] : vector<8x32xf32> to vector<8xf32>
      %34 = vector.shape_cast %33 : vector<8xf32> to vector<8x1xf32>
      %cst_27 = arith.constant 0.0322580636 : f32
      %35 = vector.broadcast %cst_27 : f32 to vector<8x1xf32>
      %36 = arith.mulf %34, %35 : vector<8x1xf32>
      %37 = math.sqrt %36 : vector<8x1xf32>
      %cst_28 = arith.constant 9.99999997E-7 : f32
      %38 = vector.broadcast %cst_28 : f32 to vector<8x1xf32>
      %39 = arith.addf %37, %38 : vector<8x1xf32>
      %40 = tpu.reciprocal %39 {approx = true} : vector<8x1xf32> -> vector<8x1xf32>
      %41 = vector.broadcast %24 : vector<1x32xf32> to vector<8x32xf32>
      %42 = arith.mulf %41, %31 : vector<8x32xf32>
      %43 = vector.broadcast %40 : vector<8x1xf32> to vector<8x32xf32>
      %44 = arith.mulf %42, %43 : vector<8x32xf32>
      %45 = vector.broadcast %25 : vector<1x32xf32> to vector<8x32xf32>
      %46 = arith.addf %44, %45 : vector<8x32xf32>
      %c0_29 = arith.constant 0 : index
      %c0_30 = arith.constant 0 : index
      %47 = vector.load %arg9[%c0_29, %c0_30] : memref<8x32xf32, #tpu.memory_space<vmem>>, vector<8x32xf32>
      tpu.vector_store %arg9[%c0_29, %c0_30], %46 {strides = array<i32>} : memref<8x32xf32, #tpu.memory_space<vmem>>, vector<8x32xf32>,
    } else {
    }
    return
  }
  func.func @transform_0(%arg0: i32, %arg1: i32) -> (i32, i32) {
    %c0_i32 = arith.constant 0 : i32
    %c0_i32_0 = arith.constant 0 : i32
    return %arg0, %c0_i32 : i32, i32
  }
  func.func @transform_1(%arg0: i32, %arg1: i32) -> (i32, i32) {
    %c0_i32 = arith.constant 0 : i32
    %c0_i32_0 = arith.constant 0 : i32
    return %c0_i32, %arg1 : i32, i32
  }
  func.func @transform_2(%arg0: i32, %arg1: i32) -> (i32, i32) {
    %c0_i32 = arith.constant 0 : i32
    %c0_i32_0 = arith.constant 0 : i32
    return %c0_i32, %arg1 : i32, i32
  }
  func.func @transform_3(%arg0: i32, %arg1: i32) -> (i32, i32) {
    %c0_i32 = arith.constant 0 : i32
    %c0_i32_0 = arith.constant 0 : i32
    return %arg1, %c0_i32 : i32, i32
  }
  func.func @transform_4(%arg0: i32, %arg1: i32) -> (i32, i32) {
    %c0_i32 = arith.constant 0 : i32
    %c0_i32_0 = arith.constant 0 : i32
    %c0_i32_1 = arith.constant 0 : i32
    return %c0_i32, %c0_i32_0 : i32, i32
  }
  func.func @transform_5(%arg0: i32, %arg1: i32) -> (i32, i32) {
    %c0_i32 = arith.constant 0 : i32
    %c0_i32_0 = arith.constant 0 : i32
    %c0_i32_1 = arith.constant 0 : i32
    return %c0_i32, %c0_i32_0 : i32, i32
  }
  func.func @transform_6(%arg0: i32, %arg1: i32) -> (i32, i32) {
    %c0_i32 = arith.constant 0 : i32
    %c0_i32_0 = arith.constant 0 : i32
    %c0_i32_1 = arith.constant 0 : i32
    return %c0_i32, %c0_i32_0 : i32, i32
  }
  func.func @transform_7(%arg0: i32, %arg1: i32) -> (i32, i32) {
    %c0_i32 = arith.constant 0 : i32
    %c0_i32_0 = arith.constant 0 : i32
    return %arg0, %c0_i32 : i32, i32
  }
}

module attributes {stable_mosaic.version = 11 : i64} {
  func.func @_linear_kernel(%arg0: i32, %arg1: i32, %arg2: memref<8x32xf32, #tpu.memory_space<vmem>>, %arg3: memref<32x64xf32, #tpu.memory_space<vmem>>, %arg4: memref<1x64xf32, #tpu.memory_space<vmem>>, %arg5: memref<8x64xf32, #tpu.memory_space<vmem>>) attributes {dimension_semantics = [#tpu.dimension_semantics<parallel>, #tpu.dimension_semantics<parallel>], iteration_bounds = array<i64: 2, 1>, scalar_prefetch = 0 : i64, scratch_operands = 0 : i64, tpu.core_type = #tpu.core_type<tc>, window_params = [{transform_indices = @transform_0, window_bounds = array<i64: 8, 32>}, {transform_indices = @transform_1, window_bounds = array<i64: 32, 64>}, {transform_indices = @transform_2, window_bounds = array<i64: 1, 64>}, {transform_indices = @transform_3, window_bounds = array<i64: 8, 64>}]} {
    %c0 = arith.constant 0 : index
    %c0_0 = arith.constant 0 : index
    %0 = vector.load %arg2[%c0, %c0_0] : memref<8x32xf32, #tpu.memory_space<vmem>>, vector<8x32xf32>
    %c0_1 = arith.constant 0 : index
    %c0_2 = arith.constant 0 : index
    %1 = vector.load %arg3[%c0_1, %c0_2] : memref<32x64xf32, #tpu.memory_space<vmem>>, vector<32x64xf32>
    %cst = arith.constant dense<0.000000e+00> : vector<8x64xf32>
    %2 = tpu.matmul %0, %1, %cst {dimension_numbers = #tpu.dot_dimension_numbers<[1], [0], [0], [1], [0, 0, 1, 1], [], []>} : vector<8x32xf32>, vector<32x64xf32>, vector<8x64xf32> -> vector<8x64xf32>
    %c0_3 = arith.constant 0 : index
    %c0_4 = arith.constant 0 : index
    %3 = vector.load %arg4[%c0_3, %c0_4] : memref<1x64xf32, #tpu.memory_space<vmem>>, vector<1x64xf32>
    %4 = vector.broadcast %3 : vector<1x64xf32> to vector<8x64xf32>
    %5 = arith.addf %2, %4 : vector<8x64xf32>
    %c0_5 = arith.constant 0 : index
    %c0_6 = arith.constant 0 : index
    %6 = vector.load %arg5[%c0_5, %c0_6] : memref<8x64xf32, #tpu.memory_space<vmem>>, vector<8x64xf32>
    tpu.vector_store %arg5[%c0_5, %c0_6], %5 {strides = array<i32>} : memref<8x64xf32, #tpu.memory_space<vmem>>, vector<8x64xf32>,
    return
  }
  func.func @transform_0(%arg0: i32, %arg1: i32) -> (i32, i32) {
    %c0_i32 = arith.constant 0 : i32
    %c0_i32_0 = arith.constant 0 : i32
    return %arg0, %c0_i32 : i32, i32
  }
  func.func @transform_1(%arg0: i32, %arg1: i32) -> (i32, i32) {
    %c0_i32 = arith.constant 0 : i32
    %c0_i32_0 = arith.constant 0 : i32
    return %c0_i32, %arg1 : i32, i32
  }
  func.func @transform_2(%arg0: i32, %arg1: i32) -> (i32, i32) {
    %c0_i32 = arith.constant 0 : i32
    %c0_i32_0 = arith.constant 0 : i32
    return %c0_i32, %arg1 : i32, i32
  }
  func.func @transform_3(%arg0: i32, %arg1: i32) -> (i32, i32) {
    %c0_i32 = arith.constant 0 : i32
    return %arg0, %arg1 : i32, i32
  }
}

</mosaic_0001>

<llo_original>
// kernel: decoder_layer.8
$region0: #{decoder_layer.8}
  #allocation0 [shape = 'u32[]', space=smem, size = 0x4, offset = 0x4, fixed_abs, tag = 'smem constant byte address 0x4 - core index']
  #allocation1 [shape = 'u32[144,128]{1,0:T(1,128)}', space=vmem, size = 0x12000, scoped, tag = 'internal scratch']
  %s0 = inlined_call_operand.hbm [shape: f32[16,32], index: 0, kind: input, shape index: {}]
  %s1 = inlined_call_operand.hbm [shape: f32[32,96], index: 1, kind: input, shape index: {}]
  %s2 = inlined_call_operand.hbm [shape: f32[1,96], index: 2, kind: input, shape index: {}]
  %s3 = inlined_call_operand.hbm [shape: f32[16,96], index: 3, kind: output, shape index: {}]
  %s4 = sld [smem:[#allocation0]]
  $region57: #{decoder_layer.8} parent=0
    _
  %s6 = ssub.s32 1, %s4
  %s7 = scalar_select 0, %s6, %s4
  $region1: #{decoder_layer.8} parent=0
    #allocation2 [shape = 'u8[8192]{0}', space=vmem, size = 0x2000, scoped, tag = 'input window, operand 0']
    #allocation3 [shape = 's32[2]{0}', space=sflag, size = 0x8, scoped, tag = 'scoped memory for decoder_layer.8']
    #allocation4 [shape = 's32[2]{0}', space=sflag, size = 0x8, scoped, tag = 'scoped memory for decoder_layer.8']
    #allocation5 [shape = 'u8[16384]{0}', space=vmem, size = 0x4000, scoped, tag = 'input window, operand 1, single buffered']
    #allocation6 [shape = 's32[1]{0}', space=sflag, size = 0x4, scoped, tag = 'scoped memory for decoder_layer.8']
    #allocation7 [shape = 'u8[512]{0}', space=vmem, size = 0x400, scoped, tag = 'input window, operand 2, single buffered']
    #allocation8 [shape = 'u8[8192]{0}', space=vmem, size = 0x2000, scoped, tag = 'output window, operand 0']
    %8 = vsyncpa [#allocation3], 0
    %s9 = scalar_lea.sflag [#allocation3], 1
    %10 = vsyncpa %s9, 0
    %11 = vsyncpa [#allocation6], 0
    %12 = vsyncpa [#allocation4], 0
    %s13 = scalar_lea.sflag [#allocation4], 1
    %14 = vsyncpa %s13, 0
    loop: start=0, step=1, limit=4
    $region2: #{decoder_layer.8} parent=1 // loop_pre_header
      _
    $region3: #{decoder_layer.8} parent=1 // loop_header
      %s16 = sphi 0, %s20
      %p17 = scmp.ge.s32.totalorder %s16, 4
      %s23 = sphi 0, %s35
      %s24 = sphi 0, %s31
      %s25 = sphi 0, %s23
      %s26 = sphi 0, %s24
      %s27 = sphi 0, %s25
      %s28 = sphi 0, %s26
      %s38 = sphi 0, %s40
      %s41 = sphi 0, %s38
      %s42 = sphi 0, %s41
      %s58 = sphi 0, %s42
      %s64 = sphi 0, %s66
      %s67 = sphi 0, %s64
      %s68 = sphi 0, %s67
      %s84 = sphi 0, %s68
      %s90 = sphi 0, %s92
      %s93 = sphi 0, %s90
      %s94 = sphi 0, %s93
      %s110 = sphi 0, %s94
      %s118 = sphi 0, %s120
      %s121 = sphi 0, %s118
      %s122 = sphi 0, %s121
      %s138 = sphi 0, %s122
    $region4: #{decoder_layer.8} parent=1 // loop_header_branch
      %19 = sbr.rel (%p17) target = $region8
    $region5: #{decoder_layer.8} parent=1 // loop_body
      %s21 = ssub.s32 %s16, 1
      %s22 = ssub.s32 %s16, 2
      %s29 = sadd.s32 1, %s24
      %p30 = scmp.ge.s32.totalorder %s29, 1
      %s31 = scalar_select %p30, 0, %s29
      %s32 = sadd.s32 1, %s23
      %s33 = scalar_select %p30, %s32, %s23
      %p34 = scmp.ge.s32.totalorder %s33, 2
      %s35 = scalar_select %p34, 0, %s33
      %s36 = ssub.s32 %s23, %s35
      %p37 = scmp.eq.s32.totalorder %s36, 0
      %s39 = sadd.s32 %s38, 1
      %s40 = scalar_select %p37, %s38, %s39
      %p43 = pneg %p37
      %p44 = scmp.eq.s32.totalorder %s16, 1
      %p45 = por %p43, %p44
      %p46 = scmp.ne.s32.totalorder %s38, %s41
      %p47 = scmp.eq.s32.totalorder %s16, 0
      %p48 = por %p46, %p47
      %p49 = scmp.ne.s32.totalorder %s38, %s41
      %p50 = scmp.eq.s32.totalorder %s21, 1
      %p51 = por %p49, %p50
      %p52 = scmp.ne.s32.totalorder %s41, %s42
      %p53 = scmp.eq.s32.totalorder %s21, 0
      %p54 = por %p52, %p53
      %p55 = scmp.ne.s32.totalorder %s41, %s42
      %p56 = scmp.eq.s32.totalorder %s22, 1
      %p57 = por %p55, %p56
      %p59 = scmp.ne.s32.totalorder %s42, %s58
      %p60 = scmp.eq.s32.totalorder %s22, 0
      %p61 = por %p59, %p60
      %s62 = ssub.s32 %s24, %s31
      %p63 = scmp.eq.s32.totalorder %s62, 0
      %s65 = sadd.s32 %s64, 1
      %s66 = scalar_select %p63, %s64, %s65
      %p69 = pneg %p63
      %p70 = scmp.eq.s32.totalorder %s16, 1
      %p71 = por %p69, %p70
      %p72 = scmp.ne.s32.totalorder %s64, %s67
      %p73 = scmp.eq.s32.totalorder %s16, 0
      %p74 = por %p72, %p73
      %p75 = scmp.ne.s32.totalorder %s64, %s67
      %p76 = scmp.eq.s32.totalorder %s21, 1
      %p77 = por %p75, %p76
      %p78 = scmp.ne.s32.totalorder %s67, %s68
      %p79 = scmp.eq.s32.totalorder %s21, 0
      %p80 = por %p78, %p79
      %p81 = scmp.ne.s32.totalorder %s67, %s68
      %p82 = scmp.eq.s32.totalorder %s22, 1
      %p83 = por %p81, %p82
      %p85 = scmp.ne.s32.totalorder %s68, %s84
      %p86 = scmp.eq.s32.totalorder %s22, 0
      %p87 = por %p85, %p86
      %s88 = ssub.s32 %s24, %s31
      %p89 = scmp.eq.s32.totalorder %s88, 0
      %s91 = sadd.s32 %s90, 1
      %s92 = scalar_select %p89, %s90, %s91
      %p95 = pneg %p89
      %p96 = scmp.eq.s32.totalorder %s16, 1
      %p97 = por %p95, %p96
      %p98 = scmp.ne.s32.totalorder %s90, %s93
      %p99 = scmp.eq.s32.totalorder %s16, 0
      %p100 = por %p98, %p99
      %p101 = scmp.ne.s32.totalorder %s90, %s93
      %p102 = scmp.eq.s32.totalorder %s21, 1
      %p103 = por %p101, %p102
      %p104 = scmp.ne.s32.totalorder %s93, %s94
      %p105 = scmp.eq.s32.totalorder %s21, 0
      %p106 = por %p104, %p105
      %p107 = scmp.ne.s32.totalorder %s93, %s94
      %p108 = scmp.eq.s32.totalorder %s22, 1
      %p109 = por %p107, %p108
      %p111 = scmp.ne.s32.totalorder %s94, %s110
      %p112 = scmp.eq.s32.totalorder %s22, 0
      %p113 = por %p111, %p112
      %s114 = ssub.s32 %s23, %s35
      %s115 = ssub.s32 %s24, %s31
      %s116 = sor.u32 %s114, %s115
      %p117 = scmp.eq.s32.totalorder %s116, 0
      %s119 = sadd.s32 %s118, 1
      %s120 = scalar_select %p117, %s118, %s119
      %p123 = pneg %p117
      %p124 = scmp.eq.s32.totalorder %s16, 1
      %p125 = por %p123, %p124
      %p126 = scmp.ne.s32.totalorder %s118, %s121
      %p127 = scmp.eq.s32.totalorder %s16, 0
      %p128 = por %p126, %p127
      %p129 = scmp.ne.s32.totalorder %s118, %s121
      %p130 = scmp.eq.s32.totalorder %s21, 1
      %p131 = por %p129, %p130
      %p132 = scmp.ne.s32.totalorder %s121, %s122
      %p133 = scmp.eq.s32.totalorder %s21, 0
      %p134 = por %p132, %p133
      %p135 = scmp.ne.s32.totalorder %s121, %s122
      %p136 = scmp.eq.s32.totalorder %s22, 1
      %p137 = por %p135, %p136
      %p139 = scmp.ne.s32.totalorder %s122, %s138
      %p140 = scmp.eq.s32.totalorder %s22, 0
      %p141 = por %p139, %p140
      %p142 = scmp.le.s32.totalorder 1, %s16
      %p143 = scmp.lt.s32.totalorder %s16, 3
      %p144 = pnand %p142, %p143
      %p145 = pneg %p144
      // Predicated region
      $region9: #{decoder_layer.8} parent=5 // pred_check
        _
      $region10: #{decoder_layer.8} parent=5 // pred_check_branch
        %147 = sbr.rel (%p144) target = $region12
      $region11: #{decoder_layer.8} parent=5 // pred_region
        %s148 = ssub.s32 %s16, 1
        // Predicated region
        $region13: #{decoder_layer.8} parent=11 // pred_check
          %p149 = pneg %p80
        $region14: #{decoder_layer.8} parent=11 // pred_check_branch
          %151 = sbr.rel (%p149) target = $region16
        $region15: #{decoder_layer.8} parent=11 // pred_region
          %s153 = ssub.s32 512, 512
          %154 = vsyncadd [#allocation6], %s153
          %s155 = smul.addr %s26, 128
          %s156 = scalar_lea.hbm %s1, %s155
          %s157 = sshll.u32 [#allocation5], 4
          %s158 = int_to_ptr.vmem [resolvable:$true] %s157
          %163 = dma.hbm_to_vmem [thread:$0]  %s156, 512, %s158, [#allocation6], 128, 128, 8
        $region16: #{decoder_layer.8} parent=11 // pred_fallthru
          _
        // Predicated region
        $region17: #{decoder_layer.8} parent=11 // pred_check
          %p164 = pneg %p106
        $region18: #{decoder_layer.8} parent=11 // pred_check_branch
          %166 = sbr.rel (%p164) target = $region20
        $region19: #{decoder_layer.8} parent=11 // pred_region
          %s168 = ssub.s32 16, 16
          %169 = vsyncadd [#allocation6], %s168
          %s170 = smul.addr %s26, 16
          %s171 = scalar_lea.hbm %s2, %s170
          %s173 = sshll.u32 [#allocation7], 4
          %s174 = int_to_ptr.vmem [resolvable:$true] %s173
          %176 = dma.hbm_to_vmem [thread:$0]  %s171, 16, %s174, [#allocation6]
        $region20: #{decoder_layer.8} parent=11 // pred_fallthru
          _
      $region12: #{decoder_layer.8} parent=5 // pred_fallthru
        _
      %p177 = scmp.lt.s32.totalorder %s16, 2
      // Predicated region
      $region21: #{decoder_layer.8} parent=5 // pred_check
        %p178 = pneg %p177
      $region22: #{decoder_layer.8} parent=5 // pred_check_branch
        %180 = sbr.rel (%p178) target = $region24
      $region23: #{decoder_layer.8} parent=5 // pred_region
        // Predicated region
        $region25: #{decoder_layer.8} parent=23 // pred_check
          %p181 = pneg %p48
        $region26: #{decoder_layer.8} parent=23 // pred_check_branch
          %183 = sbr.rel (%p181) target = $region28
        $region27: #{decoder_layer.8} parent=23 // pred_region
          %s184 = sand.u32 %s38, 1
          %s185 = scalar_lea.sflag [#allocation3], %s184
          %s186 = sand.u32 %s38, 1
          %s187 = smul.addr %s186, 8
          %s188 = scalar_lea.vmem [#allocation2], %s187
          %s190 = ssub.s32 128, 128
          %191 = vsyncadd %s185, %s190
          %s192 = smul.addr %s23, 128
          %s193 = scalar_lea.hbm %s0, %s192
          %s195 = sshll.u32 %s188, 4
          %s196 = int_to_ptr.vmem [resolvable:$true] %s195
          %198 = dma.hbm_to_vmem [thread:$0]  %s193, 128, %s196, %s185
        $region28: #{decoder_layer.8} parent=23 // pred_fallthru
          _
      $region24: #{decoder_layer.8} parent=5 // pred_fallthru
        _
      %p199 = scmp.le.s32.totalorder 1, %s16
      %p200 = scmp.lt.s32.totalorder %s16, 3
      %p201 = pnand %p199, %p200
      %p202 = pneg %p201
      // Predicated region
      $region29: #{decoder_layer.8} parent=5 // pred_check
        _
      $region30: #{decoder_layer.8} parent=5 // pred_check_branch
        %204 = sbr.rel (%p201) target = $region32
      $region31: #{decoder_layer.8} parent=5 // pred_region
        %s205 = ssub.s32 %s16, 1
        %s206 = sand.u32 %s41, 1
        %s207 = scalar_lea.sflag [#allocation3], %s206
        %s208 = sand.u32 %s41, 1
        %s209 = smul.addr %s208, 8
        %s210 = scalar_lea.vmem [#allocation2], %s209
        // Predicated region
        $region33: #{decoder_layer.8} parent=31 // pred_check
          %p211 = pneg %p54
        $region34: #{decoder_layer.8} parent=31 // pred_check_branch
          %213 = sbr.rel (%p211) target = $region36
        $region35: #{decoder_layer.8} parent=31 // pred_region
          %214 = dma.done %s207, 128
        $region36: #{decoder_layer.8} parent=31 // pred_fallthru
          _
        // Predicated region
        $region37: #{decoder_layer.8} parent=31 // pred_check
          %p215 = pneg %p80
        $region38: #{decoder_layer.8} parent=31 // pred_check_branch
          %217 = sbr.rel (%p215) target = $region40
        $region39: #{decoder_layer.8} parent=31 // pred_region
          %218 = dma.done [#allocation6], 512
        $region40: #{decoder_layer.8} parent=31 // pred_fallthru
          _
        // Predicated region
        $region41: #{decoder_layer.8} parent=31 // pred_check
          %p219 = pneg %p106
        $region42: #{decoder_layer.8} parent=31 // pred_check_branch
          %221 = sbr.rel (%p219) target = $region44
        $region43: #{decoder_layer.8} parent=31 // pred_region
          %222 = dma.done [#allocation6], 16
        $region44: #{decoder_layer.8} parent=31 // pred_fallthru
          _
        %s223 = sand.u32 %s41, 1
        %s224 = scalar_lea.sflag [#allocation3], %s223
        %s225 = sand.u32 %s41, 1
        %s226 = smul.addr %s225, 8
        %s227 = scalar_lea.vmem [#allocation2], %s226
        %p228 = pneg %p54
        %p229 = pneg %p51
        %p230 = pneg %p80
        %p231 = pneg %p77
        %p232 = pneg %p106
        %p233 = pneg %p103
        %p234 = pneg %p134
        %p235 = pneg %p131
        %s236 = sand.u32 %s121, 1
        %s237 = scalar_lea.sflag [#allocation4], %s236
        %s238 = sand.u32 %s121, 1
        %s239 = smul.addr %s238, 8
        %s240 = scalar_lea.vmem [#allocation8], %s239
        %v241 = vld [vmem:[%s210] sm:$0xff]
        %v242 = vld [vmem:[#allocation5] sm:$0xff]
        %v243 = vld [vmem:[#allocation5 + $0x8] sm:$0xff]
        %v244 = vld [vmem:[#allocation5 + $0x10] sm:$0xff]
        %v245 = vld [vmem:[#allocation5 + $0x18] sm:$0xff]
        %v246 = vld [vmem:[#allocation7] sm:$0x1]
        %v248 = vlaneseq
        %v249 = vshrl.u32 %v248, 7
        %v250 = vsub.s32 0, %v249
        %v251 = vrot.slane %v246, %v250
        %vm253 = vcmask 261120
        %v255 = vsel %vm253, %v241, 0
        %257 = vmatprep.subr.mxu0 0.0
        %258 = vmatpush1.msra.mxu0 %v242
        %259 = vmatprep.subr.mxu0 0.0
        %260 = vmatpush1.msra.mxu0 %v243
        %261 = vmatprep.subr.mxu0 0.0
        %262 = vmatpush1.msra.mxu0 %v244
        %263 = vmatprep.subr.mxu0 0.0
        %264 = vmatpush1.msra.mxu0 %v245
        %265 = vmatprep.subr.mxu0 0.0
        %266 = vmatpush1.msra.mxu0 0.0
        %267 = vmatprep.subr.mxu0 0.0
        %268 = vmatpush1.msra.mxu0 0.0
        %269 = vmatprep.subr.mxu0 0.0
        %270 = vmatpush1.msra.mxu0 0.0
        %271 = vmatprep.subr.mxu0 0.0
        %272 = vmatpush1.msra.mxu0 0.0
        %273 = vmatprep.subr.mxu0 0.0
        %274 = vmatpush1.msra.mxu0 0.0
        %275 = vmatprep.subr.mxu0 0.0
        %276 = vmatpush1.msra.mxu0 0.0
        %277 = vmatprep.subr.mxu0 0.0
        %278 = vmatpush1.msra.mxu0 0.0
        %279 = vmatprep.subr.mxu0 0.0
        %280 = vmatpush1.msra.mxu0 0.0
        %281 = vmatprep.subr.mxu0 0.0
        %282 = vmatpush1.msra.mxu0 0.0
        %283 = vmatprep.subr.mxu0 0.0
        %284 = vmatpush1.msra.mxu0 0.0
        %285 = vmatprep.subr.mxu0 0.0
        %286 = vmatpush1.msra.mxu0 0.0
        %287 = vmatprep.subr.mxu0 0.0
        %288 = vmatpush1.msra.mxu0 0.0
        %289 = vmatprep.subr.mxu0 0.0
        %290 = vmatpush1.msra.mxu0 0.0
        %291 = vmatprep.subr.mxu0 0.0
        %292 = vmatpush1.msra.mxu0 0.0
        %293 = vmatprep.subr.mxu0 0.0
        %294 = vmatpush1.msra.mxu0 0.0
        %295 = vmatprep.subr.mxu0 0.0
        %296 = vmatpush1.msra.mxu0 0.0
        %297 = vmatprep.subr.mxu0 0.0
        %298 = vmatpush1.msra.mxu0 0.0
        %299 = vmatprep.subr.mxu0 0.0
        %300 = vmatpush1.msra.mxu0 0.0
        %301 = vmatprep.subr.mxu0 0.0
        %302 = vmatpush1.msra.mxu0 0.0
        %303 = vmatprep.subr.mxu0 0.0
        %304 = vmatpush1.msra.mxu0 0.0
        %305 = vmatprep.subr.mxu0 0.0
        %306 = vmatpush1.msra.mxu0 0.0
        %307 = vmatprep.subr.mxu0 0.0
        %308 = vmatpush1.msra.mxu0 0.0
        %309 = vmatprep.subr.mxu0 0.0
        %310 = vmatpush1.msra.mxu0 0.0
        %311 = vmatprep.subr.mxu0 0.0
        %312 = vmatpush1.msra.mxu0 0.0
        %313 = vmatprep.subr.mxu0 0.0
        %314 = vmatpush1.msra.mxu0 0.0
        %315 = vmatprep.subr.mxu0 0.0
        %316 = vmatpush1.msra.mxu0 0.0
        %317 = vmatprep.subr.mxu0 0.0
        %318 = vmatpush1.msra.mxu0 0.0
        %319 = vmatprep.subr.mxu0 0.0
        %320 = vmatpush1.msra.mxu0 0.0
        %321 = vmatprep.mubr.f32.mxu0 0.0
        %322 = vmatmul.mubr.f32.gmra.mrb[0].mxu0 %v255
        %v323 = vpop.f32.mrb[0].mxu0
        %v324 = vadd.f32 %v251, %v323
        %v325 = vpop.f32.mrb[0].mxu0
        %326 = vdwg.mxu0
        %vm327 = vcmask 785408
        %328 = vst.msk [vmem:[%s240] sm:$0xff] %vm327, %v324
        %s329 = sand.u32 %s121, 1
        %s330 = scalar_lea.sflag [#allocation4], %s329
        %s331 = sand.u32 %s121, 1
        %s332 = smul.addr %s331, 8
        %s333 = scalar_lea.vmem [#allocation8], %s332
        // Predicated region
        $region45: #{decoder_layer.8} parent=31 // pred_check
          %p334 = pneg %p131
        $region46: #{decoder_layer.8} parent=31 // pred_check_branch
          %336 = sbr.rel (%p334) target = $region48
        $region47: #{decoder_layer.8} parent=31 // pred_region
          %s338 = ssub.s32 128, 128
          %339 = vsyncadd %s330, %s338
          %s340 = sadd.s32 %s26, %s25
          %s341 = smul.addr %s340, 128
          %s342 = scalar_lea.hbm %s3, %s341
          %s344 = sshll.u32 %s333, 4
          %s345 = int_to_ptr.vmem [resolvable:$true] %s344
          %347 = dma.vmem_to_hbm [thread:$0]  %s345, 128, %s342, %s330
        $region48: #{decoder_layer.8} parent=31 // pred_fallthru
          _
      $region32: #{decoder_layer.8} parent=5 // pred_fallthru
        _
      %p348 = scmp.le.s32.totalorder 2, %s16
      // Predicated region
      $region49: #{decoder_layer.8} parent=5 // pred_check
        %p349 = pneg %p348
      $region50: #{decoder_layer.8} parent=5 // pred_check_branch
        %351 = sbr.rel (%p349) target = $region52
      $region51: #{decoder_layer.8} parent=5 // pred_region
        %s352 = ssub.s32 %s16, 2
        // Predicated region
        $region53: #{decoder_layer.8} parent=51 // pred_check
          %p353 = pneg %p137
        $region54: #{decoder_layer.8} parent=51 // pred_check_branch
          %355 = sbr.rel (%p353) target = $region56
        $region55: #{decoder_layer.8} parent=51 // pred_region
          %s356 = sand.u32 %s122, 1
          %s357 = scalar_lea.sflag [#allocation4], %s356
          %s358 = sand.u32 %s122, 1
          %s359 = smul.addr %s358, 8
          %s360 = scalar_lea.vmem [#allocation8], %s359
          %361 = dma.done %s357, 128
        $region56: #{decoder_layer.8} parent=51 // pred_fallthru
          _
      $region52: #{decoder_layer.8} parent=5 // pred_fallthru
        _
    $region6: #{decoder_layer.8} parent=1 // loop_footer
      %s20 = sadd.s32 1, %s16
    $region7: #{decoder_layer.8} parent=1 // loop_footer_branch
      %15 = sbr.rel target = $region3
    $region8: #{decoder_layer.8} parent=1 // loop_exit
      _
    %362 = vsyncpa [#allocation3], 1
    %s363 = scalar_lea.sflag [#allocation3], 1
    %364 = vsyncpa %s363, 1
    %365 = vsyncpa [#allocation6], 1
    %366 = vsyncpa [#allocation4], 1
    %s367 = scalar_lea.sflag [#allocation4], 1
    %368 = vsyncpa %s367, 1

// kernel: decoder_layer.11
$region0: #{decoder_layer.11}
  #allocation0 [shape = 'u32[]', space=smem, size = 0x4, offset = 0x4, fixed_abs, tag = 'smem constant byte address 0x4 - core index']
  #allocation1 [shape = 'u32[144,128]{1,0:T(1,128)}', space=vmem, size = 0x12000, scoped, tag = 'internal scratch']
  %s0 = inlined_call_operand.hbm [shape: f32[16,32], index: 0, kind: input, shape index: {}]
  %s1 = inlined_call_operand.hbm [shape: f32[32,32], index: 1, kind: input, shape index: {}]
  %s2 = inlined_call_operand.hbm [shape: f32[1,32], index: 2, kind: input, shape index: {}]
  %s3 = inlined_call_operand.hbm [shape: f32[16,32], index: 3, kind: output, shape index: {}]
  %s4 = sld [smem:[#allocation0]]
  $region57: #{decoder_layer.11} parent=0
    _
  %s6 = ssub.s32 1, %s4
  %s7 = scalar_select 0, %s6, %s4
  $region1: #{decoder_layer.11} parent=0
    #allocation2 [shape = 'u8[8192]{0}', space=vmem, size = 0x2000, scoped, tag = 'input window, operand 0']
    #allocation3 [shape = 's32[2]{0}', space=sflag, size = 0x8, scoped, tag = 'scoped memory for decoder_layer.11']
    #allocation4 [shape = 's32[2]{0}', space=sflag, size = 0x8, scoped, tag = 'scoped memory for decoder_layer.11']
    #allocation5 [shape = 'u8[16384]{0}', space=vmem, size = 0x4000, scoped, tag = 'input window, operand 1, single buffered']
    #allocation6 [shape = 's32[1]{0}', space=sflag, size = 0x4, scoped, tag = 'scoped memory for decoder_layer.11']
    #allocation7 [shape = 'u8[512]{0}', space=vmem, size = 0x400, scoped, tag = 'input window, operand 2, single buffered']
    #allocation8 [shape = 'u8[8192]{0}', space=vmem, size = 0x2000, scoped, tag = 'output window, operand 0']
    %8 = vsyncpa [#allocation3], 0
    %s9 = scalar_lea.sflag [#allocation3], 1
    %10 = vsyncpa %s9, 0
    %11 = vsyncpa [#allocation6], 0
    %12 = vsyncpa [#allocation4], 0
    %s13 = scalar_lea.sflag [#allocation4], 1
    %14 = vsyncpa %s13, 0
    loop: start=0, step=1, limit=4
    $region2: #{decoder_layer.11} parent=1 // loop_pre_header
      _
    $region3: #{decoder_layer.11} parent=1 // loop_header
      %s16 = sphi 0, %s20
      %p17 = scmp.ge.s32.totalorder %s16, 4
      %s23 = sphi 0, %s35
      %s24 = sphi 0, %s31
      %s25 = sphi 0, %s23
      %s26 = sphi 0, %s24
      %s27 = sphi 0, %s25
      %s28 = sphi 0, %s26
      %s38 = sphi 0, %s40
      %s41 = sphi 0, %s38
      %s42 = sphi 0, %s41
      %s58 = sphi 0, %s42
      %s64 = sphi 0, %s66
      %s67 = sphi 0, %s64
      %s68 = sphi 0, %s67
      %s84 = sphi 0, %s68
      %s90 = sphi 0, %s92
      %s93 = sphi 0, %s90
      %s94 = sphi 0, %s93
      %s110 = sphi 0, %s94
      %s118 = sphi 0, %s120
      %s121 = sphi 0, %s118
      %s122 = sphi 0, %s121
      %s138 = sphi 0, %s122
    $region4: #{decoder_layer.11} parent=1 // loop_header_branch
      %19 = sbr.rel (%p17) target = $region8
    $region5: #{decoder_layer.11} parent=1 // loop_body
      %s21 = ssub.s32 %s16, 1
      %s22 = ssub.s32 %s16, 2
      %s29 = sadd.s32 1, %s24
      %p30 = scmp.ge.s32.totalorder %s29, 1
      %s31 = scalar_select %p30, 0, %s29
      %s32 = sadd.s32 1, %s23
      %s33 = scalar_select %p30, %s32, %s23
      %p34 = scmp.ge.s32.totalorder %s33, 2
      %s35 = scalar_select %p34, 0, %s33
      %s36 = ssub.s32 %s23, %s35
      %p37 = scmp.eq.s32.totalorder %s36, 0
      %s39 = sadd.s32 %s38, 1
      %s40 = scalar_select %p37, %s38, %s39
      %p43 = pneg %p37
      %p44 = scmp.eq.s32.totalorder %s16, 1
      %p45 = por %p43, %p44
      %p46 = scmp.ne.s32.totalorder %s38, %s41
      %p47 = scmp.eq.s32.totalorder %s16, 0
      %p48 = por %p46, %p47
      %p49 = scmp.ne.s32.totalorder %s38, %s41
      %p50 = scmp.eq.s32.totalorder %s21, 1
      %p51 = por %p49, %p50
      %p52 = scmp.ne.s32.totalorder %s41, %s42
      %p53 = scmp.eq.s32.totalorder %s21, 0
      %p54 = por %p52, %p53
      %p55 = scmp.ne.s32.totalorder %s41, %s42
      %p56 = scmp.eq.s32.totalorder %s22, 1
      %p57 = por %p55, %p56
      %p59 = scmp.ne.s32.totalorder %s42, %s58
      %p60 = scmp.eq.s32.totalorder %s22, 0
      %p61 = por %p59, %p60
      %s62 = ssub.s32 %s24, %s31
      %p63 = scmp.eq.s32.totalorder %s62, 0
      %s65 = sadd.s32 %s64, 1
      %s66 = scalar_select %p63, %s64, %s65
      %p69 = pneg %p63
      %p70 = scmp.eq.s32.totalorder %s16, 1
      %p71 = por %p69, %p70
      %p72 = scmp.ne.s32.totalorder %s64, %s67
      %p73 = scmp.eq.s32.totalorder %s16, 0
      %p74 = por %p72, %p73
      %p75 = scmp.ne.s32.totalorder %s64, %s67
      %p76 = scmp.eq.s32.totalorder %s21, 1
      %p77 = por %p75, %p76
      %p78 = scmp.ne.s32.totalorder %s67, %s68
      %p79 = scmp.eq.s32.totalorder %s21, 0
      %p80 = por %p78, %p79
      %p81 = scmp.ne.s32.totalorder %s67, %s68
      %p82 = scmp.eq.s32.totalorder %s22, 1
      %p83 = por %p81, %p82
      %p85 = scmp.ne.s32.totalorder %s68, %s84
      %p86 = scmp.eq.s32.totalorder %s22, 0
      %p87 = por %p85, %p86
      %s88 = ssub.s32 %s24, %s31
      %p89 = scmp.eq.s32.totalorder %s88, 0
      %s91 = sadd.s32 %s90, 1
      %s92 = scalar_select %p89, %s90, %s91
      %p95 = pneg %p89
      %p96 = scmp.eq.s32.totalorder %s16, 1
      %p97 = por %p95, %p96
      %p98 = scmp.ne.s32.totalorder %s90, %s93
      %p99 = scmp.eq.s32.totalorder %s16, 0
      %p100 = por %p98, %p99
      %p101 = scmp.ne.s32.totalorder %s90, %s93
      %p102 = scmp.eq.s32.totalorder %s21, 1
      %p103 = por %p101, %p102
      %p104 = scmp.ne.s32.totalorder %s93, %s94
      %p105 = scmp.eq.s32.totalorder %s21, 0
      %p106 = por %p104, %p105
      %p107 = scmp.ne.s32.totalorder %s93, %s94
      %p108 = scmp.eq.s32.totalorder %s22, 1
      %p109 = por %p107, %p108
      %p111 = scmp.ne.s32.totalorder %s94, %s110
      %p112 = scmp.eq.s32.totalorder %s22, 0
      %p113 = por %p111, %p112
      %s114 = ssub.s32 %s23, %s35
      %s115 = ssub.s32 %s24, %s31
      %s116 = sor.u32 %s114, %s115
      %p117 = scmp.eq.s32.totalorder %s116, 0
      %s119 = sadd.s32 %s118, 1
      %s120 = scalar_select %p117, %s118, %s119
      %p123 = pneg %p117
      %p124 = scmp.eq.s32.totalorder %s16, 1
      %p125 = por %p123, %p124
      %p126 = scmp.ne.s32.totalorder %s118, %s121
      %p127 = scmp.eq.s32.totalorder %s16, 0
      %p128 = por %p126, %p127
      %p129 = scmp.ne.s32.totalorder %s118, %s121
      %p130 = scmp.eq.s32.totalorder %s21, 1
      %p131 = por %p129, %p130
      %p132 = scmp.ne.s32.totalorder %s121, %s122
      %p133 = scmp.eq.s32.totalorder %s21, 0
      %p134 = por %p132, %p133
      %p135 = scmp.ne.s32.totalorder %s121, %s122
      %p136 = scmp.eq.s32.totalorder %s22, 1
      %p137 = por %p135, %p136
      %p139 = scmp.ne.s32.totalorder %s122, %s138
      %p140 = scmp.eq.s32.totalorder %s22, 0
      %p141 = por %p139, %p140
      %p142 = scmp.le.s32.totalorder 1, %s16
      %p143 = scmp.lt.s32.totalorder %s16, 3
      %p144 = pnand %p142, %p143
      %p145 = pneg %p144
      // Predicated region
      $region9: #{decoder_layer.11} parent=5 // pred_check
        _
      $region10: #{decoder_layer.11} parent=5 // pred_check_branch
        %147 = sbr.rel (%p144) target = $region12
      $region11: #{decoder_layer.11} parent=5 // pred_region
        %s148 = ssub.s32 %s16, 1
        // Predicated region
        $region13: #{decoder_layer.11} parent=11 // pred_check
          %p149 = pneg %p80
        $region14: #{decoder_layer.11} parent=11 // pred_check_branch
          %151 = sbr.rel (%p149) target = $region16
        $region15: #{decoder_layer.11} parent=11 // pred_region
          %s153 = ssub.s32 512, 512
          %154 = vsyncadd [#allocation6], %s153
          %s155 = smul.addr %s26, 128
          %s156 = scalar_lea.hbm %s1, %s155
          %s157 = sshll.u32 [#allocation5], 4
          %s158 = int_to_ptr.vmem [resolvable:$true] %s157
          %163 = dma.hbm_to_vmem [thread:$0]  %s156, 512, %s158, [#allocation6], 128, 128, 8
        $region16: #{decoder_layer.11} parent=11 // pred_fallthru
          _
        // Predicated region
        $region17: #{decoder_layer.11} parent=11 // pred_check
          %p164 = pneg %p106
        $region18: #{decoder_layer.11} parent=11 // pred_check_branch
          %166 = sbr.rel (%p164) target = $region20
        $region19: #{decoder_layer.11} parent=11 // pred_region
          %s168 = ssub.s32 16, 16
          %169 = vsyncadd [#allocation6], %s168
          %s170 = smul.addr %s26, 16
          %s171 = scalar_lea.hbm %s2, %s170
          %s173 = sshll.u32 [#allocation7], 4
          %s174 = int_to_ptr.vmem [resolvable:$true] %s173
          %176 = dma.hbm_to_vmem [thread:$0]  %s171, 16, %s174, [#allocation6]
        $region20: #{decoder_layer.11} parent=11 // pred_fallthru
          _
      $region12: #{decoder_layer.11} parent=5 // pred_fallthru
        _
      %p177 = scmp.lt.s32.totalorder %s16, 2
      // Predicated region
      $region21: #{decoder_layer.11} parent=5 // pred_check
        %p178 = pneg %p177
      $region22: #{decoder_layer.11} parent=5 // pred_check_branch
        %180 = sbr.rel (%p178) target = $region24
      $region23: #{decoder_layer.11} parent=5 // pred_region
        // Predicated region
        $region25: #{decoder_layer.11} parent=23 // pred_check
          %p181 = pneg %p48
        $region26: #{decoder_layer.11} parent=23 // pred_check_branch
          %183 = sbr.rel (%p181) target = $region28
        $region27: #{decoder_layer.11} parent=23 // pred_region
          %s184 = sand.u32 %s38, 1
          %s185 = scalar_lea.sflag [#allocation3], %s184
          %s186 = sand.u32 %s38, 1
          %s187 = smul.addr %s186, 8
          %s188 = scalar_lea.vmem [#allocation2], %s187
          %s190 = ssub.s32 128, 128
          %191 = vsyncadd %s185, %s190
          %s192 = smul.addr %s23, 128
          %s193 = scalar_lea.hbm %s0, %s192
          %s195 = sshll.u32 %s188, 4
          %s196 = int_to_ptr.vmem [resolvable:$true] %s195
          %198 = dma.hbm_to_vmem [thread:$0]  %s193, 128, %s196, %s185
        $region28: #{decoder_layer.11} parent=23 // pred_fallthru
          _
      $region24: #{decoder_layer.11} parent=5 // pred_fallthru
        _
      %p199 = scmp.le.s32.totalorder 1, %s16
      %p200 = scmp.lt.s32.totalorder %s16, 3
      %p201 = pnand %p199, %p200
      %p202 = pneg %p201
      // Predicated region
      $region29: #{decoder_layer.11} parent=5 // pred_check
        _
      $region30: #{decoder_layer.11} parent=5 // pred_check_branch
        %204 = sbr.rel (%p201) target = $region32
      $region31: #{decoder_layer.11} parent=5 // pred_region
        %s205 = ssub.s32 %s16, 1
        %s206 = sand.u32 %s41, 1
        %s207 = scalar_lea.sflag [#allocation3], %s206
        %s208 = sand.u32 %s41, 1
        %s209 = smul.addr %s208, 8
        %s210 = scalar_lea.vmem [#allocation2], %s209
        // Predicated region
        $region33: #{decoder_layer.11} parent=31 // pred_check
          %p211 = pneg %p54
        $region34: #{decoder_layer.11} parent=31 // pred_check_branch
          %213 = sbr.rel (%p211) target = $region36
        $region35: #{decoder_layer.11} parent=31 // pred_region
          %214 = dma.done %s207, 128
        $region36: #{decoder_layer.11} parent=31 // pred_fallthru
          _
        // Predicated region
        $region37: #{decoder_layer.11} parent=31 // pred_check
          %p215 = pneg %p80
        $region38: #{decoder_layer.11} parent=31 // pred_check_branch
          %217 = sbr.rel (%p215) target = $region40
        $region39: #{decoder_layer.11} parent=31 // pred_region
          %218 = dma.done [#allocation6], 512
        $region40: #{decoder_layer.11} parent=31 // pred_fallthru
          _
        // Predicated region
        $region41: #{decoder_layer.11} parent=31 // pred_check
          %p219 = pneg %p106
        $region42: #{decoder_layer.11} parent=31 // pred_check_branch
          %221 = sbr.rel (%p219) target = $region44
        $region43: #{decoder_layer.11} parent=31 // pred_region
          %222 = dma.done [#allocation6], 16
        $region44: #{decoder_layer.11} parent=31 // pred_fallthru
          _
        %s223 = sand.u32 %s41, 1
        %s224 = scalar_lea.sflag [#allocation3], %s223
        %s225 = sand.u32 %s41, 1
        %s226 = smul.addr %s225, 8
        %s227 = scalar_lea.vmem [#allocation2], %s226
        %p228 = pneg %p54
        %p229 = pneg %p51
        %p230 = pneg %p80
        %p231 = pneg %p77
        %p232 = pneg %p106
        %p233 = pneg %p103
        %p234 = pneg %p134
        %p235 = pneg %p131
        %s236 = sand.u32 %s121, 1
        %s237 = scalar_lea.sflag [#allocation4], %s236
        %s238 = sand.u32 %s121, 1
        %s239 = smul.addr %s238, 8
        %s240 = scalar_lea.vmem [#allocation8], %s239
        %v241 = vld [vmem:[%s210] sm:$0xff]
        %v242 = vld [vmem:[#allocation5] sm:$0xff]
        %v243 = vld [vmem:[#allocation5 + $0x8] sm:$0xff]
        %v244 = vld [vmem:[#allocation5 + $0x10] sm:$0xff]
        %v245 = vld [vmem:[#allocation5 + $0x18] sm:$0xff]
        %v246 = vld [vmem:[#allocation7] sm:$0x1]
        %v248 = vlaneseq
        %v249 = vshrl.u32 %v248, 7
        %v250 = vsub.s32 0, %v249
        %v251 = vrot.slane %v246, %v250
        %vm253 = vcmask 261120
        %v255 = vsel %vm253, %v241, 0
        %257 = vmatprep.subr.mxu0 0.0
        %258 = vmatpush1.msra.mxu0 %v242
        %259 = vmatprep.subr.mxu0 0.0
        %260 = vmatpush1.msra.mxu0 %v243
        %261 = vmatprep.subr.mxu0 0.0
        %262 = vmatpush1.msra.mxu0 %v244
        %263 = vmatprep.subr.mxu0 0.0
        %264 = vmatpush1.msra.mxu0 %v245
        %265 = vmatprep.subr.mxu0 0.0
        %266 = vmatpush1.msra.mxu0 0.0
        %267 = vmatprep.subr.mxu0 0.0
        %268 = vmatpush1.msra.mxu0 0.0
        %269 = vmatprep.subr.mxu0 0.0
        %270 = vmatpush1.msra.mxu0 0.0
        %271 = vmatprep.subr.mxu0 0.0
        %272 = vmatpush1.msra.mxu0 0.0
        %273 = vmatprep.subr.mxu0 0.0
        %274 = vmatpush1.msra.mxu0 0.0
        %275 = vmatprep.subr.mxu0 0.0
        %276 = vmatpush1.msra.mxu0 0.0
        %277 = vmatprep.subr.mxu0 0.0
        %278 = vmatpush1.msra.mxu0 0.0
        %279 = vmatprep.subr.mxu0 0.0
        %280 = vmatpush1.msra.mxu0 0.0
        %281 = vmatprep.subr.mxu0 0.0
        %282 = vmatpush1.msra.mxu0 0.0
        %283 = vmatprep.subr.mxu0 0.0
        %284 = vmatpush1.msra.mxu0 0.0
        %285 = vmatprep.subr.mxu0 0.0
        %286 = vmatpush1.msra.mxu0 0.0
        %287 = vmatprep.subr.mxu0 0.0
        %288 = vmatpush1.msra.mxu0 0.0
        %289 = vmatprep.subr.mxu0 0.0
        %290 = vmatpush1.msra.mxu0 0.0
        %291 = vmatprep.subr.mxu0 0.0
        %292 = vmatpush1.msra.mxu0 0.0
        %293 = vmatprep.subr.mxu0 0.0
        %294 = vmatpush1.msra.mxu0 0.0
        %295 = vmatprep.subr.mxu0 0.0
        %296 = vmatpush1.msra.mxu0 0.0
        %297 = vmatprep.subr.mxu0 0.0
        %298 = vmatpush1.msra.mxu0 0.0
        %299 = vmatprep.subr.mxu0 0.0
        %300 = vmatpush1.msra.mxu0 0.0
        %301 = vmatprep.subr.mxu0 0.0
        %302 = vmatpush1.msra.mxu0 0.0
        %303 = vmatprep.subr.mxu0 0.0
        %304 = vmatpush1.msra.mxu0 0.0
        %305 = vmatprep.subr.mxu0 0.0
        %306 = vmatpush1.msra.mxu0 0.0
        %307 = vmatprep.subr.mxu0 0.0
        %308 = vmatpush1.msra.mxu0 0.0
        %309 = vmatprep.subr.mxu0 0.0
        %310 = vmatpush1.msra.mxu0 0.0
        %311 = vmatprep.subr.mxu0 0.0
        %312 = vmatpush1.msra.mxu0 0.0
        %313 = vmatprep.subr.mxu0 0.0
        %314 = vmatpush1.msra.mxu0 0.0
        %315 = vmatprep.subr.mxu0 0.0
        %316 = vmatpush1.msra.mxu0 0.0
        %317 = vmatprep.subr.mxu0 0.0
        %318 = vmatpush1.msra.mxu0 0.0
        %319 = vmatprep.subr.mxu0 0.0
        %320 = vmatpush1.msra.mxu0 0.0
        %321 = vmatprep.mubr.f32.mxu0 0.0
        %322 = vmatmul.mubr.f32.gmra.mrb[0].mxu0 %v255
        %v323 = vpop.f32.mrb[0].mxu0
        %v324 = vadd.f32 %v251, %v323
        %v325 = vpop.f32.mrb[0].mxu0
        %326 = vdwg.mxu0
        %327 = vst.msk [vmem:[%s240] sm:$0xff] %vm253, %v324
        %s328 = sand.u32 %s121, 1
        %s329 = scalar_lea.sflag [#allocation4], %s328
        %s330 = sand.u32 %s121, 1
        %s331 = smul.addr %s330, 8
        %s332 = scalar_lea.vmem [#allocation8], %s331
        // Predicated region
        $region45: #{decoder_layer.11} parent=31 // pred_check
          %p333 = pneg %p131
        $region46: #{decoder_layer.11} parent=31 // pred_check_branch
          %335 = sbr.rel (%p333) target = $region48
        $region47: #{decoder_layer.11} parent=31 // pred_region
          %s337 = ssub.s32 128, 128
          %338 = vsyncadd %s329, %s337
          %s339 = sadd.s32 %s26, %s25
          %s340 = smul.addr %s339, 128
          %s341 = scalar_lea.hbm %s3, %s340
          %s343 = sshll.u32 %s332, 4
          %s344 = int_to_ptr.vmem [resolvable:$true] %s343
          %346 = dma.vmem_to_hbm [thread:$0]  %s344, 128, %s341, %s329
        $region48: #{decoder_layer.11} parent=31 // pred_fallthru
          _
      $region32: #{decoder_layer.11} parent=5 // pred_fallthru
        _
      %p347 = scmp.le.s32.totalorder 2, %s16
      // Predicated region
      $region49: #{decoder_layer.11} parent=5 // pred_check
        %p348 = pneg %p347
      $region50: #{decoder_layer.11} parent=5 // pred_check_branch
        %350 = sbr.rel (%p348) target = $region52
      $region51: #{decoder_layer.11} parent=5 // pred_region
        %s351 = ssub.s32 %s16, 2
        // Predicated region
        $region53: #{decoder_layer.11} parent=51 // pred_check
          %p352 = pneg %p137
        $region54: #{decoder_layer.11} parent=51 // pred_check_branch
          %354 = sbr.rel (%p352) target = $region56
        $region55: #{decoder_layer.11} parent=51 // pred_region
          %s355 = sand.u32 %s122, 1
          %s356 = scalar_lea.sflag [#allocation4], %s355
          %s357 = sand.u32 %s122, 1
          %s358 = smul.addr %s357, 8
          %s359 = scalar_lea.vmem [#allocation8], %s358
          %360 = dma.done %s356, 128
        $region56: #{decoder_layer.11} parent=51 // pred_fallthru
          _
      $region52: #{decoder_layer.11} parent=5 // pred_fallthru
        _
    $region6: #{decoder_layer.11} parent=1 // loop_footer
      %s20 = sadd.s32 1, %s16
    $region7: #{decoder_layer.11} parent=1 // loop_footer_branch
      %15 = sbr.rel target = $region3
    $region8: #{decoder_layer.11} parent=1 // loop_exit
      _
    %361 = vsyncpa [#allocation3], 1
    %s362 = scalar_lea.sflag [#allocation3], 1
    %363 = vsyncpa %s362, 1
    %364 = vsyncpa [#allocation6], 1
    %365 = vsyncpa [#allocation4], 1
    %s366 = scalar_lea.sflag [#allocation4], 1
    %367 = vsyncpa %s366, 1

// kernel: decoder_layer.10
$region0: #{decoder_layer.10}
  #allocation0 [shape = 'u32[]', space=smem, size = 0x4, offset = 0x4, fixed_abs, tag = 'smem constant byte address 0x4 - core index']
  #allocation1 [shape = 'u32[144,128]{1,0:T(1,128)}', space=vmem, size = 0x12000, scoped, tag = 'internal scratch']
  %s0 = inlined_call_operand.hbm [shape: f32[16,32], index: 0, kind: input, shape index: {}]
  %s1 = inlined_call_operand.hbm [shape: f32[32,32], index: 1, kind: input, shape index: {}]
  %s2 = inlined_call_operand.hbm [shape: f32[1,32], index: 2, kind: input, shape index: {}]
  %s3 = inlined_call_operand.hbm [shape: f32[16,32], index: 3, kind: input, shape index: {}]
  %s4 = inlined_call_operand.hbm [shape: f32[1,32], index: 4, kind: input, shape index: {}]
  %s5 = inlined_call_operand.hbm [shape: f32[1,32], index: 5, kind: input, shape index: {}]
  %s6 = inlined_call_operand.hbm [shape: f32[16,32], index: 6, kind: output, shape index: {}]
  %s7 = sld [smem:[#allocation0]]
  $region81: #{decoder_layer.10} parent=0
    _
  %s9 = ssub.s32 1, %s7
  %s10 = scalar_select 0, %s9, %s7
  $region1: #{decoder_layer.10} parent=0
    #allocation2 [shape = 'u8[8192]{0}', space=vmem, size = 0x2000, scoped, tag = 'input window, operand 0']
    #allocation3 [shape = 's32[2]{0}', space=sflag, size = 0x8, scoped, tag = 'scoped memory for decoder_layer.10']
    #allocation4 [shape = 's32[2]{0}', space=sflag, size = 0x8, scoped, tag = 'scoped memory for decoder_layer.10']
    #allocation5 [shape = 'u8[16384]{0}', space=vmem, size = 0x4000, scoped, tag = 'input window, operand 1, single buffered']
    #allocation6 [shape = 's32[1]{0}', space=sflag, size = 0x4, scoped, tag = 'scoped memory for decoder_layer.10']
    #allocation7 [shape = 'u8[512]{0}', space=vmem, size = 0x400, scoped, tag = 'input window, operand 2, single buffered']
    #allocation8 [shape = 'u8[8192]{0}', space=vmem, size = 0x2000, scoped, tag = 'input window, operand 3']
    #allocation9 [shape = 's32[2]{0}', space=sflag, size = 0x8, scoped, tag = 'scoped memory for decoder_layer.10']
    #allocation10 [shape = 'u8[512]{0}', space=vmem, size = 0x400, scoped, tag = 'input window, operand 4, single buffered']
    #allocation11 [shape = 'u8[512]{0}', space=vmem, size = 0x400, scoped, tag = 'input window, operand 5, single buffered']
    #allocation12 [shape = 's32[1]{0}', space=sflag, size = 0x4, scoped, tag = 'scoped memory for decoder_layer.10']
    #allocation13 [shape = 'u8[8192]{0}', space=vmem, size = 0x2000, scoped, tag = 'output window, operand 0']
    %11 = vsyncpa [#allocation3], 0
    %s12 = scalar_lea.sflag [#allocation3], 1
    %13 = vsyncpa %s12, 0
    %14 = vsyncpa [#allocation6], 0
    %15 = vsyncpa [#allocation9], 0
    %s16 = scalar_lea.sflag [#allocation9], 1
    %17 = vsyncpa %s16, 0
    %18 = vsyncpa [#allocation12], 0
    %19 = vsyncpa [#allocation4], 0
    %s20 = scalar_lea.sflag [#allocation4], 1
    %21 = vsyncpa %s20, 0
    loop: start=0, step=1, limit=4
    $region2: #{decoder_layer.10} parent=1 // loop_pre_header
      _
    $region3: #{decoder_layer.10} parent=1 // loop_header
      %s23 = sphi 0, %s27
      %p24 = scmp.ge.s32.totalorder %s23, 4
      %s33 = sphi 0, %s35
      %s36 = sphi 0, %s33
      %s37 = sphi 0, %s36
      %s53 = sphi 0, %s37
      %s57 = sphi 0, %s57
      %s59 = sphi 0, %s57
      %s60 = sphi 0, %s59
      %s74 = sphi 0, %s60
      %s78 = sphi 0, %s78
      %s80 = sphi 0, %s78
      %s81 = sphi 0, %s80
      %s95 = sphi 0, %s81
      %s101 = sphi 0, %s103
      %s104 = sphi 0, %s101
      %s105 = sphi 0, %s104
      %s121 = sphi 0, %s105
      %s125 = sphi 0, %s125
      %s127 = sphi 0, %s125
      %s128 = sphi 0, %s127
      %s142 = sphi 0, %s128
      %s146 = sphi 0, %s146
      %s148 = sphi 0, %s146
      %s149 = sphi 0, %s148
      %s163 = sphi 0, %s149
      %s169 = sphi 0, %s171
      %s172 = sphi 0, %s169
      %s173 = sphi 0, %s172
      %s189 = sphi 0, %s173
    $region4: #{decoder_layer.10} parent=1 // loop_header_branch
      %26 = sbr.rel (%p24) target = $region8
    $region5: #{decoder_layer.10} parent=1 // loop_body
      %s28 = ssub.s32 %s23, 1
      %s29 = ssub.s32 %s23, 2
      %s30 = sadd.s32 %s23, 1
      %s31 = ssub.s32 %s23, %s30
      %p32 = scmp.eq.s32.totalorder %s31, 0
      %s34 = sadd.s32 %s33, 1
      %s35 = scalar_select %p32, %s33, %s34
      %p38 = pneg %p32
      %p39 = scmp.eq.s32.totalorder %s23, 1
      %p40 = por %p38, %p39
      %p41 = scmp.ne.s32.totalorder %s33, %s36
      %p42 = scmp.eq.s32.totalorder %s23, 0
      %p43 = por %p41, %p42
      %p44 = scmp.ne.s32.totalorder %s33, %s36
      %p45 = scmp.eq.s32.totalorder %s28, 1
      %p46 = por %p44, %p45
      %p47 = scmp.ne.s32.totalorder %s36, %s37
      %p48 = scmp.eq.s32.totalorder %s28, 0
      %p49 = por %p47, %p48
      %p50 = scmp.ne.s32.totalorder %s36, %s37
      %p51 = scmp.eq.s32.totalorder %s29, 1
      %p52 = por %p50, %p51
      %p54 = scmp.ne.s32.totalorder %s37, %s53
      %p55 = scmp.eq.s32.totalorder %s29, 0
      %p56 = por %p54, %p55
      %s58 = sadd.s32 %s57, 1
      %p61 = scmp.eq.s32.totalorder %s23, 1
      %p62 = scmp.ne.s32.totalorder %s57, %s59
      %p63 = scmp.eq.s32.totalorder %s23, 0
      %p64 = por %p62, %p63
      %p65 = scmp.ne.s32.totalorder %s57, %s59
      %p66 = scmp.eq.s32.totalorder %s28, 1
      %p67 = por %p65, %p66
      %p68 = scmp.ne.s32.totalorder %s59, %s60
      %p69 = scmp.eq.s32.totalorder %s28, 0
      %p70 = por %p68, %p69
      %p71 = scmp.ne.s32.totalorder %s59, %s60
      %p72 = scmp.eq.s32.totalorder %s29, 1
      %p73 = por %p71, %p72
      %p75 = scmp.ne.s32.totalorder %s60, %s74
      %p76 = scmp.eq.s32.totalorder %s29, 0
      %p77 = por %p75, %p76
      %s79 = sadd.s32 %s78, 1
      %p82 = scmp.eq.s32.totalorder %s23, 1
      %p83 = scmp.ne.s32.totalorder %s78, %s80
      %p84 = scmp.eq.s32.totalorder %s23, 0
      %p85 = por %p83, %p84
      %p86 = scmp.ne.s32.totalorder %s78, %s80
      %p87 = scmp.eq.s32.totalorder %s28, 1
      %p88 = por %p86, %p87
      %p89 = scmp.ne.s32.totalorder %s80, %s81
      %p90 = scmp.eq.s32.totalorder %s28, 0
      %p91 = por %p89, %p90
      %p92 = scmp.ne.s32.totalorder %s80, %s81
      %p93 = scmp.eq.s32.totalorder %s29, 1
      %p94 = por %p92, %p93
      %p96 = scmp.ne.s32.totalorder %s81, %s95
      %p97 = scmp.eq.s32.totalorder %s29, 0
      %p98 = por %p96, %p97
      %s99 = ssub.s32 %s23, %s30
      %p100 = scmp.eq.s32.totalorder %s99, 0
      %s102 = sadd.s32 %s101, 1
      %s103 = scalar_select %p100, %s101, %s102
      %p106 = pneg %p100
      %p107 = scmp.eq.s32.totalorder %s23, 1
      %p108 = por %p106, %p107
      %p109 = scmp.ne.s32.totalorder %s101, %s104
      %p110 = scmp.eq.s32.totalorder %s23, 0
      %p111 = por %p109, %p110
      %p112 = scmp.ne.s32.totalorder %s101, %s104
      %p113 = scmp.eq.s32.totalorder %s28, 1
      %p114 = por %p112, %p113
      %p115 = scmp.ne.s32.totalorder %s104, %s105
      %p116 = scmp.eq.s32.totalorder %s28, 0
      %p117 = por %p115, %p116
      %p118 = scmp.ne.s32.totalorder %s104, %s105
      %p119 = scmp.eq.s32.totalorder %s29, 1
      %p120 = por %p118, %p119
      %p122 = scmp.ne.s32.totalorder %s105, %s121
      %p123 = scmp.eq.s32.totalorder %s29, 0
      %p124 = por %p122, %p123
      %s126 = sadd.s32 %s125, 1
      %p129 = scmp.eq.s32.totalorder %s23, 1
      %p130 = scmp.ne.s32.totalorder %s125, %s127
      %p131 = scmp.eq.s32.totalorder %s23, 0
      %p132 = por %p130, %p131
      %p133 = scmp.ne.s32.totalorder %s125, %s127
      %p134 = scmp.eq.s32.totalorder %s28, 1
      %p135 = por %p133, %p134
      %p136 = scmp.ne.s32.totalorder %s127, %s128
      %p137 = scmp.eq.s32.totalorder %s28, 0
      %p138 = por %p136, %p137
      %p139 = scmp.ne.s32.totalorder %s127, %s128
      %p140 = scmp.eq.s32.totalorder %s29, 1
      %p141 = por %p139, %p140
      %p143 = scmp.ne.s32.totalorder %s128, %s142
      %p144 = scmp.eq.s32.totalorder %s29, 0
      %p145 = por %p143, %p144
      %s147 = sadd.s32 %s146, 1
      %p150 = scmp.eq.s32.totalorder %s23, 1
      %p151 = scmp.ne.s32.totalorder %s146, %s148
      %p152 = scmp.eq.s32.totalorder %s23, 0
      %p153 = por %p151, %p152
      %p154 = scmp.ne.s32.totalorder %s146, %s148
      %p155 = scmp.eq.s32.totalorder %s28, 1
      %p156 = por %p154, %p155
      %p157 = scmp.ne.s32.totalorder %s148, %s149
      %p158 = scmp.eq.s32.totalorder %s28, 0
      %p159 = por %p157, %p158
      %p160 = scmp.ne.s32.totalorder %s148, %s149
      %p161 = scmp.eq.s32.totalorder %s29, 1
      %p162 = por %p160, %p161
      %p164 = scmp.ne.s32.totalorder %s149, %s163
      %p165 = scmp.eq.s32.totalorder %s29, 0
      %p166 = por %p164, %p165
      %s167 = ssub.s32 %s23, %s30
      %p168 = scmp.eq.s32.totalorder %s167, 0
      %s170 = sadd.s32 %s169, 1
      %s171 = scalar_select %p168, %s169, %s170
      %p174 = pneg %p168
      %p175 = scmp.eq.s32.totalorder %s23, 1
      %p176 = por %p174, %p175
      %p177 = scmp.ne.s32.totalorder %s169, %s172
      %p178 = scmp.eq.s32.totalorder %s23, 0
      %p179 = por %p177, %p178
      %p180 = scmp.ne.s32.totalorder %s169, %s172
      %p181 = scmp.eq.s32.totalorder %s28, 1
      %p182 = por %p180, %p181
      %p183 = scmp.ne.s32.totalorder %s172, %s173
      %p184 = scmp.eq.s32.totalorder %s28, 0
      %p185 = por %p183, %p184
      %p186 = scmp.ne.s32.totalorder %s172, %s173
      %p187 = scmp.eq.s32.totalorder %s29, 1
      %p188 = por %p186, %p187
      %p190 = scmp.ne.s32.totalorder %s173, %s189
      %p191 = scmp.eq.s32.totalorder %s29, 0
      %p192 = por %p190, %p191
      %p193 = scmp.le.s32.totalorder 1, %s23
      %p194 = scmp.lt.s32.totalorder %s23, 3
      %p195 = pnand %p193, %p194
      %p196 = pneg %p195
      // Predicated region
      $region9: #{decoder_layer.10} parent=5 // pred_check
        _
      $region10: #{decoder_layer.10} parent=5 // pred_check_branch
        %198 = sbr.rel (%p195) target = $region12
      $region11: #{decoder_layer.10} parent=5 // pred_region
        %s199 = ssub.s32 %s23, 1
        // Predicated region
        $region13: #{decoder_layer.10} parent=11 // pred_check
          %p200 = pneg %p70
        $region14: #{decoder_layer.10} parent=11 // pred_check_branch
          %202 = sbr.rel (%p200) target = $region16
        $region15: #{decoder_layer.10} parent=11 // pred_region
          %s204 = ssub.s32 512, 512
          %205 = vsyncadd [#allocation6], %s204
          %s206 = sshll.u32 [#allocation5], 4
          %s207 = int_to_ptr.vmem [resolvable:$true] %s206
          %212 = dma.hbm_to_vmem [thread:$0]  %s1, 512, %s207, [#allocation6], 128, 128, 8
        $region16: #{decoder_layer.10} parent=11 // pred_fallthru
          _
        // Predicated region
        $region17: #{decoder_layer.10} parent=11 // pred_check
          %p213 = pneg %p91
        $region18: #{decoder_layer.10} parent=11 // pred_check_branch
          %215 = sbr.rel (%p213) target = $region20
        $region19: #{decoder_layer.10} parent=11 // pred_region
          %s217 = ssub.s32 16, 16
          %218 = vsyncadd [#allocation6], %s217
          %s220 = sshll.u32 [#allocation7], 4
          %s221 = int_to_ptr.vmem [resolvable:$true] %s220
          %223 = dma.hbm_to_vmem [thread:$0]  %s2, 16, %s221, [#allocation6]
        $region20: #{decoder_layer.10} parent=11 // pred_fallthru
          _
        // Predicated region
        $region21: #{decoder_layer.10} parent=11 // pred_check
          %p224 = pneg %p138
        $region22: #{decoder_layer.10} parent=11 // pred_check_branch
          %226 = sbr.rel (%p224) target = $region24
        $region23: #{decoder_layer.10} parent=11 // pred_region
          %s228 = ssub.s32 16, 16
          %229 = vsyncadd [#allocation9], %s228
          %s231 = sshll.u32 [#allocation10], 4
          %s232 = int_to_ptr.vmem [resolvable:$true] %s231
          %234 = dma.hbm_to_vmem [thread:$0]  %s4, 16, %s232, [#allocation9]
        $region24: #{decoder_layer.10} parent=11 // pred_fallthru
          _
        // Predicated region
        $region25: #{decoder_layer.10} parent=11 // pred_check
          %p235 = pneg %p159
        $region26: #{decoder_layer.10} parent=11 // pred_check_branch
          %237 = sbr.rel (%p235) target = $region28
        $region27: #{decoder_layer.10} parent=11 // pred_region
          %s239 = ssub.s32 16, 16
          %240 = vsyncadd [#allocation12], %s239
          %s242 = sshll.u32 [#allocation11], 4
          %s243 = int_to_ptr.vmem [resolvable:$true] %s242
          %245 = dma.hbm_to_vmem [thread:$0]  %s5, 16, %s243, [#allocation12]
        $region28: #{decoder_layer.10} parent=11 // pred_fallthru
          _
      $region12: #{decoder_layer.10} parent=5 // pred_fallthru
        _
      %p246 = scmp.lt.s32.totalorder %s23, 2
      // Predicated region
      $region29: #{decoder_layer.10} parent=5 // pred_check
        %p247 = pneg %p246
      $region30: #{decoder_layer.10} parent=5 // pred_check_branch
        %249 = sbr.rel (%p247) target = $region32
      $region31: #{decoder_layer.10} parent=5 // pred_region
        // Predicated region
        $region33: #{decoder_layer.10} parent=31 // pred_check
          %p250 = pneg %p43
        $region34: #{decoder_layer.10} parent=31 // pred_check_branch
          %252 = sbr.rel (%p250) target = $region36
        $region35: #{decoder_layer.10} parent=31 // pred_region
          %s253 = sand.u32 %s33, 1
          %s254 = scalar_lea.sflag [#allocation3], %s253
          %s255 = sand.u32 %s33, 1
          %s256 = smul.addr %s255, 8
          %s257 = scalar_lea.vmem [#allocation2], %s256
          %s259 = ssub.s32 128, 128
          %260 = vsyncadd %s254, %s259
          %s261 = smul.addr %s23, 128
          %s262 = scalar_lea.hbm %s0, %s261
          %s264 = sshll.u32 %s257, 4
          %s265 = int_to_ptr.vmem [resolvable:$true] %s264
          %267 = dma.hbm_to_vmem [thread:$0]  %s262, 128, %s265, %s254
        $region36: #{decoder_layer.10} parent=31 // pred_fallthru
          _
        // Predicated region
        $region37: #{decoder_layer.10} parent=31 // pred_check
          %p268 = pneg %p111
        $region38: #{decoder_layer.10} parent=31 // pred_check_branch
          %270 = sbr.rel (%p268) target = $region40
        $region39: #{decoder_layer.10} parent=31 // pred_region
          %s271 = sand.u32 %s23, 1
          %s272 = scalar_lea.sflag [#allocation9], %s271
          %s273 = sand.u32 %s101, 1
          %s274 = smul.addr %s273, 8
          %s275 = scalar_lea.vmem [#allocation8], %s274
          %s277 = ssub.s32 128, 128
          %278 = vsyncadd %s272, %s277
          %s279 = smul.addr %s23, 128
          %s280 = scalar_lea.hbm %s3, %s279
          %s282 = sshll.u32 %s275, 4
          %s283 = int_to_ptr.vmem [resolvable:$true] %s282
          %285 = dma.hbm_to_vmem [thread:$0]  %s280, 128, %s283, %s272
        $region40: #{decoder_layer.10} parent=31 // pred_fallthru
          _
      $region32: #{decoder_layer.10} parent=5 // pred_fallthru
        _
      %p286 = scmp.le.s32.totalorder 1, %s23
      %p287 = scmp.lt.s32.totalorder %s23, 3
      %p288 = pnand %p286, %p287
      %p289 = pneg %p288
      // Predicated region
      $region41: #{decoder_layer.10} parent=5 // pred_check
        _
      $region42: #{decoder_layer.10} parent=5 // pred_check_branch
        %291 = sbr.rel (%p288) target = $region44
      $region43: #{decoder_layer.10} parent=5 // pred_region
        %s292 = ssub.s32 %s23, 1
        %s293 = sand.u32 %s36, 1
        %s294 = scalar_lea.sflag [#allocation3], %s293
        %s295 = sand.u32 %s36, 1
        %s296 = smul.addr %s295, 8
        %s297 = scalar_lea.vmem [#allocation2], %s296
        // Predicated region
        $region45: #{decoder_layer.10} parent=43 // pred_check
          %p298 = pneg %p49
        $region46: #{decoder_layer.10} parent=43 // pred_check_branch
          %300 = sbr.rel (%p298) target = $region48
        $region47: #{decoder_layer.10} parent=43 // pred_region
          %301 = dma.done %s294, 128
        $region48: #{decoder_layer.10} parent=43 // pred_fallthru
          _
        // Predicated region
        $region49: #{decoder_layer.10} parent=43 // pred_check
          %p302 = pneg %p70
        $region50: #{decoder_layer.10} parent=43 // pred_check_branch
          %304 = sbr.rel (%p302) target = $region52
        $region51: #{decoder_layer.10} parent=43 // pred_region
          %305 = dma.done [#allocation6], 512
        $region52: #{decoder_layer.10} parent=43 // pred_fallthru
          _
        // Predicated region
        $region53: #{decoder_layer.10} parent=43 // pred_check
          %p306 = pneg %p91
        $region54: #{decoder_layer.10} parent=43 // pred_check_branch
          %308 = sbr.rel (%p306) target = $region56
        $region55: #{decoder_layer.10} parent=43 // pred_region
          %309 = dma.done [#allocation6], 16
        $region56: #{decoder_layer.10} parent=43 // pred_fallthru
          _
        %s310 = sand.u32 %s28, 1
        %s311 = scalar_lea.sflag [#allocation9], %s310
        %s312 = sand.u32 %s104, 1
        %s313 = smul.addr %s312, 8
        %s314 = scalar_lea.vmem [#allocation8], %s313
        // Predicated region
        $region57: #{decoder_layer.10} parent=43 // pred_check
          %p315 = pneg %p117
        $region58: #{decoder_layer.10} parent=43 // pred_check_branch
          %317 = sbr.rel (%p315) target = $region60
        $region59: #{decoder_layer.10} parent=43 // pred_region
          %318 = dma.done %s311, 128
        $region60: #{decoder_layer.10} parent=43 // pred_fallthru
          _
        // Predicated region
        $region61: #{decoder_layer.10} parent=43 // pred_check
          %p319 = pneg %p138
        $region62: #{decoder_layer.10} parent=43 // pred_check_branch
          %321 = sbr.rel (%p319) target = $region64
        $region63: #{decoder_layer.10} parent=43 // pred_region
          %322 = dma.done [#allocation9], 16
        $region64: #{decoder_layer.10} parent=43 // pred_fallthru
          _
        // Predicated region
        $region65: #{decoder_layer.10} parent=43 // pred_check
          %p323 = pneg %p159
        $region66: #{decoder_layer.10} parent=43 // pred_check_branch
          %325 = sbr.rel (%p323) target = $region68
        $region67: #{decoder_layer.10} parent=43 // pred_region
          %326 = dma.done [#allocation12], 16
        $region68: #{decoder_layer.10} parent=43 // pred_fallthru
          _
        %s327 = sand.u32 %s36, 1
        %s328 = scalar_lea.sflag [#allocation3], %s327
        %s329 = sand.u32 %s36, 1
        %s330 = smul.addr %s329, 8
        %s331 = scalar_lea.vmem [#allocation2], %s330
        %p332 = pneg %p49
        %p333 = pneg %p46
        %p334 = pneg %p70
        %p335 = pneg %p67
        %p336 = pneg %p91
        %p337 = pneg %p88
        %s338 = sand.u32 %s28, 1
        %s339 = scalar_lea.sflag [#allocation9], %s338
        %s340 = sand.u32 %s104, 1
        %s341 = smul.addr %s340, 8
        %s342 = scalar_lea.vmem [#allocation8], %s341
        %p343 = pneg %p117
        %p344 = pneg %p114
        %p345 = pneg %p138
        %p346 = pneg %p135
        %p347 = pneg %p159
        %p348 = pneg %p156
        %p349 = pneg %p185
        %p350 = pneg %p182
        %s351 = sand.u32 %s172, 1
        %s352 = scalar_lea.sflag [#allocation4], %s351
        %s353 = sand.u32 %s172, 1
        %s354 = smul.addr %s353, 8
        %s355 = scalar_lea.vmem [#allocation13], %s354
        %v356 = vld [vmem:[%s297] sm:$0xff]
        %v357 = vld [vmem:[#allocation5] sm:$0xff]
        %v358 = vld [vmem:[#allocation5 + $0x8] sm:$0xff]
        %v359 = vld [vmem:[#allocation5 + $0x10] sm:$0xff]
        %v360 = vld [vmem:[#allocation5 + $0x18] sm:$0xff]
        %v361 = vld [vmem:[#allocation7] sm:$0x1]
        %v363 = vlaneseq
        %v364 = vshrl.u32 %v363, 7
        %v365 = vsub.s32 0, %v364
        %v366 = vrot.slane %v361, %v365
        %vm368 = vcmask 261120
        %v370 = vsel %vm368, %v356, 0
        %372 = vmatprep.subr.mxu0 0.0
        %373 = vmatpush1.msra.mxu0 %v357
        %374 = vmatprep.subr.mxu0 0.0
        %375 = vmatpush1.msra.mxu0 %v358
        %376 = vmatprep.subr.mxu0 0.0
        %377 = vmatpush1.msra.mxu0 %v359
        %378 = vmatprep.subr.mxu0 0.0
        %379 = vmatpush1.msra.mxu0 %v360
        %380 = vmatprep.subr.mxu0 0.0
        %381 = vmatpush1.msra.mxu0 0.0
        %382 = vmatprep.subr.mxu0 0.0
        %383 = vmatpush1.msra.mxu0 0.0
        %384 = vmatprep.subr.mxu0 0.0
        %385 = vmatpush1.msra.mxu0 0.0
        %386 = vmatprep.subr.mxu0 0.0
        %387 = vmatpush1.msra.mxu0 0.0
        %388 = vmatprep.subr.mxu0 0.0
        %389 = vmatpush1.msra.mxu0 0.0
        %390 = vmatprep.subr.mxu0 0.0
        %391 = vmatpush1.msra.mxu0 0.0
        %392 = vmatprep.subr.mxu0 0.0
        %393 = vmatpush1.msra.mxu0 0.0
        %394 = vmatprep.subr.mxu0 0.0
        %395 = vmatpush1.msra.mxu0 0.0
        %396 = vmatprep.subr.mxu0 0.0
        %397 = vmatpush1.msra.mxu0 0.0
        %398 = vmatprep.subr.mxu0 0.0
        %399 = vmatpush1.msra.mxu0 0.0
        %400 = vmatprep.subr.mxu0 0.0
        %401 = vmatpush1.msra.mxu0 0.0
        %402 = vmatprep.subr.mxu0 0.0
        %403 = vmatpush1.msra.mxu0 0.0
        %404 = vmatprep.subr.mxu0 0.0
        %405 = vmatpush1.msra.mxu0 0.0
        %406 = vmatprep.subr.mxu0 0.0
        %407 = vmatpush1.msra.mxu0 0.0
        %408 = vmatprep.subr.mxu0 0.0
        %409 = vmatpush1.msra.mxu0 0.0
        %410 = vmatprep.subr.mxu0 0.0
        %411 = vmatpush1.msra.mxu0 0.0
        %412 = vmatprep.subr.mxu0 0.0
        %413 = vmatpush1.msra.mxu0 0.0
        %414 = vmatprep.subr.mxu0 0.0
        %415 = vmatpush1.msra.mxu0 0.0
        %416 = vmatprep.subr.mxu0 0.0
        %417 = vmatpush1.msra.mxu0 0.0
        %418 = vmatprep.subr.mxu0 0.0
        %419 = vmatpush1.msra.mxu0 0.0
        %420 = vmatprep.subr.mxu0 0.0
        %421 = vmatpush1.msra.mxu0 0.0
        %422 = vmatprep.subr.mxu0 0.0
        %423 = vmatpush1.msra.mxu0 0.0
        %424 = vmatprep.subr.mxu0 0.0
        %425 = vmatpush1.msra.mxu0 0.0
        %426 = vmatprep.subr.mxu0 0.0
        %427 = vmatpush1.msra.mxu0 0.0
        %428 = vmatprep.subr.mxu0 0.0
        %429 = vmatpush1.msra.mxu0 0.0
        %430 = vmatprep.subr.mxu0 0.0
        %431 = vmatpush1.msra.mxu0 0.0
        %432 = vmatprep.subr.mxu0 0.0
        %433 = vmatpush1.msra.mxu0 0.0
        %434 = vmatprep.subr.mxu0 0.0
        %435 = vmatpush1.msra.mxu0 0.0
        %436 = vmatprep.mubr.f32.mxu0 0.0
        %437 = vmatmul.mubr.f32.gmra.mrb[0].mxu0 %v370
        %v438 = vpop.f32.mrb[0].mxu0
        %v439 = vadd.f32 %v366, %v438
        %v440 = vpop.f32.mrb[0].mxu0
        %441 = vdwg.mxu0
        %v442 = vld [vmem:[%s314] sm:$0xff]
        %v443 = vadd.f32 %v439, %v442
        %v444 = vld [vmem:[#allocation10] sm:$0x1]
        %v445 = vld [vmem:[#allocation11] sm:$0x1]
        %v446 = vsel %vm368, %v443, 0.0
        %447 = vadd.xlane.f32.xlu0 %v446
        %v448 = vpop.xlane.xlu0 %447
        %v449 = vrcp.pop 32.0
        %v450 = vmul.f32 %v448, %v449
        %v451 = vsub.f32 %v443, %v450
        %v452 = vmul.f32 %v451, %v451
        %v453 = vsel %vm368, %v452, 0.0
        %454 = vadd.xlane.f32.xlu0 %v453
        %v455 = vpop.xlane.xlu0 %454
        %v456 = vmul.f32 %v455, 0.032258064
        %v457 = vrsqrt.pop %v456
        %v458 = vmul.f32 %v456, %v457
        %vm459 = vcmp.eq.f32.partialorder %v456, inf
        %v460 = vsel %vm459, %v456, %v458
        %vm461 = vcmp.eq.f32.partialorder %v456, 0.0
        %v462 = vand.u32 %v456, 2147483648
        %v463 = vsel %vm461, %v462, %v460
        %v464 = vadd.f32 %v463, 1e-06
        %v465 = vrcp.pop %v464
        %v467 = vlaneseq
        %v468 = vshrl.u32 %v467, 7
        %v469 = vsub.s32 0, %v468
        %v470 = vrot.slane %v444, %v469
        %v472 = vmul.f32 %v470, %v451
        %v473 = vmul.f32 %v472, %v465
        %v475 = vlaneseq
        %v476 = vshrl.u32 %v475, 7
        %v477 = vsub.s32 0, %v476
        %v478 = vrot.slane %v445, %v477
        %v480 = vadd.f32 %v473, %v478
        %481 = vst.msk [vmem:[%s355] sm:$0xff] %vm368, %v480
        %s482 = sand.u32 %s172, 1
        %s483 = scalar_lea.sflag [#allocation4], %s482
        %s484 = sand.u32 %s172, 1
        %s485 = smul.addr %s484, 8
        %s486 = scalar_lea.vmem [#allocation13], %s485
        // Predicated region
        $region69: #{decoder_layer.10} parent=43 // pred_check
          %p487 = pneg %p182
        $region70: #{decoder_layer.10} parent=43 // pred_check_branch
          %489 = sbr.rel (%p487) target = $region72
        $region71: #{decoder_layer.10} parent=43 // pred_region
          %s491 = ssub.s32 128, 128
          %492 = vsyncadd %s483, %s491
          %s493 = smul.addr %s28, 128
          %s494 = scalar_lea.hbm %s6, %s493
          %s496 = sshll.u32 %s486, 4
          %s497 = int_to_ptr.vmem [resolvable:$true] %s496
          %499 = dma.vmem_to_hbm [thread:$0]  %s497, 128, %s494, %s483
        $region72: #{decoder_layer.10} parent=43 // pred_fallthru
          _
      $region44: #{decoder_layer.10} parent=5 // pred_fallthru
        _
      %p500 = scmp.le.s32.totalorder 2, %s23
      // Predicated region
      $region73: #{decoder_layer.10} parent=5 // pred_check
        %p501 = pneg %p500
      $region74: #{decoder_layer.10} parent=5 // pred_check_branch
        %503 = sbr.rel (%p501) target = $region76
      $region75: #{decoder_layer.10} parent=5 // pred_region
        %s504 = ssub.s32 %s23, 2
        // Predicated region
        $region77: #{decoder_layer.10} parent=75 // pred_check
          %p505 = pneg %p188
        $region78: #{decoder_layer.10} parent=75 // pred_check_branch
          %507 = sbr.rel (%p505) target = $region80
        $region79: #{decoder_layer.10} parent=75 // pred_region
          %s508 = sand.u32 %s173, 1
          %s509 = scalar_lea.sflag [#allocation4], %s508
          %s510 = sand.u32 %s173, 1
          %s511 = smul.addr %s510, 8
          %s512 = scalar_lea.vmem [#allocation13], %s511
          %513 = dma.done %s509, 128
        $region80: #{decoder_layer.10} parent=75 // pred_fallthru
          _
      $region76: #{decoder_layer.10} parent=5 // pred_fallthru
        _
    $region6: #{decoder_layer.10} parent=1 // loop_footer
      %s27 = sadd.s32 1, %s23
    $region7: #{decoder_layer.10} parent=1 // loop_footer_branch
      %22 = sbr.rel target = $region3
    $region8: #{decoder_layer.10} parent=1 // loop_exit
      _
    %514 = vsyncpa [#allocation3], 1
    %s515 = scalar_lea.sflag [#allocation3], 1
    %516 = vsyncpa %s515, 1
    %517 = vsyncpa [#allocation6], 1
    %518 = vsyncpa [#allocation9], 1
    %s519 = scalar_lea.sflag [#allocation9], 1
    %520 = vsyncpa %s519, 1
    %521 = vsyncpa [#allocation12], 1
    %522 = vsyncpa [#allocation4], 1
    %s523 = scalar_lea.sflag [#allocation4], 1
    %524 = vsyncpa %s523, 1

// kernel: decoder_layer.9
$region0: #{decoder_layer.9}
  #allocation0 [shape = 'u32[]', space=smem, size = 0x4, offset = 0x4, fixed_abs, tag = 'smem constant byte address 0x4 - core index']
  #allocation1 [shape = 'u32[144,128]{1,0:T(1,128)}', space=vmem, size = 0x12000, scoped, tag = 'internal scratch']
  %s0 = inlined_call_operand.hbm [shape: f32[2,8,96], index: 0, kind: input, shape index: {}]
  %s1 = inlined_call_operand.hbm [shape: f32[2,8,32], index: 1, kind: output, shape index: {}]
  %s2 = sld [smem:[#allocation0]]
  $region41: #{decoder_layer.9} parent=0
    _
  %s4 = ssub.s32 1, %s2
  %s5 = scalar_select 0, %s4, %s2
  $region1: #{decoder_layer.9} parent=0
    #allocation2 [shape = 'u8[8192]{0}', space=vmem, size = 0x2000, scoped, tag = 'input window, operand 0']
    #allocation3 [shape = 's32[2]{0}', space=sflag, size = 0x8, scoped, tag = 'scoped memory for decoder_layer.9']
    #allocation4 [shape = 's32[2]{0}', space=sflag, size = 0x8, scoped, tag = 'scoped memory for decoder_layer.9']
    #allocation5 [shape = 'u8[8192]{0}', space=vmem, size = 0x2000, scoped, tag = 'output window, operand 0']
    %6 = vsyncpa [#allocation3], 0
    %s7 = scalar_lea.sflag [#allocation3], 1
    %8 = vsyncpa %s7, 0
    %9 = vsyncpa [#allocation4], 0
    %s10 = scalar_lea.sflag [#allocation4], 1
    %11 = vsyncpa %s10, 0
    loop: start=0, step=1, limit=4
    $region2: #{decoder_layer.9} parent=1 // loop_pre_header
      _
    $region3: #{decoder_layer.9} parent=1 // loop_header
      %s13 = sphi 0, %s17
      %p14 = scmp.ge.s32.totalorder %s13, 4
      %s23 = sphi 0, %s25
      %s26 = sphi 0, %s23
      %s27 = sphi 0, %s26
      %s43 = sphi 0, %s27
      %s49 = sphi 0, %s51
      %s52 = sphi 0, %s49
      %s53 = sphi 0, %s52
      %s69 = sphi 0, %s53
    $region4: #{decoder_layer.9} parent=1 // loop_header_branch
      %16 = sbr.rel (%p14) target = $region8
    $region5: #{decoder_layer.9} parent=1 // loop_body
      %s18 = ssub.s32 %s13, 1
      %s19 = ssub.s32 %s13, 2
      %s20 = sadd.s32 %s13, 1
      %s21 = ssub.s32 %s13, %s20
      %p22 = scmp.eq.s32.totalorder %s21, 0
      %s24 = sadd.s32 %s23, 1
      %s25 = scalar_select %p22, %s23, %s24
      %p28 = pneg %p22
      %p29 = scmp.eq.s32.totalorder %s13, 1
      %p30 = por %p28, %p29
      %p31 = scmp.ne.s32.totalorder %s23, %s26
      %p32 = scmp.eq.s32.totalorder %s13, 0
      %p33 = por %p31, %p32
      %p34 = scmp.ne.s32.totalorder %s23, %s26
      %p35 = scmp.eq.s32.totalorder %s18, 1
      %p36 = por %p34, %p35
      %p37 = scmp.ne.s32.totalorder %s26, %s27
      %p38 = scmp.eq.s32.totalorder %s18, 0
      %p39 = por %p37, %p38
      %p40 = scmp.ne.s32.totalorder %s26, %s27
      %p41 = scmp.eq.s32.totalorder %s19, 1
      %p42 = por %p40, %p41
      %p44 = scmp.ne.s32.totalorder %s27, %s43
      %p45 = scmp.eq.s32.totalorder %s19, 0
      %p46 = por %p44, %p45
      %s47 = ssub.s32 %s13, %s20
      %p48 = scmp.eq.s32.totalorder %s47, 0
      %s50 = sadd.s32 %s49, 1
      %s51 = scalar_select %p48, %s49, %s50
      %p54 = pneg %p48
      %p55 = scmp.eq.s32.totalorder %s13, 1
      %p56 = por %p54, %p55
      %p57 = scmp.ne.s32.totalorder %s49, %s52
      %p58 = scmp.eq.s32.totalorder %s13, 0
      %p59 = por %p57, %p58
      %p60 = scmp.ne.s32.totalorder %s49, %s52
      %p61 = scmp.eq.s32.totalorder %s18, 1
      %p62 = por %p60, %p61
      %p63 = scmp.ne.s32.totalorder %s52, %s53
      %p64 = scmp.eq.s32.totalorder %s18, 0
      %p65 = por %p63, %p64
      %p66 = scmp.ne.s32.totalorder %s52, %s53
      %p67 = scmp.eq.s32.totalorder %s19, 1
      %p68 = por %p66, %p67
      %p70 = scmp.ne.s32.totalorder %s53, %s69
      %p71 = scmp.eq.s32.totalorder %s19, 0
      %p72 = por %p70, %p71
      %p73 = scmp.le.s32.totalorder 1, %s13
      %p74 = scmp.lt.s32.totalorder %s13, 3
      %p75 = pnand %p73, %p74
      %p76 = pneg %p75
      // Predicated region
      $region9: #{decoder_layer.9} parent=5 // pred_check
        _
      $region10: #{decoder_layer.9} parent=5 // pred_check_branch
        %78 = sbr.rel (%p75) target = $region12
      $region11: #{decoder_layer.9} parent=5 // pred_region
        %s79 = ssub.s32 %s13, 1
      $region12: #{decoder_layer.9} parent=5 // pred_fallthru
        _
      %p80 = scmp.lt.s32.totalorder %s13, 2
      // Predicated region
      $region13: #{decoder_layer.9} parent=5 // pred_check
        %p81 = pneg %p80
      $region14: #{decoder_layer.9} parent=5 // pred_check_branch
        %83 = sbr.rel (%p81) target = $region16
      $region15: #{decoder_layer.9} parent=5 // pred_region
        // Predicated region
        $region17: #{decoder_layer.9} parent=15 // pred_check
          %p84 = pneg %p33
        $region18: #{decoder_layer.9} parent=15 // pred_check_branch
          %86 = sbr.rel (%p84) target = $region20
        $region19: #{decoder_layer.9} parent=15 // pred_region
          %s87 = sand.u32 %s23, 1
          %s88 = scalar_lea.sflag [#allocation3], %s87
          %s89 = sand.u32 %s23, 1
          %s90 = smul.addr %s89, 8
          %s91 = scalar_lea.vmem [#allocation2], %s90
          %s93 = ssub.s32 128, 128
          %94 = vsyncadd %s88, %s93
          %s95 = smul.addr %s13, 128
          %s96 = scalar_lea.hbm %s0, %s95
          %s98 = sshll.u32 %s91, 4
          %s99 = int_to_ptr.vmem [resolvable:$true] %s98
          %101 = dma.hbm_to_vmem [thread:$0]  %s96, 128, %s99, %s88
        $region20: #{decoder_layer.9} parent=15 // pred_fallthru
          _
      $region16: #{decoder_layer.9} parent=5 // pred_fallthru
        _
      %p102 = scmp.le.s32.totalorder 1, %s13
      %p103 = scmp.lt.s32.totalorder %s13, 3
      %p104 = pnand %p102, %p103
      %p105 = pneg %p104
      // Predicated region
      $region21: #{decoder_layer.9} parent=5 // pred_check
        _
      $region22: #{decoder_layer.9} parent=5 // pred_check_branch
        %107 = sbr.rel (%p104) target = $region24
      $region23: #{decoder_layer.9} parent=5 // pred_region
        %s108 = ssub.s32 %s13, 1
        %s109 = sand.u32 %s26, 1
        %s110 = scalar_lea.sflag [#allocation3], %s109
        %s111 = sand.u32 %s26, 1
        %s112 = smul.addr %s111, 8
        %s113 = scalar_lea.vmem [#allocation2], %s112
        // Predicated region
        $region25: #{decoder_layer.9} parent=23 // pred_check
          %p114 = pneg %p39
        $region26: #{decoder_layer.9} parent=23 // pred_check_branch
          %116 = sbr.rel (%p114) target = $region28
        $region27: #{decoder_layer.9} parent=23 // pred_region
          %117 = dma.done %s110, 128
        $region28: #{decoder_layer.9} parent=23 // pred_fallthru
          _
        %s118 = sand.u32 %s26, 1
        %s119 = scalar_lea.sflag [#allocation3], %s118
        %s120 = sand.u32 %s26, 1
        %s121 = smul.addr %s120, 8
        %s122 = scalar_lea.vmem [#allocation2], %s121
        %p123 = pneg %p39
        %p124 = pneg %p36
        %p125 = pneg %p65
        %p126 = pneg %p62
        %s127 = sand.u32 %s52, 1
        %s128 = scalar_lea.sflag [#allocation4], %s127
        %s129 = sand.u32 %s52, 1
        %s130 = smul.addr %s129, 8
        %s131 = scalar_lea.vmem [#allocation5], %s130
        %v132 = vld [vmem:[%s113] sm:$0xff]
        %134 = vrot.lane.b32.xlu0 %v132, 96
        %v135 = vpop.permute.xlu0 %134
        %vm136 = vcmask 64512
        %v137 = vsel %vm136, %v132, 0
        %v139 = vsel %vm136, %v135, 0
        %141 = vmatprep.subr.mxu0 0.0
        %142 = vmatpush1.xpose.msra.mxu0 %v139
        %143 = vmatprep.subr.mxu0 0.0
        %144 = vmatpush1.xpose.msra.mxu0 0.0
        %145 = vmatprep.subr.mxu0 0.0
        %146 = vmatpush1.xpose.msra.mxu0 0.0
        %147 = vmatprep.subr.mxu0 0.0
        %148 = vmatpush1.xpose.msra.mxu0 0.0
        %149 = vmatprep.subr.mxu0 0.0
        %150 = vmatpush1.xpose.msra.mxu0 0.0
        %151 = vmatprep.subr.mxu0 0.0
        %152 = vmatpush1.xpose.msra.mxu0 0.0
        %153 = vmatprep.subr.mxu0 0.0
        %154 = vmatpush1.xpose.msra.mxu0 0.0
        %155 = vmatprep.subr.mxu0 0.0
        %156 = vmatpush1.xpose.msra.mxu0 0.0
        %157 = vmatprep.subr.mxu0 0.0
        %158 = vmatpush1.xpose.msra.mxu0 0.0
        %159 = vmatprep.subr.mxu0 0.0
        %160 = vmatpush1.xpose.msra.mxu0 0.0
        %161 = vmatprep.subr.mxu0 0.0
        %162 = vmatpush1.xpose.msra.mxu0 0.0
        %163 = vmatprep.subr.mxu0 0.0
        %164 = vmatpush1.xpose.msra.mxu0 0.0
        %165 = vmatprep.subr.mxu0 0.0
        %166 = vmatpush1.xpose.msra.mxu0 0.0
        %167 = vmatprep.subr.mxu0 0.0
        %168 = vmatpush1.xpose.msra.mxu0 0.0
        %169 = vmatprep.subr.mxu0 0.0
        %170 = vmatpush1.xpose.msra.mxu0 0.0
        %171 = vmatprep.subr.mxu0 0.0
        %172 = vmatpush1.xpose.msra.mxu0 0.0
        %173 = vmatprep.subr.mxu0 0.0
        %174 = vmatpush1.xpose.msra.mxu0 0.0
        %175 = vmatprep.subr.mxu0 0.0
        %176 = vmatpush1.xpose.msra.mxu0 0.0
        %177 = vmatprep.subr.mxu0 0.0
        %178 = vmatpush1.xpose.msra.mxu0 0.0
        %179 = vmatprep.subr.mxu0 0.0
        %180 = vmatpush1.xpose.msra.mxu0 0.0
        %181 = vmatprep.subr.mxu0 0.0
        %182 = vmatpush1.xpose.msra.mxu0 0.0
        %183 = vmatprep.subr.mxu0 0.0
        %184 = vmatpush1.xpose.msra.mxu0 0.0
        %185 = vmatprep.subr.mxu0 0.0
        %186 = vmatpush1.xpose.msra.mxu0 0.0
        %187 = vmatprep.subr.mxu0 0.0
        %188 = vmatpush1.xpose.msra.mxu0 0.0
        %189 = vmatprep.subr.mxu0 0.0
        %190 = vmatpush1.xpose.msra.mxu0 0.0
        %191 = vmatprep.subr.mxu0 0.0
        %192 = vmatpush1.xpose.msra.mxu0 0.0
        %193 = vmatprep.subr.mxu0 0.0
        %194 = vmatpush1.xpose.msra.mxu0 0.0
        %195 = vmatprep.subr.mxu0 0.0
        %196 = vmatpush1.xpose.msra.mxu0 0.0
        %197 = vmatprep.subr.mxu0 0.0
        %198 = vmatpush1.xpose.msra.mxu0 0.0
        %199 = vmatprep.subr.mxu0 0.0
        %200 = vmatpush1.xpose.msra.mxu0 0.0
        %201 = vmatprep.subr.mxu0 0.0
        %202 = vmatpush1.xpose.msra.mxu0 0.0
        %203 = vmatprep.subr.mxu0 0.0
        %204 = vmatpush1.xpose.msra.mxu0 0.0
        %205 = vmatprep.mubr.f32.mxu0 0.0
        %206 = vmatmul.mubr.f32.gmra.mrb[0].mxu0 %v137
        %v207 = vpop.f32.mrb[0].mxu0
        %v208 = vadd.f32 0.0, %v207
        %v209 = vpop.f32.mrb[0].mxu0
        %210 = vdwg.mxu0
        %v211 = vsel %vm136, %v208, -inf
        %212 = vmax.xlane.f32.xlu0 %v211
        %v213 = vpop.xlane.xlu0 %212
        %v214 = vsub.f32 %v208, %v213
        %v215 = vmul.f32 %v214, 1.442695
        %v216 = vpow.pop %v215
        %v217 = vsel %vm136, %v216, 0.0
        %218 = vadd.xlane.f32.xlu0 %v217
        %v219 = vpop.xlane.xlu0 %218
        %v220 = vrcp.pop %v219
        %v221 = vmul.f32 %v216, %v220
        %222 = vrot.lane.b32.xlu0 %v132, 64
        %v223 = vpop.permute.xlu0 %222
        %v226 = vsel %vm136, %v221, 0
        %228 = vmatprep.subr.mxu0 0.0
        %229 = vmatpush1.msra.mxu0 %v223
        %230 = vmatprep.subr.mxu0 0.0
        %231 = vmatpush1.msra.mxu0 0.0
        %232 = vmatprep.subr.mxu0 0.0
        %233 = vmatpush1.msra.mxu0 0.0
        %234 = vmatprep.subr.mxu0 0.0
        %235 = vmatpush1.msra.mxu0 0.0
        %236 = vmatprep.subr.mxu0 0.0
        %237 = vmatpush1.msra.mxu0 0.0
        %238 = vmatprep.subr.mxu0 0.0
        %239 = vmatpush1.msra.mxu0 0.0
        %240 = vmatprep.subr.mxu0 0.0
        %241 = vmatpush1.msra.mxu0 0.0
        %242 = vmatprep.subr.mxu0 0.0
        %243 = vmatpush1.msra.mxu0 0.0
        %244 = vmatprep.subr.mxu0 0.0
        %245 = vmatpush1.msra.mxu0 0.0
        %246 = vmatprep.subr.mxu0 0.0
        %247 = vmatpush1.msra.mxu0 0.0
        %248 = vmatprep.subr.mxu0 0.0
        %249 = vmatpush1.msra.mxu0 0.0
        %250 = vmatprep.subr.mxu0 0.0
        %251 = vmatpush1.msra.mxu0 0.0
        %252 = vmatprep.subr.mxu0 0.0
        %253 = vmatpush1.msra.mxu0 0.0
        %254 = vmatprep.subr.mxu0 0.0
        %255 = vmatpush1.msra.mxu0 0.0
        %256 = vmatprep.subr.mxu0 0.0
        %257 = vmatpush1.msra.mxu0 0.0
        %258 = vmatprep.subr.mxu0 0.0
        %259 = vmatpush1.msra.mxu0 0.0
        %260 = vmatprep.subr.mxu0 0.0
        %261 = vmatpush1.msra.mxu0 0.0
        %262 = vmatprep.subr.mxu0 0.0
        %263 = vmatpush1.msra.mxu0 0.0
        %264 = vmatprep.subr.mxu0 0.0
        %265 = vmatpush1.msra.mxu0 0.0
        %266 = vmatprep.subr.mxu0 0.0
        %267 = vmatpush1.msra.mxu0 0.0
        %268 = vmatprep.subr.mxu0 0.0
        %269 = vmatpush1.msra.mxu0 0.0
        %270 = vmatprep.subr.mxu0 0.0
        %271 = vmatpush1.msra.mxu0 0.0
        %272 = vmatprep.subr.mxu0 0.0
        %273 = vmatpush1.msra.mxu0 0.0
        %274 = vmatprep.subr.mxu0 0.0
        %275 = vmatpush1.msra.mxu0 0.0
        %276 = vmatprep.subr.mxu0 0.0
        %277 = vmatpush1.msra.mxu0 0.0
        %278 = vmatprep.subr.mxu0 0.0
        %279 = vmatpush1.msra.mxu0 0.0
        %280 = vmatprep.subr.mxu0 0.0
        %281 = vmatpush1.msra.mxu0 0.0
        %282 = vmatprep.subr.mxu0 0.0
        %283 = vmatpush1.msra.mxu0 0.0
        %284 = vmatprep.subr.mxu0 0.0
        %285 = vmatpush1.msra.mxu0 0.0
        %286 = vmatprep.subr.mxu0 0.0
        %287 = vmatpush1.msra.mxu0 0.0
        %288 = vmatprep.subr.mxu0 0.0
        %289 = vmatpush1.msra.mxu0 0.0
        %290 = vmatprep.subr.mxu0 0.0
        %291 = vmatpush1.msra.mxu0 0.0
        %292 = vmatprep.mubr.f32.mxu0 0.0
        %293 = vmatmul.mubr.f32.gmra.mrb[0].mxu0 %v226
        %v294 = vpop.f32.mrb[0].mxu0
        %v295 = vadd.f32 0.0, %v294
        %v296 = vpop.f32.mrb[0].mxu0
        %297 = vdwg.mxu0
        %298 = vst.msk [vmem:[%s131] sm:$0xff] %vm136, %v295
        %299 = vrot.lane.b32.xlu0 %v132, 120
        %v300 = vpop.permute.xlu0 %299
        %301 = vrot.lane.b32.xlu0 %v132, 88
        %v302 = vpop.permute.xlu0 %301
        %v303 = vsel %vm136, %v300, 0
        %v305 = vsel %vm136, %v302, 0
        %307 = vmatprep.subr.mxu0 0.0
        %308 = vmatpush1.xpose.msra.mxu0 %v305
        %309 = vmatprep.subr.mxu0 0.0
        %310 = vmatpush1.xpose.msra.mxu0 0.0
        %311 = vmatprep.subr.mxu0 0.0
        %312 = vmatpush1.xpose.msra.mxu0 0.0
        %313 = vmatprep.subr.mxu0 0.0
        %314 = vmatpush1.xpose.msra.mxu0 0.0
        %315 = vmatprep.subr.mxu0 0.0
        %316 = vmatpush1.xpose.msra.mxu0 0.0
        %317 = vmatprep.subr.mxu0 0.0
        %318 = vmatpush1.xpose.msra.mxu0 0.0
        %319 = vmatprep.subr.mxu0 0.0
        %320 = vmatpush1.xpose.msra.mxu0 0.0
        %321 = vmatprep.subr.mxu0 0.0
        %322 = vmatpush1.xpose.msra.mxu0 0.0
        %323 = vmatprep.subr.mxu0 0.0
        %324 = vmatpush1.xpose.msra.mxu0 0.0
        %325 = vmatprep.subr.mxu0 0.0
        %326 = vmatpush1.xpose.msra.mxu0 0.0
        %327 = vmatprep.subr.mxu0 0.0
        %328 = vmatpush1.xpose.msra.mxu0 0.0
        %329 = vmatprep.subr.mxu0 0.0
        %330 = vmatpush1.xpose.msra.mxu0 0.0
        %331 = vmatprep.subr.mxu0 0.0
        %332 = vmatpush1.xpose.msra.mxu0 0.0
        %333 = vmatprep.subr.mxu0 0.0
        %334 = vmatpush1.xpose.msra.mxu0 0.0
        %335 = vmatprep.subr.mxu0 0.0
        %336 = vmatpush1.xpose.msra.mxu0 0.0
        %337 = vmatprep.subr.mxu0 0.0
        %338 = vmatpush1.xpose.msra.mxu0 0.0
        %339 = vmatprep.subr.mxu0 0.0
        %340 = vmatpush1.xpose.msra.mxu0 0.0
        %341 = vmatprep.subr.mxu0 0.0
        %342 = vmatpush1.xpose.msra.mxu0 0.0
        %343 = vmatprep.subr.mxu0 0.0
        %344 = vmatpush1.xpose.msra.mxu0 0.0
        %345 = vmatprep.subr.mxu0 0.0
        %346 = vmatpush1.xpose.msra.mxu0 0.0
        %347 = vmatprep.subr.mxu0 0.0
        %348 = vmatpush1.xpose.msra.mxu0 0.0
        %349 = vmatprep.subr.mxu0 0.0
        %350 = vmatpush1.xpose.msra.mxu0 0.0
        %351 = vmatprep.subr.mxu0 0.0
        %352 = vmatpush1.xpose.msra.mxu0 0.0
        %353 = vmatprep.subr.mxu0 0.0
        %354 = vmatpush1.xpose.msra.mxu0 0.0
        %355 = vmatprep.subr.mxu0 0.0
        %356 = vmatpush1.xpose.msra.mxu0 0.0
        %357 = vmatprep.subr.mxu0 0.0
        %358 = vmatpush1.xpose.msra.mxu0 0.0
        %359 = vmatprep.subr.mxu0 0.0
        %360 = vmatpush1.xpose.msra.mxu0 0.0
        %361 = vmatprep.subr.mxu0 0.0
        %362 = vmatpush1.xpose.msra.mxu0 0.0
        %363 = vmatprep.subr.mxu0 0.0
        %364 = vmatpush1.xpose.msra.mxu0 0.0
        %365 = vmatprep.subr.mxu0 0.0
        %366 = vmatpush1.xpose.msra.mxu0 0.0
        %367 = vmatprep.subr.mxu0 0.0
        %368 = vmatpush1.xpose.msra.mxu0 0.0
        %369 = vmatprep.subr.mxu0 0.0
        %370 = vmatpush1.xpose.msra.mxu0 0.0
        %371 = vmatprep.mubr.f32.mxu0 0.0
        %372 = vmatmul.mubr.f32.gmra.mrb[0].mxu0 %v303
        %v373 = vpop.f32.mrb[0].mxu0
        %v374 = vadd.f32 0.0, %v373
        %v375 = vpop.f32.mrb[0].mxu0
        %376 = vdwg.mxu0
        %v377 = vsel %vm136, %v374, -inf
        %378 = vmax.xlane.f32.xlu0 %v377
        %v379 = vpop.xlane.xlu0 %378
        %v380 = vsub.f32 %v374, %v379
        %v381 = vmul.f32 %v380, 1.442695
        %v382 = vpow.pop %v381
        %v383 = vsel %vm136, %v382, 0.0
        %384 = vadd.xlane.f32.xlu0 %v383
        %v385 = vpop.xlane.xlu0 %384
        %v386 = vrcp.pop %v385
        %v387 = vmul.f32 %v382, %v386
        %388 = vrot.lane.b32.xlu0 %v132, 56
        %v389 = vpop.permute.xlu0 %388
        %v392 = vsel %vm136, %v387, 0
        %394 = vmatprep.subr.mxu0 0.0
        %395 = vmatpush1.msra.mxu0 %v389
        %396 = vmatprep.subr.mxu0 0.0
        %397 = vmatpush1.msra.mxu0 0.0
        %398 = vmatprep.subr.mxu0 0.0
        %399 = vmatpush1.msra.mxu0 0.0
        %400 = vmatprep.subr.mxu0 0.0
        %401 = vmatpush1.msra.mxu0 0.0
        %402 = vmatprep.subr.mxu0 0.0
        %403 = vmatpush1.msra.mxu0 0.0
        %404 = vmatprep.subr.mxu0 0.0
        %405 = vmatpush1.msra.mxu0 0.0
        %406 = vmatprep.subr.mxu0 0.0
        %407 = vmatpush1.msra.mxu0 0.0
        %408 = vmatprep.subr.mxu0 0.0
        %409 = vmatpush1.msra.mxu0 0.0
        %410 = vmatprep.subr.mxu0 0.0
        %411 = vmatpush1.msra.mxu0 0.0
        %412 = vmatprep.subr.mxu0 0.0
        %413 = vmatpush1.msra.mxu0 0.0
        %414 = vmatprep.subr.mxu0 0.0
        %415 = vmatpush1.msra.mxu0 0.0
        %416 = vmatprep.subr.mxu0 0.0
        %417 = vmatpush1.msra.mxu0 0.0
        %418 = vmatprep.subr.mxu0 0.0
        %419 = vmatpush1.msra.mxu0 0.0
        %420 = vmatprep.subr.mxu0 0.0
        %421 = vmatpush1.msra.mxu0 0.0
        %422 = vmatprep.subr.mxu0 0.0
        %423 = vmatpush1.msra.mxu0 0.0
        %424 = vmatprep.subr.mxu0 0.0
        %425 = vmatpush1.msra.mxu0 0.0
        %426 = vmatprep.subr.mxu0 0.0
        %427 = vmatpush1.msra.mxu0 0.0
        %428 = vmatprep.subr.mxu0 0.0
        %429 = vmatpush1.msra.mxu0 0.0
        %430 = vmatprep.subr.mxu0 0.0
        %431 = vmatpush1.msra.mxu0 0.0
        %432 = vmatprep.subr.mxu0 0.0
        %433 = vmatpush1.msra.mxu0 0.0
        %434 = vmatprep.subr.mxu0 0.0
        %435 = vmatpush1.msra.mxu0 0.0
        %436 = vmatprep.subr.mxu0 0.0
        %437 = vmatpush1.msra.mxu0 0.0
        %438 = vmatprep.subr.mxu0 0.0
        %439 = vmatpush1.msra.mxu0 0.0
        %440 = vmatprep.subr.mxu0 0.0
        %441 = vmatpush1.msra.mxu0 0.0
        %442 = vmatprep.subr.mxu0 0.0
        %443 = vmatpush1.msra.mxu0 0.0
        %444 = vmatprep.subr.mxu0 0.0
        %445 = vmatpush1.msra.mxu0 0.0
        %446 = vmatprep.subr.mxu0 0.0
        %447 = vmatpush1.msra.mxu0 0.0
        %448 = vmatprep.subr.mxu0 0.0
        %449 = vmatpush1.msra.mxu0 0.0
        %450 = vmatprep.subr.mxu0 0.0
        %451 = vmatpush1.msra.mxu0 0.0
        %452 = vmatprep.subr.mxu0 0.0
        %453 = vmatpush1.msra.mxu0 0.0
        %454 = vmatprep.subr.mxu0 0.0
        %455 = vmatpush1.msra.mxu0 0.0
        %456 = vmatprep.subr.mxu0 0.0
        %457 = vmatpush1.msra.mxu0 0.0
        %458 = vmatprep.mubr.f32.mxu0 0.0
        %459 = vmatmul.mubr.f32.gmra.mrb[0].mxu0 %v392
        %v460 = vpop.f32.mrb[0].mxu0
        %v461 = vadd.f32 0.0, %v460
        %v462 = vpop.f32.mrb[0].mxu0
        %463 = vdwg.mxu0
        %465 = vrot.lane.b32.xlu0 %v461, 8
        %v466 = vpop.permute.xlu0 %465
        %vm468 = vcmask 130112
        %469 = vst.msk [vmem:[%s131] sm:$0xff] %vm468, %v466
        %470 = vrot.lane.b32.xlu0 %v132, 112
        %v471 = vpop.permute.xlu0 %470
        %472 = vrot.lane.b32.xlu0 %v132, 80
        %v473 = vpop.permute.xlu0 %472
        %v474 = vsel %vm136, %v471, 0
        %v476 = vsel %vm136, %v473, 0
        %478 = vmatprep.subr.mxu0 0.0
        %479 = vmatpush1.xpose.msra.mxu0 %v476
        %480 = vmatprep.subr.mxu0 0.0
        %481 = vmatpush1.xpose.msra.mxu0 0.0
        %482 = vmatprep.subr.mxu0 0.0
        %483 = vmatpush1.xpose.msra.mxu0 0.0
        %484 = vmatprep.subr.mxu0 0.0
        %485 = vmatpush1.xpose.msra.mxu0 0.0
        %486 = vmatprep.subr.mxu0 0.0
        %487 = vmatpush1.xpose.msra.mxu0 0.0
        %488 = vmatprep.subr.mxu0 0.0
        %489 = vmatpush1.xpose.msra.mxu0 0.0
        %490 = vmatprep.subr.mxu0 0.0
        %491 = vmatpush1.xpose.msra.mxu0 0.0
        %492 = vmatprep.subr.mxu0 0.0
        %493 = vmatpush1.xpose.msra.mxu0 0.0
        %494 = vmatprep.subr.mxu0 0.0
        %495 = vmatpush1.xpose.msra.mxu0 0.0
        %496 = vmatprep.subr.mxu0 0.0
        %497 = vmatpush1.xpose.msra.mxu0 0.0
        %498 = vmatprep.subr.mxu0 0.0
        %499 = vmatpush1.xpose.msra.mxu0 0.0
        %500 = vmatprep.subr.mxu0 0.0
        %501 = vmatpush1.xpose.msra.mxu0 0.0
        %502 = vmatprep.subr.mxu0 0.0
        %503 = vmatpush1.xpose.msra.mxu0 0.0
        %504 = vmatprep.subr.mxu0 0.0
        %505 = vmatpush1.xpose.msra.mxu0 0.0
        %506 = vmatprep.subr.mxu0 0.0
        %507 = vmatpush1.xpose.msra.mxu0 0.0
        %508 = vmatprep.subr.mxu0 0.0
        %509 = vmatpush1.xpose.msra.mxu0 0.0
        %510 = vmatprep.subr.mxu0 0.0
        %511 = vmatpush1.xpose.msra.mxu0 0.0
        %512 = vmatprep.subr.mxu0 0.0
        %513 = vmatpush1.xpose.msra.mxu0 0.0
        %514 = vmatprep.subr.mxu0 0.0
        %515 = vmatpush1.xpose.msra.mxu0 0.0
        %516 = vmatprep.subr.mxu0 0.0
        %517 = vmatpush1.xpose.msra.mxu0 0.0
        %518 = vmatprep.subr.mxu0 0.0
        %519 = vmatpush1.xpose.msra.mxu0 0.0
        %520 = vmatprep.subr.mxu0 0.0
        %521 = vmatpush1.xpose.msra.mxu0 0.0
        %522 = vmatprep.subr.mxu0 0.0
        %523 = vmatpush1.xpose.msra.mxu0 0.0
        %524 = vmatprep.subr.mxu0 0.0
        %525 = vmatpush1.xpose.msra.mxu0 0.0
        %526 = vmatprep.subr.mxu0 0.0
        %527 = vmatpush1.xpose.msra.mxu0 0.0
        %528 = vmatprep.subr.mxu0 0.0
        %529 = vmatpush1.xpose.msra.mxu0 0.0
        %530 = vmatprep.subr.mxu0 0.0
        %531 = vmatpush1.xpose.msra.mxu0 0.0
        %532 = vmatprep.subr.mxu0 0.0
        %533 = vmatpush1.xpose.msra.mxu0 0.0
        %534 = vmatprep.subr.mxu0 0.0
        %535 = vmatpush1.xpose.msra.mxu0 0.0
        %536 = vmatprep.subr.mxu0 0.0
        %537 = vmatpush1.xpose.msra.mxu0 0.0
        %538 = vmatprep.subr.mxu0 0.0
        %539 = vmatpush1.xpose.msra.mxu0 0.0
        %540 = vmatprep.subr.mxu0 0.0
        %541 = vmatpush1.xpose.msra.mxu0 0.0
        %542 = vmatprep.mubr.f32.mxu0 0.0
        %543 = vmatmul.mubr.f32.gmra.mrb[0].mxu0 %v474
        %v544 = vpop.f32.mrb[0].mxu0
        %v545 = vadd.f32 0.0, %v544
        %v546 = vpop.f32.mrb[0].mxu0
        %547 = vdwg.mxu0
        %v548 = vsel %vm136, %v545, -inf
        %549 = vmax.xlane.f32.xlu0 %v548
        %v550 = vpop.xlane.xlu0 %549
        %v551 = vsub.f32 %v545, %v550
        %v552 = vmul.f32 %v551, 1.442695
        %v553 = vpow.pop %v552
        %v554 = vsel %vm136, %v553, 0.0
        %555 = vadd.xlane.f32.xlu0 %v554
        %v556 = vpop.xlane.xlu0 %555
        %v557 = vrcp.pop %v556
        %v558 = vmul.f32 %v553, %v557
        %559 = vrot.lane.b32.xlu0 %v132, 48
        %v560 = vpop.permute.xlu0 %559
        %v563 = vsel %vm136, %v558, 0
        %565 = vmatprep.subr.mxu0 0.0
        %566 = vmatpush1.msra.mxu0 %v560
        %567 = vmatprep.subr.mxu0 0.0
        %568 = vmatpush1.msra.mxu0 0.0
        %569 = vmatprep.subr.mxu0 0.0
        %570 = vmatpush1.msra.mxu0 0.0
        %571 = vmatprep.subr.mxu0 0.0
        %572 = vmatpush1.msra.mxu0 0.0
        %573 = vmatprep.subr.mxu0 0.0
        %574 = vmatpush1.msra.mxu0 0.0
        %575 = vmatprep.subr.mxu0 0.0
        %576 = vmatpush1.msra.mxu0 0.0
        %577 = vmatprep.subr.mxu0 0.0
        %578 = vmatpush1.msra.mxu0 0.0
        %579 = vmatprep.subr.mxu0 0.0
        %580 = vmatpush1.msra.mxu0 0.0
        %581 = vmatprep.subr.mxu0 0.0
        %582 = vmatpush1.msra.mxu0 0.0
        %583 = vmatprep.subr.mxu0 0.0
        %584 = vmatpush1.msra.mxu0 0.0
        %585 = vmatprep.subr.mxu0 0.0
        %586 = vmatpush1.msra.mxu0 0.0
        %587 = vmatprep.subr.mxu0 0.0
        %588 = vmatpush1.msra.mxu0 0.0
        %589 = vmatprep.subr.mxu0 0.0
        %590 = vmatpush1.msra.mxu0 0.0
        %591 = vmatprep.subr.mxu0 0.0
        %592 = vmatpush1.msra.mxu0 0.0
        %593 = vmatprep.subr.mxu0 0.0
        %594 = vmatpush1.msra.mxu0 0.0
        %595 = vmatprep.subr.mxu0 0.0
        %596 = vmatpush1.msra.mxu0 0.0
        %597 = vmatprep.subr.mxu0 0.0
        %598 = vmatpush1.msra.mxu0 0.0
        %599 = vmatprep.subr.mxu0 0.0
        %600 = vmatpush1.msra.mxu0 0.0
        %601 = vmatprep.subr.mxu0 0.0
        %602 = vmatpush1.msra.mxu0 0.0
        %603 = vmatprep.subr.mxu0 0.0
        %604 = vmatpush1.msra.mxu0 0.0
        %605 = vmatprep.subr.mxu0 0.0
        %606 = vmatpush1.msra.mxu0 0.0
        %607 = vmatprep.subr.mxu0 0.0
        %608 = vmatpush1.msra.mxu0 0.0
        %609 = vmatprep.subr.mxu0 0.0
        %610 = vmatpush1.msra.mxu0 0.0
        %611 = vmatprep.subr.mxu0 0.0
        %612 = vmatpush1.msra.mxu0 0.0
        %613 = vmatprep.subr.mxu0 0.0
        %614 = vmatpush1.msra.mxu0 0.0
        %615 = vmatprep.subr.mxu0 0.0
        %616 = vmatpush1.msra.mxu0 0.0
        %617 = vmatprep.subr.mxu0 0.0
        %618 = vmatpush1.msra.mxu0 0.0
        %619 = vmatprep.subr.mxu0 0.0
        %620 = vmatpush1.msra.mxu0 0.0
        %621 = vmatprep.subr.mxu0 0.0
        %622 = vmatpush1.msra.mxu0 0.0
        %623 = vmatprep.subr.mxu0 0.0
        %624 = vmatpush1.msra.mxu0 0.0
        %625 = vmatprep.subr.mxu0 0.0
        %626 = vmatpush1.msra.mxu0 0.0
        %627 = vmatprep.subr.mxu0 0.0
        %628 = vmatpush1.msra.mxu0 0.0
        %629 = vmatprep.mubr.f32.mxu0 0.0
        %630 = vmatmul.mubr.f32.gmra.mrb[0].mxu0 %v563
        %v631 = vpop.f32.mrb[0].mxu0
        %v632 = vadd.f32 0.0, %v631
        %v633 = vpop.f32.mrb[0].mxu0
        %634 = vdwg.mxu0
        %636 = vrot.lane.b32.xlu0 %v632, 16
        %v637 = vpop.permute.xlu0 %636
        %vm639 = vcmask 195712
        %640 = vst.msk [vmem:[%s131] sm:$0xff] %vm639, %v637
        %641 = vrot.lane.b32.xlu0 %v132, 104
        %v642 = vpop.permute.xlu0 %641
        %643 = vrot.lane.b32.xlu0 %v132, 72
        %v644 = vpop.permute.xlu0 %643
        %v645 = vsel %vm136, %v642, 0
        %v647 = vsel %vm136, %v644, 0
        %649 = vmatprep.subr.mxu0 0.0
        %650 = vmatpush1.xpose.msra.mxu0 %v647
        %651 = vmatprep.subr.mxu0 0.0
        %652 = vmatpush1.xpose.msra.mxu0 0.0
        %653 = vmatprep.subr.mxu0 0.0
        %654 = vmatpush1.xpose.msra.mxu0 0.0
        %655 = vmatprep.subr.mxu0 0.0
        %656 = vmatpush1.xpose.msra.mxu0 0.0
        %657 = vmatprep.subr.mxu0 0.0
        %658 = vmatpush1.xpose.msra.mxu0 0.0
        %659 = vmatprep.subr.mxu0 0.0
        %660 = vmatpush1.xpose.msra.mxu0 0.0
        %661 = vmatprep.subr.mxu0 0.0
        %662 = vmatpush1.xpose.msra.mxu0 0.0
        %663 = vmatprep.subr.mxu0 0.0
        %664 = vmatpush1.xpose.msra.mxu0 0.0
        %665 = vmatprep.subr.mxu0 0.0
        %666 = vmatpush1.xpose.msra.mxu0 0.0
        %667 = vmatprep.subr.mxu0 0.0
        %668 = vmatpush1.xpose.msra.mxu0 0.0
        %669 = vmatprep.subr.mxu0 0.0
        %670 = vmatpush1.xpose.msra.mxu0 0.0
        %671 = vmatprep.subr.mxu0 0.0
        %672 = vmatpush1.xpose.msra.mxu0 0.0
        %673 = vmatprep.subr.mxu0 0.0
        %674 = vmatpush1.xpose.msra.mxu0 0.0
        %675 = vmatprep.subr.mxu0 0.0
        %676 = vmatpush1.xpose.msra.mxu0 0.0
        %677 = vmatprep.subr.mxu0 0.0
        %678 = vmatpush1.xpose.msra.mxu0 0.0
        %679 = vmatprep.subr.mxu0 0.0
        %680 = vmatpush1.xpose.msra.mxu0 0.0
        %681 = vmatprep.subr.mxu0 0.0
        %682 = vmatpush1.xpose.msra.mxu0 0.0
        %683 = vmatprep.subr.mxu0 0.0
        %684 = vmatpush1.xpose.msra.mxu0 0.0
        %685 = vmatprep.subr.mxu0 0.0
        %686 = vmatpush1.xpose.msra.mxu0 0.0
        %687 = vmatprep.subr.mxu0 0.0
        %688 = vmatpush1.xpose.msra.mxu0 0.0
        %689 = vmatprep.subr.mxu0 0.0
        %690 = vmatpush1.xpose.msra.mxu0 0.0
        %691 = vmatprep.subr.mxu0 0.0
        %692 = vmatpush1.xpose.msra.mxu0 0.0
        %693 = vmatprep.subr.mxu0 0.0
        %694 = vmatpush1.xpose.msra.mxu0 0.0
        %695 = vmatprep.subr.mxu0 0.0
        %696 = vmatpush1.xpose.msra.mxu0 0.0
        %697 = vmatprep.subr.mxu0 0.0
        %698 = vmatpush1.xpose.msra.mxu0 0.0
        %699 = vmatprep.subr.mxu0 0.0
        %700 = vmatpush1.xpose.msra.mxu0 0.0
        %701 = vmatprep.subr.mxu0 0.0
        %702 = vmatpush1.xpose.msra.mxu0 0.0
        %703 = vmatprep.subr.mxu0 0.0
        %704 = vmatpush1.xpose.msra.mxu0 0.0
        %705 = vmatprep.subr.mxu0 0.0
        %706 = vmatpush1.xpose.msra.mxu0 0.0
        %707 = vmatprep.subr.mxu0 0.0
        %708 = vmatpush1.xpose.msra.mxu0 0.0
        %709 = vmatprep.subr.mxu0 0.0
        %710 = vmatpush1.xpose.msra.mxu0 0.0
        %711 = vmatprep.subr.mxu0 0.0
        %712 = vmatpush1.xpose.msra.mxu0 0.0
        %713 = vmatprep.mubr.f32.mxu0 0.0
        %714 = vmatmul.mubr.f32.gmra.mrb[0].mxu0 %v645
        %v715 = vpop.f32.mrb[0].mxu0
        %v716 = vadd.f32 0.0, %v715
        %v717 = vpop.f32.mrb[0].mxu0
        %718 = vdwg.mxu0
        %v719 = vsel %vm136, %v716, -inf
        %720 = vmax.xlane.f32.xlu0 %v719
        %v721 = vpop.xlane.xlu0 %720
        %v722 = vsub.f32 %v716, %v721
        %v723 = vmul.f32 %v722, 1.442695
        %v724 = vpow.pop %v723
        %v725 = vsel %vm136, %v724, 0.0
        %726 = vadd.xlane.f32.xlu0 %v725
        %v727 = vpop.xlane.xlu0 %726
        %v728 = vrcp.pop %v727
        %v729 = vmul.f32 %v724, %v728
        %730 = vrot.lane.b32.xlu0 %v132, 40
        %v731 = vpop.permute.xlu0 %730
        %v734 = vsel %vm136, %v729, 0
        %736 = vmatprep.subr.mxu0 0.0
        %737 = vmatpush1.msra.mxu0 %v731
        %738 = vmatprep.subr.mxu0 0.0
        %739 = vmatpush1.msra.mxu0 0.0
        %740 = vmatprep.subr.mxu0 0.0
        %741 = vmatpush1.msra.mxu0 0.0
        %742 = vmatprep.subr.mxu0 0.0
        %743 = vmatpush1.msra.mxu0 0.0
        %744 = vmatprep.subr.mxu0 0.0
        %745 = vmatpush1.msra.mxu0 0.0
        %746 = vmatprep.subr.mxu0 0.0
        %747 = vmatpush1.msra.mxu0 0.0
        %748 = vmatprep.subr.mxu0 0.0
        %749 = vmatpush1.msra.mxu0 0.0
        %750 = vmatprep.subr.mxu0 0.0
        %751 = vmatpush1.msra.mxu0 0.0
        %752 = vmatprep.subr.mxu0 0.0
        %753 = vmatpush1.msra.mxu0 0.0
        %754 = vmatprep.subr.mxu0 0.0
        %755 = vmatpush1.msra.mxu0 0.0
        %756 = vmatprep.subr.mxu0 0.0
        %757 = vmatpush1.msra.mxu0 0.0
        %758 = vmatprep.subr.mxu0 0.0
        %759 = vmatpush1.msra.mxu0 0.0
        %760 = vmatprep.subr.mxu0 0.0
        %761 = vmatpush1.msra.mxu0 0.0
        %762 = vmatprep.subr.mxu0 0.0
        %763 = vmatpush1.msra.mxu0 0.0
        %764 = vmatprep.subr.mxu0 0.0
        %765 = vmatpush1.msra.mxu0 0.0
        %766 = vmatprep.subr.mxu0 0.0
        %767 = vmatpush1.msra.mxu0 0.0
        %768 = vmatprep.subr.mxu0 0.0
        %769 = vmatpush1.msra.mxu0 0.0
        %770 = vmatprep.subr.mxu0 0.0
        %771 = vmatpush1.msra.mxu0 0.0
        %772 = vmatprep.subr.mxu0 0.0
        %773 = vmatpush1.msra.mxu0 0.0
        %774 = vmatprep.subr.mxu0 0.0
        %775 = vmatpush1.msra.mxu0 0.0
        %776 = vmatprep.subr.mxu0 0.0
        %777 = vmatpush1.msra.mxu0 0.0
        %778 = vmatprep.subr.mxu0 0.0
        %779 = vmatpush1.msra.mxu0 0.0
        %780 = vmatprep.subr.mxu0 0.0
        %781 = vmatpush1.msra.mxu0 0.0
        %782 = vmatprep.subr.mxu0 0.0
        %783 = vmatpush1.msra.mxu0 0.0
        %784 = vmatprep.subr.mxu0 0.0
        %785 = vmatpush1.msra.mxu0 0.0
        %786 = vmatprep.subr.mxu0 0.0
        %787 = vmatpush1.msra.mxu0 0.0
        %788 = vmatprep.subr.mxu0 0.0
        %789 = vmatpush1.msra.mxu0 0.0
        %790 = vmatprep.subr.mxu0 0.0
        %791 = vmatpush1.msra.mxu0 0.0
        %792 = vmatprep.subr.mxu0 0.0
        %793 = vmatpush1.msra.mxu0 0.0
        %794 = vmatprep.subr.mxu0 0.0
        %795 = vmatpush1.msra.mxu0 0.0
        %796 = vmatprep.subr.mxu0 0.0
        %797 = vmatpush1.msra.mxu0 0.0
        %798 = vmatprep.subr.mxu0 0.0
        %799 = vmatpush1.msra.mxu0 0.0
        %800 = vmatprep.mubr.f32.mxu0 0.0
        %801 = vmatmul.mubr.f32.gmra.mrb[0].mxu0 %v734
        %v802 = vpop.f32.mrb[0].mxu0
        %v803 = vadd.f32 0.0, %v802
        %v804 = vpop.f32.mrb[0].mxu0
        %805 = vdwg.mxu0
        %807 = vrot.lane.b32.xlu0 %v803, 24
        %v808 = vpop.permute.xlu0 %807
        %vm810 = vcmask 261312
        %811 = vst.msk [vmem:[%s131] sm:$0xff] %vm810, %v808
        %s812 = sand.u32 %s52, 1
        %s813 = scalar_lea.sflag [#allocation4], %s812
        %s814 = sand.u32 %s52, 1
        %s815 = smul.addr %s814, 8
        %s816 = scalar_lea.vmem [#allocation5], %s815
        // Predicated region
        $region29: #{decoder_layer.9} parent=23 // pred_check
          %p817 = pneg %p62
        $region30: #{decoder_layer.9} parent=23 // pred_check_branch
          %819 = sbr.rel (%p817) target = $region32
        $region31: #{decoder_layer.9} parent=23 // pred_region
          %s821 = ssub.s32 128, 128
          %822 = vsyncadd %s813, %s821
          %s823 = smul.addr %s18, 128
          %s824 = scalar_lea.hbm %s1, %s823
          %s826 = sshll.u32 %s816, 4
          %s827 = int_to_ptr.vmem [resolvable:$true] %s826
          %829 = dma.vmem_to_hbm [thread:$0]  %s827, 128, %s824, %s813
        $region32: #{decoder_layer.9} parent=23 // pred_fallthru
          _
      $region24: #{decoder_layer.9} parent=5 // pred_fallthru
        _
      %p830 = scmp.le.s32.totalorder 2, %s13
      // Predicated region
      $region33: #{decoder_layer.9} parent=5 // pred_check
        %p831 = pneg %p830
      $region34: #{decoder_layer.9} parent=5 // pred_check_branch
        %833 = sbr.rel (%p831) target = $region36
      $region35: #{decoder_layer.9} parent=5 // pred_region
        %s834 = ssub.s32 %s13, 2
        // Predicated region
        $region37: #{decoder_layer.9} parent=35 // pred_check
          %p835 = pneg %p68
        $region38: #{decoder_layer.9} parent=35 // pred_check_branch
          %837 = sbr.rel (%p835) target = $region40
        $region39: #{decoder_layer.9} parent=35 // pred_region
          %s838 = sand.u32 %s53, 1
          %s839 = scalar_lea.sflag [#allocation4], %s838
          %s840 = sand.u32 %s53, 1
          %s841 = smul.addr %s840, 8
          %s842 = scalar_lea.vmem [#allocation5], %s841
          %843 = dma.done %s839, 128
        $region40: #{decoder_layer.9} parent=35 // pred_fallthru
          _
      $region36: #{decoder_layer.9} parent=5 // pred_fallthru
        _
    $region6: #{decoder_layer.9} parent=1 // loop_footer
      %s17 = sadd.s32 1, %s13
    $region7: #{decoder_layer.9} parent=1 // loop_footer_branch
      %12 = sbr.rel target = $region3
    $region8: #{decoder_layer.9} parent=1 // loop_exit
      _
    %844 = vsyncpa [#allocation3], 1
    %s845 = scalar_lea.sflag [#allocation3], 1
    %846 = vsyncpa %s845, 1
    %847 = vsyncpa [#allocation4], 1
    %s848 = scalar_lea.sflag [#allocation4], 1
    %849 = vsyncpa %s848, 1

// kernel: decoder_layer.13
$region0: #{decoder_layer.13}
  #allocation0 [shape = 'u32[]', space=smem, size = 0x4, offset = 0x4, fixed_abs, tag = 'smem constant byte address 0x4 - core index']
  #allocation1 [shape = 'u32[144,128]{1,0:T(1,128)}', space=vmem, size = 0x12000, scoped, tag = 'internal scratch']
  %s0 = inlined_call_operand.hbm [shape: f32[2,8,32], index: 0, kind: input, shape index: {}]
  %s1 = inlined_call_operand.hbm [shape: f32[2,8,64], index: 1, kind: input, shape index: {}]
  %s2 = inlined_call_operand.hbm [shape: f32[2,8,32], index: 2, kind: output, shape index: {}]
  %s3 = sld [smem:[#allocation0]]
  $region49: #{decoder_layer.13} parent=0
    _
  %s5 = ssub.s32 1, %s3
  %s6 = scalar_select 0, %s5, %s3
  $region1: #{decoder_layer.13} parent=0
    #allocation2 [shape = 'u8[8192]{0}', space=vmem, size = 0x2000, scoped, tag = 'input window, operand 0']
    #allocation3 [shape = 's32[2]{0}', space=sflag, size = 0x8, scoped, tag = 'scoped memory for decoder_layer.13']
    #allocation4 [shape = 's32[2]{0}', space=sflag, size = 0x8, scoped, tag = 'scoped memory for decoder_layer.13']
    #allocation5 [shape = 'u8[8192]{0}', space=vmem, size = 0x2000, scoped, tag = 'input window, operand 1']
    #allocation6 [shape = 's32[2]{0}', space=sflag, size = 0x8, scoped, tag = 'scoped memory for decoder_layer.13']
    #allocation7 [shape = 'u8[8192]{0}', space=vmem, size = 0x2000, scoped, tag = 'output window, operand 0']
    %7 = vsyncpa [#allocation3], 0
    %s8 = scalar_lea.sflag [#allocation3], 1
    %9 = vsyncpa %s8, 0
    %10 = vsyncpa [#allocation6], 0
    %s11 = scalar_lea.sflag [#allocation6], 1
    %12 = vsyncpa %s11, 0
    %13 = vsyncpa [#allocation4], 0
    %s14 = scalar_lea.sflag [#allocation4], 1
    %15 = vsyncpa %s14, 0
    loop: start=0, step=1, limit=4
    $region2: #{decoder_layer.13} parent=1 // loop_pre_header
      _
    $region3: #{decoder_layer.13} parent=1 // loop_header
      %s17 = sphi 0, %s21
      %p18 = scmp.ge.s32.totalorder %s17, 4
      %s27 = sphi 0, %s29
      %s30 = sphi 0, %s27
      %s31 = sphi 0, %s30
      %s47 = sphi 0, %s31
      %s53 = sphi 0, %s55
      %s56 = sphi 0, %s53
      %s57 = sphi 0, %s56
      %s73 = sphi 0, %s57
      %s79 = sphi 0, %s81
      %s82 = sphi 0, %s79
      %s83 = sphi 0, %s82
      %s99 = sphi 0, %s83
    $region4: #{decoder_layer.13} parent=1 // loop_header_branch
      %20 = sbr.rel (%p18) target = $region8
    $region5: #{decoder_layer.13} parent=1 // loop_body
      %s22 = ssub.s32 %s17, 1
      %s23 = ssub.s32 %s17, 2
      %s24 = sadd.s32 %s17, 1
      %s25 = ssub.s32 %s17, %s24
      %p26 = scmp.eq.s32.totalorder %s25, 0
      %s28 = sadd.s32 %s27, 1
      %s29 = scalar_select %p26, %s27, %s28
      %p32 = pneg %p26
      %p33 = scmp.eq.s32.totalorder %s17, 1
      %p34 = por %p32, %p33
      %p35 = scmp.ne.s32.totalorder %s27, %s30
      %p36 = scmp.eq.s32.totalorder %s17, 0
      %p37 = por %p35, %p36
      %p38 = scmp.ne.s32.totalorder %s27, %s30
      %p39 = scmp.eq.s32.totalorder %s22, 1
      %p40 = por %p38, %p39
      %p41 = scmp.ne.s32.totalorder %s30, %s31
      %p42 = scmp.eq.s32.totalorder %s22, 0
      %p43 = por %p41, %p42
      %p44 = scmp.ne.s32.totalorder %s30, %s31
      %p45 = scmp.eq.s32.totalorder %s23, 1
      %p46 = por %p44, %p45
      %p48 = scmp.ne.s32.totalorder %s31, %s47
      %p49 = scmp.eq.s32.totalorder %s23, 0
      %p50 = por %p48, %p49
      %s51 = ssub.s32 %s17, %s24
      %p52 = scmp.eq.s32.totalorder %s51, 0
      %s54 = sadd.s32 %s53, 1
      %s55 = scalar_select %p52, %s53, %s54
      %p58 = pneg %p52
      %p59 = scmp.eq.s32.totalorder %s17, 1
      %p60 = por %p58, %p59
      %p61 = scmp.ne.s32.totalorder %s53, %s56
      %p62 = scmp.eq.s32.totalorder %s17, 0
      %p63 = por %p61, %p62
      %p64 = scmp.ne.s32.totalorder %s53, %s56
      %p65 = scmp.eq.s32.totalorder %s22, 1
      %p66 = por %p64, %p65
      %p67 = scmp.ne.s32.totalorder %s56, %s57
      %p68 = scmp.eq.s32.totalorder %s22, 0
      %p69 = por %p67, %p68
      %p70 = scmp.ne.s32.totalorder %s56, %s57
      %p71 = scmp.eq.s32.totalorder %s23, 1
      %p72 = por %p70, %p71
      %p74 = scmp.ne.s32.totalorder %s57, %s73
      %p75 = scmp.eq.s32.totalorder %s23, 0
      %p76 = por %p74, %p75
      %s77 = ssub.s32 %s17, %s24
      %p78 = scmp.eq.s32.totalorder %s77, 0
      %s80 = sadd.s32 %s79, 1
      %s81 = scalar_select %p78, %s79, %s80
      %p84 = pneg %p78
      %p85 = scmp.eq.s32.totalorder %s17, 1
      %p86 = por %p84, %p85
      %p87 = scmp.ne.s32.totalorder %s79, %s82
      %p88 = scmp.eq.s32.totalorder %s17, 0
      %p89 = por %p87, %p88
      %p90 = scmp.ne.s32.totalorder %s79, %s82
      %p91 = scmp.eq.s32.totalorder %s22, 1
      %p92 = por %p90, %p91
      %p93 = scmp.ne.s32.totalorder %s82, %s83
      %p94 = scmp.eq.s32.totalorder %s22, 0
      %p95 = por %p93, %p94
      %p96 = scmp.ne.s32.totalorder %s82, %s83
      %p97 = scmp.eq.s32.totalorder %s23, 1
      %p98 = por %p96, %p97
      %p100 = scmp.ne.s32.totalorder %s83, %s99
      %p101 = scmp.eq.s32.totalorder %s23, 0
      %p102 = por %p100, %p101
      %p103 = scmp.le.s32.totalorder 1, %s17
      %p104 = scmp.lt.s32.totalorder %s17, 3
      %p105 = pnand %p103, %p104
      %p106 = pneg %p105
      // Predicated region
      $region9: #{decoder_layer.13} parent=5 // pred_check
        _
      $region10: #{decoder_layer.13} parent=5 // pred_check_branch
        %108 = sbr.rel (%p105) target = $region12
      $region11: #{decoder_layer.13} parent=5 // pred_region
        %s109 = ssub.s32 %s17, 1
      $region12: #{decoder_layer.13} parent=5 // pred_fallthru
        _
      %p110 = scmp.lt.s32.totalorder %s17, 2
      // Predicated region
      $region13: #{decoder_layer.13} parent=5 // pred_check
        %p111 = pneg %p110
      $region14: #{decoder_layer.13} parent=5 // pred_check_branch
        %113 = sbr.rel (%p111) target = $region16
      $region15: #{decoder_layer.13} parent=5 // pred_region
        // Predicated region
        $region17: #{decoder_layer.13} parent=15 // pred_check
          %p114 = pneg %p37
        $region18: #{decoder_layer.13} parent=15 // pred_check_branch
          %116 = sbr.rel (%p114) target = $region20
        $region19: #{decoder_layer.13} parent=15 // pred_region
          %s117 = sand.u32 %s27, 1
          %s118 = scalar_lea.sflag [#allocation3], %s117
          %s119 = sand.u32 %s27, 1
          %s120 = smul.addr %s119, 8
          %s121 = scalar_lea.vmem [#allocation2], %s120
          %s123 = ssub.s32 128, 128
          %124 = vsyncadd %s118, %s123
          %s125 = smul.addr %s17, 128
          %s126 = scalar_lea.hbm %s0, %s125
          %s128 = sshll.u32 %s121, 4
          %s129 = int_to_ptr.vmem [resolvable:$true] %s128
          %131 = dma.hbm_to_vmem [thread:$0]  %s126, 128, %s129, %s118
        $region20: #{decoder_layer.13} parent=15 // pred_fallthru
          _
        // Predicated region
        $region21: #{decoder_layer.13} parent=15 // pred_check
          %p132 = pneg %p63
        $region22: #{decoder_layer.13} parent=15 // pred_check_branch
          %134 = sbr.rel (%p132) target = $region24
        $region23: #{decoder_layer.13} parent=15 // pred_region
          %s135 = sand.u32 %s53, 1
          %s136 = scalar_lea.sflag [#allocation6], %s135
          %s137 = sand.u32 %s53, 1
          %s138 = smul.addr %s137, 8
          %s139 = scalar_lea.vmem [#allocation5], %s138
          %s141 = ssub.s32 128, 128
          %142 = vsyncadd %s136, %s141
          %s143 = smul.addr %s17, 128
          %s144 = scalar_lea.hbm %s1, %s143
          %s146 = sshll.u32 %s139, 4
          %s147 = int_to_ptr.vmem [resolvable:$true] %s146
          %149 = dma.hbm_to_vmem [thread:$0]  %s144, 128, %s147, %s136
        $region24: #{decoder_layer.13} parent=15 // pred_fallthru
          _
      $region16: #{decoder_layer.13} parent=5 // pred_fallthru
        _
      %p150 = scmp.le.s32.totalorder 1, %s17
      %p151 = scmp.lt.s32.totalorder %s17, 3
      %p152 = pnand %p150, %p151
      %p153 = pneg %p152
      // Predicated region
      $region25: #{decoder_layer.13} parent=5 // pred_check
        _
      $region26: #{decoder_layer.13} parent=5 // pred_check_branch
        %155 = sbr.rel (%p152) target = $region28
      $region27: #{decoder_layer.13} parent=5 // pred_region
        %s156 = ssub.s32 %s17, 1
        %s157 = sand.u32 %s30, 1
        %s158 = scalar_lea.sflag [#allocation3], %s157
        %s159 = sand.u32 %s30, 1
        %s160 = smul.addr %s159, 8
        %s161 = scalar_lea.vmem [#allocation2], %s160
        // Predicated region
        $region29: #{decoder_layer.13} parent=27 // pred_check
          %p162 = pneg %p43
        $region30: #{decoder_layer.13} parent=27 // pred_check_branch
          %164 = sbr.rel (%p162) target = $region32
        $region31: #{decoder_layer.13} parent=27 // pred_region
          %165 = dma.done %s158, 128
        $region32: #{decoder_layer.13} parent=27 // pred_fallthru
          _
        %s166 = sand.u32 %s56, 1
        %s167 = scalar_lea.sflag [#allocation6], %s166
        %s168 = sand.u32 %s56, 1
        %s169 = smul.addr %s168, 8
        %s170 = scalar_lea.vmem [#allocation5], %s169
        // Predicated region
        $region33: #{decoder_layer.13} parent=27 // pred_check
          %p171 = pneg %p69
        $region34: #{decoder_layer.13} parent=27 // pred_check_branch
          %173 = sbr.rel (%p171) target = $region36
        $region35: #{decoder_layer.13} parent=27 // pred_region
          %174 = dma.done %s167, 128
        $region36: #{decoder_layer.13} parent=27 // pred_fallthru
          _
        %s175 = sand.u32 %s30, 1
        %s176 = scalar_lea.sflag [#allocation3], %s175
        %s177 = sand.u32 %s30, 1
        %s178 = smul.addr %s177, 8
        %s179 = scalar_lea.vmem [#allocation2], %s178
        %p180 = pneg %p43
        %p181 = pneg %p40
        %s182 = sand.u32 %s56, 1
        %s183 = scalar_lea.sflag [#allocation6], %s182
        %s184 = sand.u32 %s56, 1
        %s185 = smul.addr %s184, 8
        %s186 = scalar_lea.vmem [#allocation5], %s185
        %p187 = pneg %p69
        %p188 = pneg %p66
        %p189 = pneg %p95
        %p190 = pneg %p92
        %s191 = sand.u32 %s82, 1
        %s192 = scalar_lea.sflag [#allocation4], %s191
        %s193 = sand.u32 %s82, 1
        %s194 = smul.addr %s193, 8
        %s195 = scalar_lea.vmem [#allocation7], %s194
        %v196 = vld [vmem:[%s161] sm:$0xff]
        %v197 = vld [vmem:[%s170] sm:$0xff]
        %vm198 = vcmask 64512
        %v200 = vsel %vm198, %v196, 0
        %v203 = vsel %vm198, %v197, 0
        %205 = vmatprep.subr.mxu0 0.0
        %206 = vmatpush1.xpose.msra.mxu0 %v203
        %207 = vmatprep.subr.mxu0 0.0
        %208 = vmatpush1.xpose.msra.mxu0 0.0
        %209 = vmatprep.subr.mxu0 0.0
        %210 = vmatpush1.xpose.msra.mxu0 0.0
        %211 = vmatprep.subr.mxu0 0.0
        %212 = vmatpush1.xpose.msra.mxu0 0.0
        %213 = vmatprep.subr.mxu0 0.0
        %214 = vmatpush1.xpose.msra.mxu0 0.0
        %215 = vmatprep.subr.mxu0 0.0
        %216 = vmatpush1.xpose.msra.mxu0 0.0
        %217 = vmatprep.subr.mxu0 0.0
        %218 = vmatpush1.xpose.msra.mxu0 0.0
        %219 = vmatprep.subr.mxu0 0.0
        %220 = vmatpush1.xpose.msra.mxu0 0.0
        %221 = vmatprep.subr.mxu0 0.0
        %222 = vmatpush1.xpose.msra.mxu0 0.0
        %223 = vmatprep.subr.mxu0 0.0
        %224 = vmatpush1.xpose.msra.mxu0 0.0
        %225 = vmatprep.subr.mxu0 0.0
        %226 = vmatpush1.xpose.msra.mxu0 0.0
        %227 = vmatprep.subr.mxu0 0.0
        %228 = vmatpush1.xpose.msra.mxu0 0.0
        %229 = vmatprep.subr.mxu0 0.0
        %230 = vmatpush1.xpose.msra.mxu0 0.0
        %231 = vmatprep.subr.mxu0 0.0
        %232 = vmatpush1.xpose.msra.mxu0 0.0
        %233 = vmatprep.subr.mxu0 0.0
        %234 = vmatpush1.xpose.msra.mxu0 0.0
        %235 = vmatprep.subr.mxu0 0.0
        %236 = vmatpush1.xpose.msra.mxu0 0.0
        %237 = vmatprep.subr.mxu0 0.0
        %238 = vmatpush1.xpose.msra.mxu0 0.0
        %239 = vmatprep.subr.mxu0 0.0
        %240 = vmatpush1.xpose.msra.mxu0 0.0
        %241 = vmatprep.subr.mxu0 0.0
        %242 = vmatpush1.xpose.msra.mxu0 0.0
        %243 = vmatprep.subr.mxu0 0.0
        %244 = vmatpush1.xpose.msra.mxu0 0.0
        %245 = vmatprep.subr.mxu0 0.0
        %246 = vmatpush1.xpose.msra.mxu0 0.0
        %247 = vmatprep.subr.mxu0 0.0
        %248 = vmatpush1.xpose.msra.mxu0 0.0
        %249 = vmatprep.subr.mxu0 0.0
        %250 = vmatpush1.xpose.msra.mxu0 0.0
        %251 = vmatprep.subr.mxu0 0.0
        %252 = vmatpush1.xpose.msra.mxu0 0.0
        %253 = vmatprep.subr.mxu0 0.0
        %254 = vmatpush1.xpose.msra.mxu0 0.0
        %255 = vmatprep.subr.mxu0 0.0
        %256 = vmatpush1.xpose.msra.mxu0 0.0
        %257 = vmatprep.subr.mxu0 0.0
        %258 = vmatpush1.xpose.msra.mxu0 0.0
        %259 = vmatprep.subr.mxu0 0.0
        %260 = vmatpush1.xpose.msra.mxu0 0.0
        %261 = vmatprep.subr.mxu0 0.0
        %262 = vmatpush1.xpose.msra.mxu0 0.0
        %263 = vmatprep.subr.mxu0 0.0
        %264 = vmatpush1.xpose.msra.mxu0 0.0
        %265 = vmatprep.subr.mxu0 0.0
        %266 = vmatpush1.xpose.msra.mxu0 0.0
        %267 = vmatprep.subr.mxu0 0.0
        %268 = vmatpush1.xpose.msra.mxu0 0.0
        %269 = vmatprep.mubr.f32.mxu0 0.0
        %270 = vmatmul.mubr.f32.gmra.mrb[0].mxu0 %v200
        %v271 = vpop.f32.mrb[0].mxu0
        %v272 = vadd.f32 0.0, %v271
        %v273 = vpop.f32.mrb[0].mxu0
        %274 = vdwg.mxu0
        %v275 = vsel %vm198, %v272, -inf
        %276 = vmax.xlane.f32.xlu0 %v275
        %v277 = vpop.xlane.xlu0 %276
        %v278 = vsub.f32 %v272, %v277
        %v279 = vmul.f32 %v278, 1.442695
        %v280 = vpow.pop %v279
        %v281 = vsel %vm198, %v280, 0.0
        %282 = vadd.xlane.f32.xlu0 %v281
        %v283 = vpop.xlane.xlu0 %282
        %v284 = vrcp.pop %v283
        %v285 = vmul.f32 %v280, %v284
        %286 = vrot.lane.b32.xlu0 %v197, 96
        %v287 = vpop.permute.xlu0 %286
        %v290 = vsel %vm198, %v285, 0
        %292 = vmatprep.subr.mxu0 0.0
        %293 = vmatpush1.msra.mxu0 %v287
        %294 = vmatprep.subr.mxu0 0.0
        %295 = vmatpush1.msra.mxu0 0.0
        %296 = vmatprep.subr.mxu0 0.0
        %297 = vmatpush1.msra.mxu0 0.0
        %298 = vmatprep.subr.mxu0 0.0
        %299 = vmatpush1.msra.mxu0 0.0
        %300 = vmatprep.subr.mxu0 0.0
        %301 = vmatpush1.msra.mxu0 0.0
        %302 = vmatprep.subr.mxu0 0.0
        %303 = vmatpush1.msra.mxu0 0.0
        %304 = vmatprep.subr.mxu0 0.0
        %305 = vmatpush1.msra.mxu0 0.0
        %306 = vmatprep.subr.mxu0 0.0
        %307 = vmatpush1.msra.mxu0 0.0
        %308 = vmatprep.subr.mxu0 0.0
        %309 = vmatpush1.msra.mxu0 0.0
        %310 = vmatprep.subr.mxu0 0.0
        %311 = vmatpush1.msra.mxu0 0.0
        %312 = vmatprep.subr.mxu0 0.0
        %313 = vmatpush1.msra.mxu0 0.0
        %314 = vmatprep.subr.mxu0 0.0
        %315 = vmatpush1.msra.mxu0 0.0
        %316 = vmatprep.subr.mxu0 0.0
        %317 = vmatpush1.msra.mxu0 0.0
        %318 = vmatprep.subr.mxu0 0.0
        %319 = vmatpush1.msra.mxu0 0.0
        %320 = vmatprep.subr.mxu0 0.0
        %321 = vmatpush1.msra.mxu0 0.0
        %322 = vmatprep.subr.mxu0 0.0
        %323 = vmatpush1.msra.mxu0 0.0
        %324 = vmatprep.subr.mxu0 0.0
        %325 = vmatpush1.msra.mxu0 0.0
        %326 = vmatprep.subr.mxu0 0.0
        %327 = vmatpush1.msra.mxu0 0.0
        %328 = vmatprep.subr.mxu0 0.0
        %329 = vmatpush1.msra.mxu0 0.0
        %330 = vmatprep.subr.mxu0 0.0
        %331 = vmatpush1.msra.mxu0 0.0
        %332 = vmatprep.subr.mxu0 0.0
        %333 = vmatpush1.msra.mxu0 0.0
        %334 = vmatprep.subr.mxu0 0.0
        %335 = vmatpush1.msra.mxu0 0.0
        %336 = vmatprep.subr.mxu0 0.0
        %337 = vmatpush1.msra.mxu0 0.0
        %338 = vmatprep.subr.mxu0 0.0
        %339 = vmatpush1.msra.mxu0 0.0
        %340 = vmatprep.subr.mxu0 0.0
        %341 = vmatpush1.msra.mxu0 0.0
        %342 = vmatprep.subr.mxu0 0.0
        %343 = vmatpush1.msra.mxu0 0.0
        %344 = vmatprep.subr.mxu0 0.0
        %345 = vmatpush1.msra.mxu0 0.0
        %346 = vmatprep.subr.mxu0 0.0
        %347 = vmatpush1.msra.mxu0 0.0
        %348 = vmatprep.subr.mxu0 0.0
        %349 = vmatpush1.msra.mxu0 0.0
        %350 = vmatprep.subr.mxu0 0.0
        %351 = vmatpush1.msra.mxu0 0.0
        %352 = vmatprep.subr.mxu0 0.0
        %353 = vmatpush1.msra.mxu0 0.0
        %354 = vmatprep.subr.mxu0 0.0
        %355 = vmatpush1.msra.mxu0 0.0
        %356 = vmatprep.mubr.f32.mxu0 0.0
        %357 = vmatmul.mubr.f32.gmra.mrb[0].mxu0 %v290
        %v358 = vpop.f32.mrb[0].mxu0
        %v359 = vadd.f32 0.0, %v358
        %v360 = vpop.f32.mrb[0].mxu0
        %361 = vdwg.mxu0
        %362 = vst.msk [vmem:[%s195] sm:$0xff] %vm198, %v359
        %363 = vrot.lane.b32.xlu0 %v196, 120
        %v364 = vpop.permute.xlu0 %363
        %365 = vrot.lane.b32.xlu0 %v197, 120
        %v366 = vpop.permute.xlu0 %365
        %v367 = vsel %vm198, %v364, 0
        %v369 = vsel %vm198, %v366, 0
        %371 = vmatprep.subr.mxu0 0.0
        %372 = vmatpush1.xpose.msra.mxu0 %v369
        %373 = vmatprep.subr.mxu0 0.0
        %374 = vmatpush1.xpose.msra.mxu0 0.0
        %375 = vmatprep.subr.mxu0 0.0
        %376 = vmatpush1.xpose.msra.mxu0 0.0
        %377 = vmatprep.subr.mxu0 0.0
        %378 = vmatpush1.xpose.msra.mxu0 0.0
        %379 = vmatprep.subr.mxu0 0.0
        %380 = vmatpush1.xpose.msra.mxu0 0.0
        %381 = vmatprep.subr.mxu0 0.0
        %382 = vmatpush1.xpose.msra.mxu0 0.0
        %383 = vmatprep.subr.mxu0 0.0
        %384 = vmatpush1.xpose.msra.mxu0 0.0
        %385 = vmatprep.subr.mxu0 0.0
        %386 = vmatpush1.xpose.msra.mxu0 0.0
        %387 = vmatprep.subr.mxu0 0.0
        %388 = vmatpush1.xpose.msra.mxu0 0.0
        %389 = vmatprep.subr.mxu0 0.0
        %390 = vmatpush1.xpose.msra.mxu0 0.0
        %391 = vmatprep.subr.mxu0 0.0
        %392 = vmatpush1.xpose.msra.mxu0 0.0
        %393 = vmatprep.subr.mxu0 0.0
        %394 = vmatpush1.xpose.msra.mxu0 0.0
        %395 = vmatprep.subr.mxu0 0.0
        %396 = vmatpush1.xpose.msra.mxu0 0.0
        %397 = vmatprep.subr.mxu0 0.0
        %398 = vmatpush1.xpose.msra.mxu0 0.0
        %399 = vmatprep.subr.mxu0 0.0
        %400 = vmatpush1.xpose.msra.mxu0 0.0
        %401 = vmatprep.subr.mxu0 0.0
        %402 = vmatpush1.xpose.msra.mxu0 0.0
        %403 = vmatprep.subr.mxu0 0.0
        %404 = vmatpush1.xpose.msra.mxu0 0.0
        %405 = vmatprep.subr.mxu0 0.0
        %406 = vmatpush1.xpose.msra.mxu0 0.0
        %407 = vmatprep.subr.mxu0 0.0
        %408 = vmatpush1.xpose.msra.mxu0 0.0
        %409 = vmatprep.subr.mxu0 0.0
        %410 = vmatpush1.xpose.msra.mxu0 0.0
        %411 = vmatprep.subr.mxu0 0.0
        %412 = vmatpush1.xpose.msra.mxu0 0.0
        %413 = vmatprep.subr.mxu0 0.0
        %414 = vmatpush1.xpose.msra.mxu0 0.0
        %415 = vmatprep.subr.mxu0 0.0
        %416 = vmatpush1.xpose.msra.mxu0 0.0
        %417 = vmatprep.subr.mxu0 0.0
        %418 = vmatpush1.xpose.msra.mxu0 0.0
        %419 = vmatprep.subr.mxu0 0.0
        %420 = vmatpush1.xpose.msra.mxu0 0.0
        %421 = vmatprep.subr.mxu0 0.0
        %422 = vmatpush1.xpose.msra.mxu0 0.0
        %423 = vmatprep.subr.mxu0 0.0
        %424 = vmatpush1.xpose.msra.mxu0 0.0
        %425 = vmatprep.subr.mxu0 0.0
        %426 = vmatpush1.xpose.msra.mxu0 0.0
        %427 = vmatprep.subr.mxu0 0.0
        %428 = vmatpush1.xpose.msra.mxu0 0.0
        %429 = vmatprep.subr.mxu0 0.0
        %430 = vmatpush1.xpose.msra.mxu0 0.0
        %431 = vmatprep.subr.mxu0 0.0
        %432 = vmatpush1.xpose.msra.mxu0 0.0
        %433 = vmatprep.subr.mxu0 0.0
        %434 = vmatpush1.xpose.msra.mxu0 0.0
        %435 = vmatprep.mubr.f32.mxu0 0.0
        %436 = vmatmul.mubr.f32.gmra.mrb[0].mxu0 %v367
        %v437 = vpop.f32.mrb[0].mxu0
        %v438 = vadd.f32 0.0, %v437
        %v439 = vpop.f32.mrb[0].mxu0
        %440 = vdwg.mxu0
        %v441 = vsel %vm198, %v438, -inf
        %442 = vmax.xlane.f32.xlu0 %v441
        %v443 = vpop.xlane.xlu0 %442
        %v444 = vsub.f32 %v438, %v443
        %v445 = vmul.f32 %v444, 1.442695
        %v446 = vpow.pop %v445
        %v447 = vsel %vm198, %v446, 0.0
        %448 = vadd.xlane.f32.xlu0 %v447
        %v449 = vpop.xlane.xlu0 %448
        %v450 = vrcp.pop %v449
        %v451 = vmul.f32 %v446, %v450
        %452 = vrot.lane.b32.xlu0 %v197, 88
        %v453 = vpop.permute.xlu0 %452
        %v456 = vsel %vm198, %v451, 0
        %458 = vmatprep.subr.mxu0 0.0
        %459 = vmatpush1.msra.mxu0 %v453
        %460 = vmatprep.subr.mxu0 0.0
        %461 = vmatpush1.msra.mxu0 0.0
        %462 = vmatprep.subr.mxu0 0.0
        %463 = vmatpush1.msra.mxu0 0.0
        %464 = vmatprep.subr.mxu0 0.0
        %465 = vmatpush1.msra.mxu0 0.0
        %466 = vmatprep.subr.mxu0 0.0
        %467 = vmatpush1.msra.mxu0 0.0
        %468 = vmatprep.subr.mxu0 0.0
        %469 = vmatpush1.msra.mxu0 0.0
        %470 = vmatprep.subr.mxu0 0.0
        %471 = vmatpush1.msra.mxu0 0.0
        %472 = vmatprep.subr.mxu0 0.0
        %473 = vmatpush1.msra.mxu0 0.0
        %474 = vmatprep.subr.mxu0 0.0
        %475 = vmatpush1.msra.mxu0 0.0
        %476 = vmatprep.subr.mxu0 0.0
        %477 = vmatpush1.msra.mxu0 0.0
        %478 = vmatprep.subr.mxu0 0.0
        %479 = vmatpush1.msra.mxu0 0.0
        %480 = vmatprep.subr.mxu0 0.0
        %481 = vmatpush1.msra.mxu0 0.0
        %482 = vmatprep.subr.mxu0 0.0
        %483 = vmatpush1.msra.mxu0 0.0
        %484 = vmatprep.subr.mxu0 0.0
        %485 = vmatpush1.msra.mxu0 0.0
        %486 = vmatprep.subr.mxu0 0.0
        %487 = vmatpush1.msra.mxu0 0.0
        %488 = vmatprep.subr.mxu0 0.0
        %489 = vmatpush1.msra.mxu0 0.0
        %490 = vmatprep.subr.mxu0 0.0
        %491 = vmatpush1.msra.mxu0 0.0
        %492 = vmatprep.subr.mxu0 0.0
        %493 = vmatpush1.msra.mxu0 0.0
        %494 = vmatprep.subr.mxu0 0.0
        %495 = vmatpush1.msra.mxu0 0.0
        %496 = vmatprep.subr.mxu0 0.0
        %497 = vmatpush1.msra.mxu0 0.0
        %498 = vmatprep.subr.mxu0 0.0
        %499 = vmatpush1.msra.mxu0 0.0
        %500 = vmatprep.subr.mxu0 0.0
        %501 = vmatpush1.msra.mxu0 0.0
        %502 = vmatprep.subr.mxu0 0.0
        %503 = vmatpush1.msra.mxu0 0.0
        %504 = vmatprep.subr.mxu0 0.0
        %505 = vmatpush1.msra.mxu0 0.0
        %506 = vmatprep.subr.mxu0 0.0
        %507 = vmatpush1.msra.mxu0 0.0
        %508 = vmatprep.subr.mxu0 0.0
        %509 = vmatpush1.msra.mxu0 0.0
        %510 = vmatprep.subr.mxu0 0.0
        %511 = vmatpush1.msra.mxu0 0.0
        %512 = vmatprep.subr.mxu0 0.0
        %513 = vmatpush1.msra.mxu0 0.0
        %514 = vmatprep.subr.mxu0 0.0
        %515 = vmatpush1.msra.mxu0 0.0
        %516 = vmatprep.subr.mxu0 0.0
        %517 = vmatpush1.msra.mxu0 0.0
        %518 = vmatprep.subr.mxu0 0.0
        %519 = vmatpush1.msra.mxu0 0.0
        %520 = vmatprep.subr.mxu0 0.0
        %521 = vmatpush1.msra.mxu0 0.0
        %522 = vmatprep.mubr.f32.mxu0 0.0
        %523 = vmatmul.mubr.f32.gmra.mrb[0].mxu0 %v456
        %v524 = vpop.f32.mrb[0].mxu0
        %v525 = vadd.f32 0.0, %v524
        %v526 = vpop.f32.mrb[0].mxu0
        %527 = vdwg.mxu0
        %529 = vrot.lane.b32.xlu0 %v525, 8
        %v530 = vpop.permute.xlu0 %529
        %vm532 = vcmask 130112
        %533 = vst.msk [vmem:[%s195] sm:$0xff] %vm532, %v530
        %534 = vrot.lane.b32.xlu0 %v196, 112
        %v535 = vpop.permute.xlu0 %534
        %536 = vrot.lane.b32.xlu0 %v197, 112
        %v537 = vpop.permute.xlu0 %536
        %v538 = vsel %vm198, %v535, 0
        %v540 = vsel %vm198, %v537, 0
        %542 = vmatprep.subr.mxu0 0.0
        %543 = vmatpush1.xpose.msra.mxu0 %v540
        %544 = vmatprep.subr.mxu0 0.0
        %545 = vmatpush1.xpose.msra.mxu0 0.0
        %546 = vmatprep.subr.mxu0 0.0
        %547 = vmatpush1.xpose.msra.mxu0 0.0
        %548 = vmatprep.subr.mxu0 0.0
        %549 = vmatpush1.xpose.msra.mxu0 0.0
        %550 = vmatprep.subr.mxu0 0.0
        %551 = vmatpush1.xpose.msra.mxu0 0.0
        %552 = vmatprep.subr.mxu0 0.0
        %553 = vmatpush1.xpose.msra.mxu0 0.0
        %554 = vmatprep.subr.mxu0 0.0
        %555 = vmatpush1.xpose.msra.mxu0 0.0
        %556 = vmatprep.subr.mxu0 0.0
        %557 = vmatpush1.xpose.msra.mxu0 0.0
        %558 = vmatprep.subr.mxu0 0.0
        %559 = vmatpush1.xpose.msra.mxu0 0.0
        %560 = vmatprep.subr.mxu0 0.0
        %561 = vmatpush1.xpose.msra.mxu0 0.0
        %562 = vmatprep.subr.mxu0 0.0
        %563 = vmatpush1.xpose.msra.mxu0 0.0
        %564 = vmatprep.subr.mxu0 0.0
        %565 = vmatpush1.xpose.msra.mxu0 0.0
        %566 = vmatprep.subr.mxu0 0.0
        %567 = vmatpush1.xpose.msra.mxu0 0.0
        %568 = vmatprep.subr.mxu0 0.0
        %569 = vmatpush1.xpose.msra.mxu0 0.0
        %570 = vmatprep.subr.mxu0 0.0
        %571 = vmatpush1.xpose.msra.mxu0 0.0
        %572 = vmatprep.subr.mxu0 0.0
        %573 = vmatpush1.xpose.msra.mxu0 0.0
        %574 = vmatprep.subr.mxu0 0.0
        %575 = vmatpush1.xpose.msra.mxu0 0.0
        %576 = vmatprep.subr.mxu0 0.0
        %577 = vmatpush1.xpose.msra.mxu0 0.0
        %578 = vmatprep.subr.mxu0 0.0
        %579 = vmatpush1.xpose.msra.mxu0 0.0
        %580 = vmatprep.subr.mxu0 0.0
        %581 = vmatpush1.xpose.msra.mxu0 0.0
        %582 = vmatprep.subr.mxu0 0.0
        %583 = vmatpush1.xpose.msra.mxu0 0.0
        %584 = vmatprep.subr.mxu0 0.0
        %585 = vmatpush1.xpose.msra.mxu0 0.0
        %586 = vmatprep.subr.mxu0 0.0
        %587 = vmatpush1.xpose.msra.mxu0 0.0
        %588 = vmatprep.subr.mxu0 0.0
        %589 = vmatpush1.xpose.msra.mxu0 0.0
        %590 = vmatprep.subr.mxu0 0.0
        %591 = vmatpush1.xpose.msra.mxu0 0.0
        %592 = vmatprep.subr.mxu0 0.0
        %593 = vmatpush1.xpose.msra.mxu0 0.0
        %594 = vmatprep.subr.mxu0 0.0
        %595 = vmatpush1.xpose.msra.mxu0 0.0
        %596 = vmatprep.subr.mxu0 0.0
        %597 = vmatpush1.xpose.msra.mxu0 0.0
        %598 = vmatprep.subr.mxu0 0.0
        %599 = vmatpush1.xpose.msra.mxu0 0.0
        %600 = vmatprep.subr.mxu0 0.0
        %601 = vmatpush1.xpose.msra.mxu0 0.0
        %602 = vmatprep.subr.mxu0 0.0
        %603 = vmatpush1.xpose.msra.mxu0 0.0
        %604 = vmatprep.subr.mxu0 0.0
        %605 = vmatpush1.xpose.msra.mxu0 0.0
        %606 = vmatprep.mubr.f32.mxu0 0.0
        %607 = vmatmul.mubr.f32.gmra.mrb[0].mxu0 %v538
        %v608 = vpop.f32.mrb[0].mxu0
        %v609 = vadd.f32 0.0, %v608
        %v610 = vpop.f32.mrb[0].mxu0
        %611 = vdwg.mxu0
        %v612 = vsel %vm198, %v609, -inf
        %613 = vmax.xlane.f32.xlu0 %v612
        %v614 = vpop.xlane.xlu0 %613
        %v615 = vsub.f32 %v609, %v614
        %v616 = vmul.f32 %v615, 1.442695
        %v617 = vpow.pop %v616
        %v618 = vsel %vm198, %v617, 0.0
        %619 = vadd.xlane.f32.xlu0 %v618
        %v620 = vpop.xlane.xlu0 %619
        %v621 = vrcp.pop %v620
        %v622 = vmul.f32 %v617, %v621
        %623 = vrot.lane.b32.xlu0 %v197, 80
        %v624 = vpop.permute.xlu0 %623
        %v627 = vsel %vm198, %v622, 0
        %629 = vmatprep.subr.mxu0 0.0
        %630 = vmatpush1.msra.mxu0 %v624
        %631 = vmatprep.subr.mxu0 0.0
        %632 = vmatpush1.msra.mxu0 0.0
        %633 = vmatprep.subr.mxu0 0.0
        %634 = vmatpush1.msra.mxu0 0.0
        %635 = vmatprep.subr.mxu0 0.0
        %636 = vmatpush1.msra.mxu0 0.0
        %637 = vmatprep.subr.mxu0 0.0
        %638 = vmatpush1.msra.mxu0 0.0
        %639 = vmatprep.subr.mxu0 0.0
        %640 = vmatpush1.msra.mxu0 0.0
        %641 = vmatprep.subr.mxu0 0.0
        %642 = vmatpush1.msra.mxu0 0.0
        %643 = vmatprep.subr.mxu0 0.0
        %644 = vmatpush1.msra.mxu0 0.0
        %645 = vmatprep.subr.mxu0 0.0
        %646 = vmatpush1.msra.mxu0 0.0
        %647 = vmatprep.subr.mxu0 0.0
        %648 = vmatpush1.msra.mxu0 0.0
        %649 = vmatprep.subr.mxu0 0.0
        %650 = vmatpush1.msra.mxu0 0.0
        %651 = vmatprep.subr.mxu0 0.0
        %652 = vmatpush1.msra.mxu0 0.0
        %653 = vmatprep.subr.mxu0 0.0
        %654 = vmatpush1.msra.mxu0 0.0
        %655 = vmatprep.subr.mxu0 0.0
        %656 = vmatpush1.msra.mxu0 0.0
        %657 = vmatprep.subr.mxu0 0.0
        %658 = vmatpush1.msra.mxu0 0.0
        %659 = vmatprep.subr.mxu0 0.0
        %660 = vmatpush1.msra.mxu0 0.0
        %661 = vmatprep.subr.mxu0 0.0
        %662 = vmatpush1.msra.mxu0 0.0
        %663 = vmatprep.subr.mxu0 0.0
        %664 = vmatpush1.msra.mxu0 0.0
        %665 = vmatprep.subr.mxu0 0.0
        %666 = vmatpush1.msra.mxu0 0.0
        %667 = vmatprep.subr.mxu0 0.0
        %668 = vmatpush1.msra.mxu0 0.0
        %669 = vmatprep.subr.mxu0 0.0
        %670 = vmatpush1.msra.mxu0 0.0
        %671 = vmatprep.subr.mxu0 0.0
        %672 = vmatpush1.msra.mxu0 0.0
        %673 = vmatprep.subr.mxu0 0.0
        %674 = vmatpush1.msra.mxu0 0.0
        %675 = vmatprep.subr.mxu0 0.0
        %676 = vmatpush1.msra.mxu0 0.0
        %677 = vmatprep.subr.mxu0 0.0
        %678 = vmatpush1.msra.mxu0 0.0
        %679 = vmatprep.subr.mxu0 0.0
        %680 = vmatpush1.msra.mxu0 0.0
        %681 = vmatprep.subr.mxu0 0.0
        %682 = vmatpush1.msra.mxu0 0.0
        %683 = vmatprep.subr.mxu0 0.0
        %684 = vmatpush1.msra.mxu0 0.0
        %685 = vmatprep.subr.mxu0 0.0
        %686 = vmatpush1.msra.mxu0 0.0
        %687 = vmatprep.subr.mxu0 0.0
        %688 = vmatpush1.msra.mxu0 0.0
        %689 = vmatprep.subr.mxu0 0.0
        %690 = vmatpush1.msra.mxu0 0.0
        %691 = vmatprep.subr.mxu0 0.0
        %692 = vmatpush1.msra.mxu0 0.0
        %693 = vmatprep.mubr.f32.mxu0 0.0
        %694 = vmatmul.mubr.f32.gmra.mrb[0].mxu0 %v627
        %v695 = vpop.f32.mrb[0].mxu0
        %v696 = vadd.f32 0.0, %v695
        %v697 = vpop.f32.mrb[0].mxu0
        %698 = vdwg.mxu0
        %700 = vrot.lane.b32.xlu0 %v696, 16
        %v701 = vpop.permute.xlu0 %700
        %vm703 = vcmask 195712
        %704 = vst.msk [vmem:[%s195] sm:$0xff] %vm703, %v701
        %705 = vrot.lane.b32.xlu0 %v196, 104
        %v706 = vpop.permute.xlu0 %705
        %707 = vrot.lane.b32.xlu0 %v197, 104
        %v708 = vpop.permute.xlu0 %707
        %v709 = vsel %vm198, %v706, 0
        %v711 = vsel %vm198, %v708, 0
        %713 = vmatprep.subr.mxu0 0.0
        %714 = vmatpush1.xpose.msra.mxu0 %v711
        %715 = vmatprep.subr.mxu0 0.0
        %716 = vmatpush1.xpose.msra.mxu0 0.0
        %717 = vmatprep.subr.mxu0 0.0
        %718 = vmatpush1.xpose.msra.mxu0 0.0
        %719 = vmatprep.subr.mxu0 0.0
        %720 = vmatpush1.xpose.msra.mxu0 0.0
        %721 = vmatprep.subr.mxu0 0.0
        %722 = vmatpush1.xpose.msra.mxu0 0.0
        %723 = vmatprep.subr.mxu0 0.0
        %724 = vmatpush1.xpose.msra.mxu0 0.0
        %725 = vmatprep.subr.mxu0 0.0
        %726 = vmatpush1.xpose.msra.mxu0 0.0
        %727 = vmatprep.subr.mxu0 0.0
        %728 = vmatpush1.xpose.msra.mxu0 0.0
        %729 = vmatprep.subr.mxu0 0.0
        %730 = vmatpush1.xpose.msra.mxu0 0.0
        %731 = vmatprep.subr.mxu0 0.0
        %732 = vmatpush1.xpose.msra.mxu0 0.0
        %733 = vmatprep.subr.mxu0 0.0
        %734 = vmatpush1.xpose.msra.mxu0 0.0
        %735 = vmatprep.subr.mxu0 0.0
        %736 = vmatpush1.xpose.msra.mxu0 0.0
        %737 = vmatprep.subr.mxu0 0.0
        %738 = vmatpush1.xpose.msra.mxu0 0.0
        %739 = vmatprep.subr.mxu0 0.0
        %740 = vmatpush1.xpose.msra.mxu0 0.0
        %741 = vmatprep.subr.mxu0 0.0
        %742 = vmatpush1.xpose.msra.mxu0 0.0
        %743 = vmatprep.subr.mxu0 0.0
        %744 = vmatpush1.xpose.msra.mxu0 0.0
        %745 = vmatprep.subr.mxu0 0.0
        %746 = vmatpush1.xpose.msra.mxu0 0.0
        %747 = vmatprep.subr.mxu0 0.0
        %748 = vmatpush1.xpose.msra.mxu0 0.0
        %749 = vmatprep.subr.mxu0 0.0
        %750 = vmatpush1.xpose.msra.mxu0 0.0
        %751 = vmatprep.subr.mxu0 0.0
        %752 = vmatpush1.xpose.msra.mxu0 0.0
        %753 = vmatprep.subr.mxu0 0.0
        %754 = vmatpush1.xpose.msra.mxu0 0.0
        %755 = vmatprep.subr.mxu0 0.0
        %756 = vmatpush1.xpose.msra.mxu0 0.0
        %757 = vmatprep.subr.mxu0 0.0
        %758 = vmatpush1.xpose.msra.mxu0 0.0
        %759 = vmatprep.subr.mxu0 0.0
        %760 = vmatpush1.xpose.msra.mxu0 0.0
        %761 = vmatprep.subr.mxu0 0.0
        %762 = vmatpush1.xpose.msra.mxu0 0.0
        %763 = vmatprep.subr.mxu0 0.0
        %764 = vmatpush1.xpose.msra.mxu0 0.0
        %765 = vmatprep.subr.mxu0 0.0
        %766 = vmatpush1.xpose.msra.mxu0 0.0
        %767 = vmatprep.subr.mxu0 0.0
        %768 = vmatpush1.xpose.msra.mxu0 0.0
        %769 = vmatprep.subr.mxu0 0.0
        %770 = vmatpush1.xpose.msra.mxu0 0.0
        %771 = vmatprep.subr.mxu0 0.0
        %772 = vmatpush1.xpose.msra.mxu0 0.0
        %773 = vmatprep.subr.mxu0 0.0
        %774 = vmatpush1.xpose.msra.mxu0 0.0
        %775 = vmatprep.subr.mxu0 0.0
        %776 = vmatpush1.xpose.msra.mxu0 0.0
        %777 = vmatprep.mubr.f32.mxu0 0.0
        %778 = vmatmul.mubr.f32.gmra.mrb[0].mxu0 %v709
        %v779 = vpop.f32.mrb[0].mxu0
        %v780 = vadd.f32 0.0, %v779
        %v781 = vpop.f32.mrb[0].mxu0
        %782 = vdwg.mxu0
        %v783 = vsel %vm198, %v780, -inf
        %784 = vmax.xlane.f32.xlu0 %v783
        %v785 = vpop.xlane.xlu0 %784
        %v786 = vsub.f32 %v780, %v785
        %v787 = vmul.f32 %v786, 1.442695
        %v788 = vpow.pop %v787
        %v789 = vsel %vm198, %v788, 0.0
        %790 = vadd.xlane.f32.xlu0 %v789
        %v791 = vpop.xlane.xlu0 %790
        %v792 = vrcp.pop %v791
        %v793 = vmul.f32 %v788, %v792
        %794 = vrot.lane.b32.xlu0 %v197, 72
        %v795 = vpop.permute.xlu0 %794
        %v798 = vsel %vm198, %v793, 0
        %800 = vmatprep.subr.mxu0 0.0
        %801 = vmatpush1.msra.mxu0 %v795
        %802 = vmatprep.subr.mxu0 0.0
        %803 = vmatpush1.msra.mxu0 0.0
        %804 = vmatprep.subr.mxu0 0.0
        %805 = vmatpush1.msra.mxu0 0.0
        %806 = vmatprep.subr.mxu0 0.0
        %807 = vmatpush1.msra.mxu0 0.0
        %808 = vmatprep.subr.mxu0 0.0
        %809 = vmatpush1.msra.mxu0 0.0
        %810 = vmatprep.subr.mxu0 0.0
        %811 = vmatpush1.msra.mxu0 0.0
        %812 = vmatprep.subr.mxu0 0.0
        %813 = vmatpush1.msra.mxu0 0.0
        %814 = vmatprep.subr.mxu0 0.0
        %815 = vmatpush1.msra.mxu0 0.0
        %816 = vmatprep.subr.mxu0 0.0
        %817 = vmatpush1.msra.mxu0 0.0
        %818 = vmatprep.subr.mxu0 0.0
        %819 = vmatpush1.msra.mxu0 0.0
        %820 = vmatprep.subr.mxu0 0.0
        %821 = vmatpush1.msra.mxu0 0.0
        %822 = vmatprep.subr.mxu0 0.0
        %823 = vmatpush1.msra.mxu0 0.0
        %824 = vmatprep.subr.mxu0 0.0
        %825 = vmatpush1.msra.mxu0 0.0
        %826 = vmatprep.subr.mxu0 0.0
        %827 = vmatpush1.msra.mxu0 0.0
        %828 = vmatprep.subr.mxu0 0.0
        %829 = vmatpush1.msra.mxu0 0.0
        %830 = vmatprep.subr.mxu0 0.0
        %831 = vmatpush1.msra.mxu0 0.0
        %832 = vmatprep.subr.mxu0 0.0
        %833 = vmatpush1.msra.mxu0 0.0
        %834 = vmatprep.subr.mxu0 0.0
        %835 = vmatpush1.msra.mxu0 0.0
        %836 = vmatprep.subr.mxu0 0.0
        %837 = vmatpush1.msra.mxu0 0.0
        %838 = vmatprep.subr.mxu0 0.0
        %839 = vmatpush1.msra.mxu0 0.0
        %840 = vmatprep.subr.mxu0 0.0
        %841 = vmatpush1.msra.mxu0 0.0
        %842 = vmatprep.subr.mxu0 0.0
        %843 = vmatpush1.msra.mxu0 0.0
        %844 = vmatprep.subr.mxu0 0.0
        %845 = vmatpush1.msra.mxu0 0.0
        %846 = vmatprep.subr.mxu0 0.0
        %847 = vmatpush1.msra.mxu0 0.0
        %848 = vmatprep.subr.mxu0 0.0
        %849 = vmatpush1.msra.mxu0 0.0
        %850 = vmatprep.subr.mxu0 0.0
        %851 = vmatpush1.msra.mxu0 0.0
        %852 = vmatprep.subr.mxu0 0.0
        %853 = vmatpush1.msra.mxu0 0.0
        %854 = vmatprep.subr.mxu0 0.0
        %855 = vmatpush1.msra.mxu0 0.0
        %856 = vmatprep.subr.mxu0 0.0
        %857 = vmatpush1.msra.mxu0 0.0
        %858 = vmatprep.subr.mxu0 0.0
        %859 = vmatpush1.msra.mxu0 0.0
        %860 = vmatprep.subr.mxu0 0.0
        %861 = vmatpush1.msra.mxu0 0.0
        %862 = vmatprep.subr.mxu0 0.0
        %863 = vmatpush1.msra.mxu0 0.0
        %864 = vmatprep.mubr.f32.mxu0 0.0
        %865 = vmatmul.mubr.f32.gmra.mrb[0].mxu0 %v798
        %v866 = vpop.f32.mrb[0].mxu0
        %v867 = vadd.f32 0.0, %v866
        %v868 = vpop.f32.mrb[0].mxu0
        %869 = vdwg.mxu0
        %871 = vrot.lane.b32.xlu0 %v867, 24
        %v872 = vpop.permute.xlu0 %871
        %vm874 = vcmask 261312
        %875 = vst.msk [vmem:[%s195] sm:$0xff] %vm874, %v872
        %s876 = sand.u32 %s82, 1
        %s877 = scalar_lea.sflag [#allocation4], %s876
        %s878 = sand.u32 %s82, 1
        %s879 = smul.addr %s878, 8
        %s880 = scalar_lea.vmem [#allocation7], %s879
        // Predicated region
        $region37: #{decoder_layer.13} parent=27 // pred_check
          %p881 = pneg %p92
        $region38: #{decoder_layer.13} parent=27 // pred_check_branch
          %883 = sbr.rel (%p881) target = $region40
        $region39: #{decoder_layer.13} parent=27 // pred_region
          %s885 = ssub.s32 128, 128
          %886 = vsyncadd %s877, %s885
          %s887 = smul.addr %s22, 128
          %s888 = scalar_lea.hbm %s2, %s887
          %s890 = sshll.u32 %s880, 4
          %s891 = int_to_ptr.vmem [resolvable:$true] %s890
          %893 = dma.vmem_to_hbm [thread:$0]  %s891, 128, %s888, %s877
        $region40: #{decoder_layer.13} parent=27 // pred_fallthru
          _
      $region28: #{decoder_layer.13} parent=5 // pred_fallthru
        _
      %p894 = scmp.le.s32.totalorder 2, %s17
      // Predicated region
      $region41: #{decoder_layer.13} parent=5 // pred_check
        %p895 = pneg %p894
      $region42: #{decoder_layer.13} parent=5 // pred_check_branch
        %897 = sbr.rel (%p895) target = $region44
      $region43: #{decoder_layer.13} parent=5 // pred_region
        %s898 = ssub.s32 %s17, 2
        // Predicated region
        $region45: #{decoder_layer.13} parent=43 // pred_check
          %p899 = pneg %p98
        $region46: #{decoder_layer.13} parent=43 // pred_check_branch
          %901 = sbr.rel (%p899) target = $region48
        $region47: #{decoder_layer.13} parent=43 // pred_region
          %s902 = sand.u32 %s83, 1
          %s903 = scalar_lea.sflag [#allocation4], %s902
          %s904 = sand.u32 %s83, 1
          %s905 = smul.addr %s904, 8
          %s906 = scalar_lea.vmem [#allocation7], %s905
          %907 = dma.done %s903, 128
        $region48: #{decoder_layer.13} parent=43 // pred_fallthru
          _
      $region44: #{decoder_layer.13} parent=5 // pred_fallthru
        _
    $region6: #{decoder_layer.13} parent=1 // loop_footer
      %s21 = sadd.s32 1, %s17
    $region7: #{decoder_layer.13} parent=1 // loop_footer_branch
      %16 = sbr.rel target = $region3
    $region8: #{decoder_layer.13} parent=1 // loop_exit
      _
    %908 = vsyncpa [#allocation3], 1
    %s909 = scalar_lea.sflag [#allocation3], 1
    %910 = vsyncpa %s909, 1
    %911 = vsyncpa [#allocation6], 1
    %s912 = scalar_lea.sflag [#allocation6], 1
    %913 = vsyncpa %s912, 1
    %914 = vsyncpa [#allocation4], 1
    %s915 = scalar_lea.sflag [#allocation4], 1
    %916 = vsyncpa %s915, 1

// kernel: decoder_layer.15
$region0: #{decoder_layer.15}
  #allocation0 [shape = 'u32[]', space=smem, size = 0x4, offset = 0x4, fixed_abs, tag = 'smem constant byte address 0x4 - core index']
  #allocation1 [shape = 'u32[144,128]{1,0:T(1,128)}', space=vmem, size = 0x12000, scoped, tag = 'internal scratch']
  #allocation2 [shape = 'f32[8,32]{1,0:T(8,128)}', space=vmem, size = 0x1000, scoped, tag = 'scratch operand']
  %s0 = inlined_call_operand.hbm [shape: f32[16,32], index: 0, kind: input, shape index: {}]
  %s1 = inlined_call_operand.hbm [shape: f32[32,64], index: 1, kind: input, shape index: {}]
  %s2 = inlined_call_operand.hbm [shape: f32[1,64], index: 2, kind: input, shape index: {}]
  %s3 = inlined_call_operand.hbm [shape: f32[64,32], index: 3, kind: input, shape index: {}]
  %s4 = inlined_call_operand.hbm [shape: f32[1,32], index: 4, kind: input, shape index: {}]
  %s5 = inlined_call_operand.hbm [shape: f32[1,32], index: 5, kind: input, shape index: {}]
  %s6 = inlined_call_operand.hbm [shape: f32[1,32], index: 6, kind: input, shape index: {}]
  %s7 = inlined_call_operand.hbm [shape: f32[16,32], index: 7, kind: output, shape index: {}]
  %s8 = sld [smem:[#allocation0]]
  $region97: #{decoder_layer.15} parent=0
    _
  %s10 = ssub.s32 1, %s8
  %s11 = scalar_select 0, %s10, %s8
  $region1: #{decoder_layer.15} parent=0
    #allocation3 [shape = 'u8[8192]{0}', space=vmem, size = 0x2000, scoped, tag = 'input window, operand 0']
    #allocation4 [shape = 's32[2]{0}', space=sflag, size = 0x8, scoped, tag = 'scoped memory for decoder_layer.15']
    #allocation5 [shape = 's32[2]{0}', space=sflag, size = 0x8, scoped, tag = 'scoped memory for decoder_layer.15']
    #allocation6 [shape = 'u8[16384]{0}', space=vmem, size = 0x4000, scoped, tag = 'input window, operand 1, single buffered']
    #allocation7 [shape = 's32[1]{0}', space=sflag, size = 0x4, scoped, tag = 'scoped memory for decoder_layer.15']
    #allocation8 [shape = 'u8[512]{0}', space=vmem, size = 0x400, scoped, tag = 'input window, operand 2, single buffered']
    #allocation9 [shape = 'u8[32768]{0}', space=vmem, size = 0x8000, scoped, tag = 'input window, operand 3, single buffered']
    #allocation10 [shape = 's32[1]{0}', space=sflag, size = 0x4, scoped, tag = 'scoped memory for decoder_layer.15']
    #allocation11 [shape = 'u8[512]{0}', space=vmem, size = 0x400, scoped, tag = 'input window, operand 4, single buffered']
    #allocation12 [shape = 'u8[512]{0}', space=vmem, size = 0x400, scoped, tag = 'input window, operand 5, single buffered']
    #allocation13 [shape = 's32[1]{0}', space=sflag, size = 0x4, scoped, tag = 'scoped memory for decoder_layer.15']
    #allocation14 [shape = 'u8[512]{0}', space=vmem, size = 0x400, scoped, tag = 'input window, operand 6, single buffered']
    #allocation15 [shape = 'u8[8192]{0}', space=vmem, size = 0x2000, scoped, tag = 'output window, operand 0']
    %12 = vsyncpa [#allocation4], 0
    %s13 = scalar_lea.sflag [#allocation4], 1
    %14 = vsyncpa %s13, 0
    %15 = vsyncpa [#allocation7], 0
    %16 = vsyncpa [#allocation10], 0
    %17 = vsyncpa [#allocation13], 0
    %18 = vsyncpa [#allocation5], 0
    %s19 = scalar_lea.sflag [#allocation5], 1
    %20 = vsyncpa %s19, 0
    loop: start=0, step=1, limit=4
    $region2: #{decoder_layer.15} parent=1 // loop_pre_header
      _
    $region3: #{decoder_layer.15} parent=1 // loop_header
      %s22 = sphi 0, %s26
      %p23 = scmp.ge.s32.totalorder %s22, 4
      %s29 = sphi 0, %s41
      %s30 = sphi 0, %s37
      %s31 = sphi 0, %s29
      %s32 = sphi 0, %s30
      %s33 = sphi 0, %s31
      %s34 = sphi 0, %s32
      %s44 = sphi 0, %s46
      %s47 = sphi 0, %s44
      %s48 = sphi 0, %s47
      %s64 = sphi 0, %s48
      %s70 = sphi 0, %s72
      %s73 = sphi 0, %s70
      %s74 = sphi 0, %s73
      %s90 = sphi 0, %s74
      %s96 = sphi 0, %s98
      %s99 = sphi 0, %s96
      %s100 = sphi 0, %s99
      %s116 = sphi 0, %s100
      %s122 = sphi 0, %s124
      %s125 = sphi 0, %s122
      %s126 = sphi 0, %s125
      %s142 = sphi 0, %s126
      %s146 = sphi 0, %s146
      %s148 = sphi 0, %s146
      %s149 = sphi 0, %s148
      %s163 = sphi 0, %s149
      %s167 = sphi 0, %s167
      %s169 = sphi 0, %s167
      %s170 = sphi 0, %s169
      %s184 = sphi 0, %s170
      %s188 = sphi 0, %s188
      %s190 = sphi 0, %s188
      %s191 = sphi 0, %s190
      %s205 = sphi 0, %s191
      %s211 = sphi 0, %s213
      %s214 = sphi 0, %s211
      %s215 = sphi 0, %s214
      %s231 = sphi 0, %s215
    $region4: #{decoder_layer.15} parent=1 // loop_header_branch
      %25 = sbr.rel (%p23) target = $region8
    $region5: #{decoder_layer.15} parent=1 // loop_body
      %s27 = ssub.s32 %s22, 1
      %s28 = ssub.s32 %s22, 2
      %s35 = sadd.s32 1, %s30
      %p36 = scmp.ge.s32.totalorder %s35, 1
      %s37 = scalar_select %p36, 0, %s35
      %s38 = sadd.s32 1, %s29
      %s39 = scalar_select %p36, %s38, %s29
      %p40 = scmp.ge.s32.totalorder %s39, 2
      %s41 = scalar_select %p40, 0, %s39
      %s42 = ssub.s32 %s29, %s41
      %p43 = scmp.eq.s32.totalorder %s42, 0
      %s45 = sadd.s32 %s44, 1
      %s46 = scalar_select %p43, %s44, %s45
      %p49 = pneg %p43
      %p50 = scmp.eq.s32.totalorder %s22, 1
      %p51 = por %p49, %p50
      %p52 = scmp.ne.s32.totalorder %s44, %s47
      %p53 = scmp.eq.s32.totalorder %s22, 0
      %p54 = por %p52, %p53
      %p55 = scmp.ne.s32.totalorder %s44, %s47
      %p56 = scmp.eq.s32.totalorder %s27, 1
      %p57 = por %p55, %p56
      %p58 = scmp.ne.s32.totalorder %s47, %s48
      %p59 = scmp.eq.s32.totalorder %s27, 0
      %p60 = por %p58, %p59
      %p61 = scmp.ne.s32.totalorder %s47, %s48
      %p62 = scmp.eq.s32.totalorder %s28, 1
      %p63 = por %p61, %p62
      %p65 = scmp.ne.s32.totalorder %s48, %s64
      %p66 = scmp.eq.s32.totalorder %s28, 0
      %p67 = por %p65, %p66
      %s68 = ssub.s32 %s30, %s37
      %p69 = scmp.eq.s32.totalorder %s68, 0
      %s71 = sadd.s32 %s70, 1
      %s72 = scalar_select %p69, %s70, %s71
      %p75 = pneg %p69
      %p76 = scmp.eq.s32.totalorder %s22, 1
      %p77 = por %p75, %p76
      %p78 = scmp.ne.s32.totalorder %s70, %s73
      %p79 = scmp.eq.s32.totalorder %s22, 0
      %p80 = por %p78, %p79
      %p81 = scmp.ne.s32.totalorder %s70, %s73
      %p82 = scmp.eq.s32.totalorder %s27, 1
      %p83 = por %p81, %p82
      %p84 = scmp.ne.s32.totalorder %s73, %s74
      %p85 = scmp.eq.s32.totalorder %s27, 0
      %p86 = por %p84, %p85
      %p87 = scmp.ne.s32.totalorder %s73, %s74
      %p88 = scmp.eq.s32.totalorder %s28, 1
      %p89 = por %p87, %p88
      %p91 = scmp.ne.s32.totalorder %s74, %s90
      %p92 = scmp.eq.s32.totalorder %s28, 0
      %p93 = por %p91, %p92
      %s94 = ssub.s32 %s30, %s37
      %p95 = scmp.eq.s32.totalorder %s94, 0
      %s97 = sadd.s32 %s96, 1
      %s98 = scalar_select %p95, %s96, %s97
      %p101 = pneg %p95
      %p102 = scmp.eq.s32.totalorder %s22, 1
      %p103 = por %p101, %p102
      %p104 = scmp.ne.s32.totalorder %s96, %s99
      %p105 = scmp.eq.s32.totalorder %s22, 0
      %p106 = por %p104, %p105
      %p107 = scmp.ne.s32.totalorder %s96, %s99
      %p108 = scmp.eq.s32.totalorder %s27, 1
      %p109 = por %p107, %p108
      %p110 = scmp.ne.s32.totalorder %s99, %s100
      %p111 = scmp.eq.s32.totalorder %s27, 0
      %p112 = por %p110, %p111
      %p113 = scmp.ne.s32.totalorder %s99, %s100
      %p114 = scmp.eq.s32.totalorder %s28, 1
      %p115 = por %p113, %p114
      %p117 = scmp.ne.s32.totalorder %s100, %s116
      %p118 = scmp.eq.s32.totalorder %s28, 0
      %p119 = por %p117, %p118
      %s120 = ssub.s32 %s30, %s37
      %p121 = scmp.eq.s32.totalorder %s120, 0
      %s123 = sadd.s32 %s122, 1
      %s124 = scalar_select %p121, %s122, %s123
      %p127 = pneg %p121
      %p128 = scmp.eq.s32.totalorder %s22, 1
      %p129 = por %p127, %p128
      %p130 = scmp.ne.s32.totalorder %s122, %s125
      %p131 = scmp.eq.s32.totalorder %s22, 0
      %p132 = por %p130, %p131
      %p133 = scmp.ne.s32.totalorder %s122, %s125
      %p134 = scmp.eq.s32.totalorder %s27, 1
      %p135 = por %p133, %p134
      %p136 = scmp.ne.s32.totalorder %s125, %s126
      %p137 = scmp.eq.s32.totalorder %s27, 0
      %p138 = por %p136, %p137
      %p139 = scmp.ne.s32.totalorder %s125, %s126
      %p140 = scmp.eq.s32.totalorder %s28, 1
      %p141 = por %p139, %p140
      %p143 = scmp.ne.s32.totalorder %s126, %s142
      %p144 = scmp.eq.s32.totalorder %s28, 0
      %p145 = por %p143, %p144
      %s147 = sadd.s32 %s146, 1
      %p150 = scmp.eq.s32.totalorder %s22, 1
      %p151 = scmp.ne.s32.totalorder %s146, %s148
      %p152 = scmp.eq.s32.totalorder %s22, 0
      %p153 = por %p151, %p152
      %p154 = scmp.ne.s32.totalorder %s146, %s148
      %p155 = scmp.eq.s32.totalorder %s27, 1
      %p156 = por %p154, %p155
      %p157 = scmp.ne.s32.totalorder %s148, %s149
      %p158 = scmp.eq.s32.totalorder %s27, 0
      %p159 = por %p157, %p158
      %p160 = scmp.ne.s32.totalorder %s148, %s149
      %p161 = scmp.eq.s32.totalorder %s28, 1
      %p162 = por %p160, %p161
      %p164 = scmp.ne.s32.totalorder %s149, %s163
      %p165 = scmp.eq.s32.totalorder %s28, 0
      %p166 = por %p164, %p165
      %s168 = sadd.s32 %s167, 1
      %p171 = scmp.eq.s32.totalorder %s22, 1
      %p172 = scmp.ne.s32.totalorder %s167, %s169
      %p173 = scmp.eq.s32.totalorder %s22, 0
      %p174 = por %p172, %p173
      %p175 = scmp.ne.s32.totalorder %s167, %s169
      %p176 = scmp.eq.s32.totalorder %s27, 1
      %p177 = por %p175, %p176
      %p178 = scmp.ne.s32.totalorder %s169, %s170
      %p179 = scmp.eq.s32.totalorder %s27, 0
      %p180 = por %p178, %p179
      %p181 = scmp.ne.s32.totalorder %s169, %s170
      %p182 = scmp.eq.s32.totalorder %s28, 1
      %p183 = por %p181, %p182
      %p185 = scmp.ne.s32.totalorder %s170, %s184
      %p186 = scmp.eq.s32.totalorder %s28, 0
      %p187 = por %p185, %p186
      %s189 = sadd.s32 %s188, 1
      %p192 = scmp.eq.s32.totalorder %s22, 1
      %p193 = scmp.ne.s32.totalorder %s188, %s190
      %p194 = scmp.eq.s32.totalorder %s22, 0
      %p195 = por %p193, %p194
      %p196 = scmp.ne.s32.totalorder %s188, %s190
      %p197 = scmp.eq.s32.totalorder %s27, 1
      %p198 = por %p196, %p197
      %p199 = scmp.ne.s32.totalorder %s190, %s191
      %p200 = scmp.eq.s32.totalorder %s27, 0
      %p201 = por %p199, %p200
      %p202 = scmp.ne.s32.totalorder %s190, %s191
      %p203 = scmp.eq.s32.totalorder %s28, 1
      %p204 = por %p202, %p203
      %p206 = scmp.ne.s32.totalorder %s191, %s205
      %p207 = scmp.eq.s32.totalorder %s28, 0
      %p208 = por %p206, %p207
      %s209 = ssub.s32 %s29, %s41
      %p210 = scmp.eq.s32.totalorder %s209, 0
      %s212 = sadd.s32 %s211, 1
      %s213 = scalar_select %p210, %s211, %s212
      %p216 = pneg %p210
      %p217 = scmp.eq.s32.totalorder %s22, 1
      %p218 = por %p216, %p217
      %p219 = scmp.ne.s32.totalorder %s211, %s214
      %p220 = scmp.eq.s32.totalorder %s22, 0
      %p221 = por %p219, %p220
      %p222 = scmp.ne.s32.totalorder %s211, %s214
      %p223 = scmp.eq.s32.totalorder %s27, 1
      %p224 = por %p222, %p223
      %p225 = scmp.ne.s32.totalorder %s214, %s215
      %p226 = scmp.eq.s32.totalorder %s27, 0
      %p227 = por %p225, %p226
      %p228 = scmp.ne.s32.totalorder %s214, %s215
      %p229 = scmp.eq.s32.totalorder %s28, 1
      %p230 = por %p228, %p229
      %p232 = scmp.ne.s32.totalorder %s215, %s231
      %p233 = scmp.eq.s32.totalorder %s28, 0
      %p234 = por %p232, %p233
      %p235 = scmp.le.s32.totalorder 1, %s22
      %p236 = scmp.lt.s32.totalorder %s22, 3
      %p237 = pnand %p235, %p236
      %p238 = pneg %p237
      // Predicated region
      $region9: #{decoder_layer.15} parent=5 // pred_check
        _
      $region10: #{decoder_layer.15} parent=5 // pred_check_branch
        %240 = sbr.rel (%p237) target = $region12
      $region11: #{decoder_layer.15} parent=5 // pred_region
        %s241 = ssub.s32 %s22, 1
        // Predicated region
        $region13: #{decoder_layer.15} parent=11 // pred_check
          %p242 = pneg %p86
        $region14: #{decoder_layer.15} parent=11 // pred_check_branch
          %244 = sbr.rel (%p242) target = $region16
        $region15: #{decoder_layer.15} parent=11 // pred_region
          %s246 = ssub.s32 512, 512
          %247 = vsyncadd [#allocation7], %s246
          %s248 = smul.addr %s32, 128
          %s249 = scalar_lea.hbm %s1, %s248
          %s250 = sshll.u32 [#allocation6], 4
          %s251 = int_to_ptr.vmem [resolvable:$true] %s250
          %256 = dma.hbm_to_vmem [thread:$0]  %s249, 512, %s251, [#allocation7], 128, 128, 8
        $region16: #{decoder_layer.15} parent=11 // pred_fallthru
          _
        // Predicated region
        $region17: #{decoder_layer.15} parent=11 // pred_check
          %p257 = pneg %p112
        $region18: #{decoder_layer.15} parent=11 // pred_check_branch
          %259 = sbr.rel (%p257) target = $region20
        $region19: #{decoder_layer.15} parent=11 // pred_region
          %s261 = ssub.s32 16, 16
          %262 = vsyncadd [#allocation7], %s261
          %s263 = smul.addr %s32, 16
          %s264 = scalar_lea.hbm %s2, %s263
          %s266 = sshll.u32 [#allocation8], 4
          %s267 = int_to_ptr.vmem [resolvable:$true] %s266
          %269 = dma.hbm_to_vmem [thread:$0]  %s264, 16, %s267, [#allocation7]
        $region20: #{decoder_layer.15} parent=11 // pred_fallthru
          _
        // Predicated region
        $region21: #{decoder_layer.15} parent=11 // pred_check
          %p270 = pneg %p138
        $region22: #{decoder_layer.15} parent=11 // pred_check_branch
          %272 = sbr.rel (%p270) target = $region24
        $region23: #{decoder_layer.15} parent=11 // pred_region
          %s273 = smul.u32 8, %s32
          %s275 = ssub.s32 1024, 1024
          %276 = vsyncadd [#allocation10], %s275
          %s277 = smul.addr %s273, 128
          %s278 = scalar_lea.hbm %s3, %s277
          %s279 = sshll.u32 [#allocation9], 4
          %s280 = int_to_ptr.vmem [resolvable:$true] %s279
          %285 = dma.hbm_to_vmem [thread:$0]  %s278, 1024, %s280, [#allocation10], 128, 128, 8
        $region24: #{decoder_layer.15} parent=11 // pred_fallthru
          _
        // Predicated region
        $region25: #{decoder_layer.15} parent=11 // pred_check
          %p286 = pneg %p159
        $region26: #{decoder_layer.15} parent=11 // pred_check_branch
          %288 = sbr.rel (%p286) target = $region28
        $region27: #{decoder_layer.15} parent=11 // pred_region
          %s290 = ssub.s32 16, 16
          %291 = vsyncadd [#allocation10], %s290
          %s293 = sshll.u32 [#allocation11], 4
          %s294 = int_to_ptr.vmem [resolvable:$true] %s293
          %296 = dma.hbm_to_vmem [thread:$0]  %s4, 16, %s294, [#allocation10]
        $region28: #{decoder_layer.15} parent=11 // pred_fallthru
          _
        // Predicated region
        $region29: #{decoder_layer.15} parent=11 // pred_check
          %p297 = pneg %p180
        $region30: #{decoder_layer.15} parent=11 // pred_check_branch
          %299 = sbr.rel (%p297) target = $region32
        $region31: #{decoder_layer.15} parent=11 // pred_region
          %s301 = ssub.s32 16, 16
          %302 = vsyncadd [#allocation13], %s301
          %s304 = sshll.u32 [#allocation12], 4
          %s305 = int_to_ptr.vmem [resolvable:$true] %s304
          %307 = dma.hbm_to_vmem [thread:$0]  %s5, 16, %s305, [#allocation13]
        $region32: #{decoder_layer.15} parent=11 // pred_fallthru
          _
        // Predicated region
        $region33: #{decoder_layer.15} parent=11 // pred_check
          %p308 = pneg %p201
        $region34: #{decoder_layer.15} parent=11 // pred_check_branch
          %310 = sbr.rel (%p308) target = $region36
        $region35: #{decoder_layer.15} parent=11 // pred_region
          %s312 = ssub.s32 16, 16
          %313 = vsyncadd [#allocation13], %s312
          %s315 = sshll.u32 [#allocation14], 4
          %s316 = int_to_ptr.vmem [resolvable:$true] %s315
          %318 = dma.hbm_to_vmem [thread:$0]  %s6, 16, %s316, [#allocation13]
        $region36: #{decoder_layer.15} parent=11 // pred_fallthru
          _
      $region12: #{decoder_layer.15} parent=5 // pred_fallthru
        _
      %p319 = scmp.lt.s32.totalorder %s22, 2
      // Predicated region
      $region37: #{decoder_layer.15} parent=5 // pred_check
        %p320 = pneg %p319
      $region38: #{decoder_layer.15} parent=5 // pred_check_branch
        %322 = sbr.rel (%p320) target = $region40
      $region39: #{decoder_layer.15} parent=5 // pred_region
        // Predicated region
        $region41: #{decoder_layer.15} parent=39 // pred_check
          %p323 = pneg %p54
        $region42: #{decoder_layer.15} parent=39 // pred_check_branch
          %325 = sbr.rel (%p323) target = $region44
        $region43: #{decoder_layer.15} parent=39 // pred_region
          %s326 = sand.u32 %s44, 1
          %s327 = scalar_lea.sflag [#allocation4], %s326
          %s328 = sand.u32 %s44, 1
          %s329 = smul.addr %s328, 8
          %s330 = scalar_lea.vmem [#allocation3], %s329
          %s332 = ssub.s32 128, 128
          %333 = vsyncadd %s327, %s332
          %s334 = smul.addr %s29, 128
          %s335 = scalar_lea.hbm %s0, %s334
          %s337 = sshll.u32 %s330, 4
          %s338 = int_to_ptr.vmem [resolvable:$true] %s337
          %340 = dma.hbm_to_vmem [thread:$0]  %s335, 128, %s338, %s327
        $region44: #{decoder_layer.15} parent=39 // pred_fallthru
          _
      $region40: #{decoder_layer.15} parent=5 // pred_fallthru
        _
      %p341 = scmp.le.s32.totalorder 1, %s22
      %p342 = scmp.lt.s32.totalorder %s22, 3
      %p343 = pnand %p341, %p342
      %p344 = pneg %p343
      // Predicated region
      $region45: #{decoder_layer.15} parent=5 // pred_check
        _
      $region46: #{decoder_layer.15} parent=5 // pred_check_branch
        %346 = sbr.rel (%p343) target = $region48
      $region47: #{decoder_layer.15} parent=5 // pred_region
        %s347 = ssub.s32 %s22, 1
        %s348 = sand.u32 %s47, 1
        %s349 = scalar_lea.sflag [#allocation4], %s348
        %s350 = sand.u32 %s47, 1
        %s351 = smul.addr %s350, 8
        %s352 = scalar_lea.vmem [#allocation3], %s351
        // Predicated region
        $region49: #{decoder_layer.15} parent=47 // pred_check
          %p353 = pneg %p60
        $region50: #{decoder_layer.15} parent=47 // pred_check_branch
          %355 = sbr.rel (%p353) target = $region52
        $region51: #{decoder_layer.15} parent=47 // pred_region
          %356 = dma.done %s349, 128
        $region52: #{decoder_layer.15} parent=47 // pred_fallthru
          _
        // Predicated region
        $region53: #{decoder_layer.15} parent=47 // pred_check
          %p357 = pneg %p86
        $region54: #{decoder_layer.15} parent=47 // pred_check_branch
          %359 = sbr.rel (%p357) target = $region56
        $region55: #{decoder_layer.15} parent=47 // pred_region
          %360 = dma.done [#allocation7], 512
        $region56: #{decoder_layer.15} parent=47 // pred_fallthru
          _
        // Predicated region
        $region57: #{decoder_layer.15} parent=47 // pred_check
          %p361 = pneg %p112
        $region58: #{decoder_layer.15} parent=47 // pred_check_branch
          %363 = sbr.rel (%p361) target = $region60
        $region59: #{decoder_layer.15} parent=47 // pred_region
          %364 = dma.done [#allocation7], 16
        $region60: #{decoder_layer.15} parent=47 // pred_fallthru
          _
        // Predicated region
        $region61: #{decoder_layer.15} parent=47 // pred_check
          %p365 = pneg %p138
        $region62: #{decoder_layer.15} parent=47 // pred_check_branch
          %367 = sbr.rel (%p365) target = $region64
        $region63: #{decoder_layer.15} parent=47 // pred_region
          %368 = dma.done [#allocation10], 1024
        $region64: #{decoder_layer.15} parent=47 // pred_fallthru
          _
        // Predicated region
        $region65: #{decoder_layer.15} parent=47 // pred_check
          %p369 = pneg %p159
        $region66: #{decoder_layer.15} parent=47 // pred_check_branch
          %371 = sbr.rel (%p369) target = $region68
        $region67: #{decoder_layer.15} parent=47 // pred_region
          %372 = dma.done [#allocation10], 16
        $region68: #{decoder_layer.15} parent=47 // pred_fallthru
          _
        // Predicated region
        $region69: #{decoder_layer.15} parent=47 // pred_check
          %p373 = pneg %p180
        $region70: #{decoder_layer.15} parent=47 // pred_check_branch
          %375 = sbr.rel (%p373) target = $region72
        $region71: #{decoder_layer.15} parent=47 // pred_region
          %376 = dma.done [#allocation13], 16
        $region72: #{decoder_layer.15} parent=47 // pred_fallthru
          _
        // Predicated region
        $region73: #{decoder_layer.15} parent=47 // pred_check
          %p377 = pneg %p201
        $region74: #{decoder_layer.15} parent=47 // pred_check_branch
          %379 = sbr.rel (%p377) target = $region76
        $region75: #{decoder_layer.15} parent=47 // pred_region
          %380 = dma.done [#allocation13], 16
        $region76: #{decoder_layer.15} parent=47 // pred_fallthru
          _
        %s381 = sand.u32 %s47, 1
        %s382 = scalar_lea.sflag [#allocation4], %s381
        %s383 = sand.u32 %s47, 1
        %s384 = smul.addr %s383, 8
        %s385 = scalar_lea.vmem [#allocation3], %s384
        %p386 = pneg %p60
        %p387 = pneg %p57
        %p388 = pneg %p86
        %p389 = pneg %p83
        %p390 = pneg %p112
        %p391 = pneg %p109
        %p392 = pneg %p138
        %p393 = pneg %p135
        %p394 = pneg %p159
        %p395 = pneg %p156
        %p396 = pneg %p180
        %p397 = pneg %p177
        %p398 = pneg %p201
        %p399 = pneg %p198
        %p400 = pneg %p227
        %p401 = pneg %p224
        %s402 = sand.u32 %s214, 1
        %s403 = scalar_lea.sflag [#allocation5], %s402
        %s404 = sand.u32 %s214, 1
        %s405 = smul.addr %s404, 8
        %s406 = scalar_lea.vmem [#allocation15], %s405
        %s407 = smul.u32 8, %s32
        %p408 = scmp.eq.s32.totalorder %s32, 0
        // Predicated region
        $region77: #{decoder_layer.15} parent=47 // pred_check
          %p409 = pneg %p408
        $region78: #{decoder_layer.15} parent=47 // pred_check_branch
          %411 = sbr.rel (%p409) target = $region80
        $region79: #{decoder_layer.15} parent=47 // pred_region
          %vm412 = vcmask 261120
          %413 = vst.msk [vmem:[#allocation2] sm:$0xff] %vm412, 0.0
        $region80: #{decoder_layer.15} parent=47 // pred_fallthru
          _
        %v414 = vld [vmem:[%s352] sm:$0xff]
        %v415 = vld [vmem:[#allocation6] sm:$0xff]
        %v416 = vld [vmem:[#allocation6 + $0x8] sm:$0xff]
        %v417 = vld [vmem:[#allocation6 + $0x10] sm:$0xff]
        %v418 = vld [vmem:[#allocation6 + $0x18] sm:$0xff]
        %v419 = vld [vmem:[#allocation8] sm:$0x1]
        %v421 = vlaneseq
        %v422 = vshrl.u32 %v421, 7
        %v423 = vsub.s32 0, %v422
        %v424 = vrot.slane %v419, %v423
        %vm426 = vcmask 261120
        %v428 = vsel %vm426, %v414, 0
        %430 = vmatprep.subr.mxu0 0.0
        %431 = vmatpush1.msra.mxu0 %v415
        %432 = vmatprep.subr.mxu0 0.0
        %433 = vmatpush1.msra.mxu0 %v416
        %434 = vmatprep.subr.mxu0 0.0
        %435 = vmatpush1.msra.mxu0 %v417
        %436 = vmatprep.subr.mxu0 0.0
        %437 = vmatpush1.msra.mxu0 %v418
        %438 = vmatprep.subr.mxu0 0.0
        %439 = vmatpush1.msra.mxu0 0.0
        %440 = vmatprep.subr.mxu0 0.0
        %441 = vmatpush1.msra.mxu0 0.0
        %442 = vmatprep.subr.mxu0 0.0
        %443 = vmatpush1.msra.mxu0 0.0
        %444 = vmatprep.subr.mxu0 0.0
        %445 = vmatpush1.msra.mxu0 0.0
        %446 = vmatprep.subr.mxu0 0.0
        %447 = vmatpush1.msra.mxu0 0.0
        %448 = vmatprep.subr.mxu0 0.0
        %449 = vmatpush1.msra.mxu0 0.0
        %450 = vmatprep.subr.mxu0 0.0
        %451 = vmatpush1.msra.mxu0 0.0
        %452 = vmatprep.subr.mxu0 0.0
        %453 = vmatpush1.msra.mxu0 0.0
        %454 = vmatprep.subr.mxu0 0.0
        %455 = vmatpush1.msra.mxu0 0.0
        %456 = vmatprep.subr.mxu0 0.0
        %457 = vmatpush1.msra.mxu0 0.0
        %458 = vmatprep.subr.mxu0 0.0
        %459 = vmatpush1.msra.mxu0 0.0
        %460 = vmatprep.subr.mxu0 0.0
        %461 = vmatpush1.msra.mxu0 0.0
        %462 = vmatprep.subr.mxu0 0.0
        %463 = vmatpush1.msra.mxu0 0.0
        %464 = vmatprep.subr.mxu0 0.0
        %465 = vmatpush1.msra.mxu0 0.0
        %466 = vmatprep.subr.mxu0 0.0
        %467 = vmatpush1.msra.mxu0 0.0
        %468 = vmatprep.subr.mxu0 0.0
        %469 = vmatpush1.msra.mxu0 0.0
        %470 = vmatprep.subr.mxu0 0.0
        %471 = vmatpush1.msra.mxu0 0.0
        %472 = vmatprep.subr.mxu0 0.0
        %473 = vmatpush1.msra.mxu0 0.0
        %474 = vmatprep.subr.mxu0 0.0
        %475 = vmatpush1.msra.mxu0 0.0
        %476 = vmatprep.subr.mxu0 0.0
        %477 = vmatpush1.msra.mxu0 0.0
        %478 = vmatprep.subr.mxu0 0.0
        %479 = vmatpush1.msra.mxu0 0.0
        %480 = vmatprep.subr.mxu0 0.0
        %481 = vmatpush1.msra.mxu0 0.0
        %482 = vmatprep.subr.mxu0 0.0
        %483 = vmatpush1.msra.mxu0 0.0
        %484 = vmatprep.subr.mxu0 0.0
        %485 = vmatpush1.msra.mxu0 0.0
        %486 = vmatprep.subr.mxu0 0.0
        %487 = vmatpush1.msra.mxu0 0.0
        %488 = vmatprep.subr.mxu0 0.0
        %489 = vmatpush1.msra.mxu0 0.0
        %490 = vmatprep.subr.mxu0 0.0
        %491 = vmatpush1.msra.mxu0 0.0
        %492 = vmatprep.subr.mxu0 0.0
        %493 = vmatpush1.msra.mxu0 0.0
        %494 = vmatprep.mubr.f32.mxu0 0.0
        %495 = vmatmul.mubr.f32.gmra.mrb[0].mxu0 %v428
        %v496 = vpop.f32.mrb[0].mxu0
        %v497 = vadd.f32 %v424, %v496
        %v498 = vpop.f32.mrb[0].mxu0
        %499 = vdwg.mxu0
        %v500 = vmax.f32 %v497, 0.0
        %v501 = vld [vmem:[#allocation2] sm:$0xff]
        %v502 = vld [vmem:[#allocation9] sm:$0xff]
        %v503 = vld [vmem:[#allocation9 + $0x8] sm:$0xff]
        %v504 = vld [vmem:[#allocation9 + $0x10] sm:$0xff]
        %v505 = vld [vmem:[#allocation9 + $0x18] sm:$0xff]
        %v506 = vld [vmem:[#allocation9 + $0x20] sm:$0xff]
        %v507 = vld [vmem:[#allocation9 + $0x28] sm:$0xff]
        %v508 = vld [vmem:[#allocation9 + $0x30] sm:$0xff]
        %v509 = vld [vmem:[#allocation9 + $0x38] sm:$0xff]
        %vm510 = vcmask 523264
        %v512 = vsel %vm510, %v500, 0
        %514 = vmatprep.subr.mxu0 0.0
        %515 = vmatpush1.msra.mxu0 %v502
        %516 = vmatprep.subr.mxu0 0.0
        %517 = vmatpush1.msra.mxu0 %v503
        %518 = vmatprep.subr.mxu0 0.0
        %519 = vmatpush1.msra.mxu0 %v504
        %520 = vmatprep.subr.mxu0 0.0
        %521 = vmatpush1.msra.mxu0 %v505
        %522 = vmatprep.subr.mxu0 0.0
        %523 = vmatpush1.msra.mxu0 %v506
        %524 = vmatprep.subr.mxu0 0.0
        %525 = vmatpush1.msra.mxu0 %v507
        %526 = vmatprep.subr.mxu0 0.0
        %527 = vmatpush1.msra.mxu0 %v508
        %528 = vmatprep.subr.mxu0 0.0
        %529 = vmatpush1.msra.mxu0 %v509
        %530 = vmatprep.subr.mxu0 0.0
        %531 = vmatpush1.msra.mxu0 0.0
        %532 = vmatprep.subr.mxu0 0.0
        %533 = vmatpush1.msra.mxu0 0.0
        %534 = vmatprep.subr.mxu0 0.0
        %535 = vmatpush1.msra.mxu0 0.0
        %536 = vmatprep.subr.mxu0 0.0
        %537 = vmatpush1.msra.mxu0 0.0
        %538 = vmatprep.subr.mxu0 0.0
        %539 = vmatpush1.msra.mxu0 0.0
        %540 = vmatprep.subr.mxu0 0.0
        %541 = vmatpush1.msra.mxu0 0.0
        %542 = vmatprep.subr.mxu0 0.0
        %543 = vmatpush1.msra.mxu0 0.0
        %544 = vmatprep.subr.mxu0 0.0
        %545 = vmatpush1.msra.mxu0 0.0
        %546 = vmatprep.subr.mxu0 0.0
        %547 = vmatpush1.msra.mxu0 0.0
        %548 = vmatprep.subr.mxu0 0.0
        %549 = vmatpush1.msra.mxu0 0.0
        %550 = vmatprep.subr.mxu0 0.0
        %551 = vmatpush1.msra.mxu0 0.0
        %552 = vmatprep.subr.mxu0 0.0
        %553 = vmatpush1.msra.mxu0 0.0
        %554 = vmatprep.subr.mxu0 0.0
        %555 = vmatpush1.msra.mxu0 0.0
        %556 = vmatprep.subr.mxu0 0.0
        %557 = vmatpush1.msra.mxu0 0.0
        %558 = vmatprep.subr.mxu0 0.0
        %559 = vmatpush1.msra.mxu0 0.0
        %560 = vmatprep.subr.mxu0 0.0
        %561 = vmatpush1.msra.mxu0 0.0
        %562 = vmatprep.subr.mxu0 0.0
        %563 = vmatpush1.msra.mxu0 0.0
        %564 = vmatprep.subr.mxu0 0.0
        %565 = vmatpush1.msra.mxu0 0.0
        %566 = vmatprep.subr.mxu0 0.0
        %567 = vmatpush1.msra.mxu0 0.0
        %568 = vmatprep.subr.mxu0 0.0
        %569 = vmatpush1.msra.mxu0 0.0
        %570 = vmatprep.subr.mxu0 0.0
        %571 = vmatpush1.msra.mxu0 0.0
        %572 = vmatprep.subr.mxu0 0.0
        %573 = vmatpush1.msra.mxu0 0.0
        %574 = vmatprep.subr.mxu0 0.0
        %575 = vmatpush1.msra.mxu0 0.0
        %576 = vmatprep.subr.mxu0 0.0
        %577 = vmatpush1.msra.mxu0 0.0
        %578 = vmatprep.mubr.f32.mxu0 0.0
        %579 = vmatmul.mubr.f32.gmra.mrb[0].mxu0 %v512
        %v580 = vpop.f32.mrb[0].mxu0
        %v581 = vadd.f32 0.0, %v580
        %v582 = vpop.f32.mrb[0].mxu0
        %583 = vdwg.mxu0
        %v584 = vadd.f32 %v501, %v581
        %585 = vst.msk [vmem:[#allocation2] sm:$0xff] %vm426, %v584
        // Predicated region
        $region81: #{decoder_layer.15} parent=47 // pred_check
          %p586 = pneg %p408
        $region82: #{decoder_layer.15} parent=47 // pred_check_branch
          %588 = sbr.rel (%p586) target = $region84
        $region83: #{decoder_layer.15} parent=47 // pred_region
          %v589 = vld [vmem:[#allocation2] sm:$0xff]
          %v590 = vld [vmem:[#allocation11] sm:$0x1]
          %v592 = vlaneseq
          %v593 = vshrl.u32 %v592, 7
          %v594 = vsub.s32 0, %v593
          %v595 = vrot.slane %v590, %v594
          %v597 = vadd.f32 %v589, %v595
          %v598 = vadd.f32 %v597, %v414
          %v599 = vld [vmem:[#allocation12] sm:$0x1]
          %v600 = vld [vmem:[#allocation14] sm:$0x1]
          %v601 = vsel %vm426, %v598, 0.0
          %602 = vadd.xlane.f32.xlu0 %v601
          %v603 = vpop.xlane.xlu0 %602
          %v604 = vrcp.pop 32.0
          %v605 = vmul.f32 %v603, %v604
          %v606 = vsub.f32 %v598, %v605
          %v607 = vmul.f32 %v606, %v606
          %v608 = vsel %vm426, %v607, 0.0
          %609 = vadd.xlane.f32.xlu0 %v608
          %v610 = vpop.xlane.xlu0 %609
          %v611 = vmul.f32 %v610, 0.032258064
          %v612 = vrsqrt.pop %v611
          %v613 = vmul.f32 %v611, %v612
          %vm614 = vcmp.eq.f32.partialorder %v611, inf
          %v615 = vsel %vm614, %v611, %v613
          %vm616 = vcmp.eq.f32.partialorder %v611, 0.0
          %v617 = vand.u32 %v611, 2147483648
          %v618 = vsel %vm616, %v617, %v615
          %v619 = vadd.f32 %v618, 1e-06
          %v620 = vrcp.pop %v619
          %v622 = vlaneseq
          %v623 = vshrl.u32 %v622, 7
          %v624 = vsub.s32 0, %v623
          %v625 = vrot.slane %v599, %v624
          %v627 = vmul.f32 %v625, %v606
          %v628 = vmul.f32 %v627, %v620
          %v630 = vlaneseq
          %v631 = vshrl.u32 %v630, 7
          %v632 = vsub.s32 0, %v631
          %v633 = vrot.slane %v600, %v632
          %v635 = vadd.f32 %v628, %v633
          %636 = vst.msk [vmem:[%s406] sm:$0xff] %vm426, %v635
        $region84: #{decoder_layer.15} parent=47 // pred_fallthru
          _
        %s637 = sand.u32 %s214, 1
        %s638 = scalar_lea.sflag [#allocation5], %s637
        %s639 = sand.u32 %s214, 1
        %s640 = smul.addr %s639, 8
        %s641 = scalar_lea.vmem [#allocation15], %s640
        // Predicated region
        $region85: #{decoder_layer.15} parent=47 // pred_check
          %p642 = pneg %p224
        $region86: #{decoder_layer.15} parent=47 // pred_check_branch
          %644 = sbr.rel (%p642) target = $region88
        $region87: #{decoder_layer.15} parent=47 // pred_region
          %s646 = ssub.s32 128, 128
          %647 = vsyncadd %s638, %s646
          %s648 = smul.addr %s31, 128
          %s649 = scalar_lea.hbm %s7, %s648
          %s651 = sshll.u32 %s641, 4
          %s652 = int_to_ptr.vmem [resolvable:$true] %s651
          %654 = dma.vmem_to_hbm [thread:$0]  %s652, 128, %s649, %s638
        $region88: #{decoder_layer.15} parent=47 // pred_fallthru
          _
      $region48: #{decoder_layer.15} parent=5 // pred_fallthru
        _
      %p655 = scmp.le.s32.totalorder 2, %s22
      // Predicated region
      $region89: #{decoder_layer.15} parent=5 // pred_check
        %p656 = pneg %p655
      $region90: #{decoder_layer.15} parent=5 // pred_check_branch
        %658 = sbr.rel (%p656) target = $region92
      $region91: #{decoder_layer.15} parent=5 // pred_region
        %s659 = ssub.s32 %s22, 2
        // Predicated region
        $region93: #{decoder_layer.15} parent=91 // pred_check
          %p660 = pneg %p230
        $region94: #{decoder_layer.15} parent=91 // pred_check_branch
          %662 = sbr.rel (%p660) target = $region96
        $region95: #{decoder_layer.15} parent=91 // pred_region
          %s663 = sand.u32 %s215, 1
          %s664 = scalar_lea.sflag [#allocation5], %s663
          %s665 = sand.u32 %s215, 1
          %s666 = smul.addr %s665, 8
          %s667 = scalar_lea.vmem [#allocation15], %s666
          %668 = dma.done %s664, 128
        $region96: #{decoder_layer.15} parent=91 // pred_fallthru
          _
      $region92: #{decoder_layer.15} parent=5 // pred_fallthru
        _
    $region6: #{decoder_layer.15} parent=1 // loop_footer
      %s26 = sadd.s32 1, %s22
    $region7: #{decoder_layer.15} parent=1 // loop_footer_branch
      %21 = sbr.rel target = $region3
    $region8: #{decoder_layer.15} parent=1 // loop_exit
      _
    %669 = vsyncpa [#allocation4], 1
    %s670 = scalar_lea.sflag [#allocation4], 1
    %671 = vsyncpa %s670, 1
    %672 = vsyncpa [#allocation7], 1
    %673 = vsyncpa [#allocation10], 1
    %674 = vsyncpa [#allocation13], 1
    %675 = vsyncpa [#allocation5], 1
    %s676 = scalar_lea.sflag [#allocation5], 1
    %677 = vsyncpa %s676, 1

// kernel: decoder_layer.12
$region0: #{decoder_layer.12}
  #allocation0 [shape = 'u32[]', space=smem, size = 0x4, offset = 0x4, fixed_abs, tag = 'smem constant byte address 0x4 - core index']
  #allocation1 [shape = 'u32[144,128]{1,0:T(1,128)}', space=vmem, size = 0x12000, scoped, tag = 'internal scratch']
  %s0 = inlined_call_operand.hbm [shape: f32[16,32], index: 0, kind: input, shape index: {}]
  %s1 = inlined_call_operand.hbm [shape: f32[32,64], index: 1, kind: input, shape index: {}]
  %s2 = inlined_call_operand.hbm [shape: f32[1,64], index: 2, kind: input, shape index: {}]
  %s3 = inlined_call_operand.hbm [shape: f32[16,64], index: 3, kind: output, shape index: {}]
  %s4 = sld [smem:[#allocation0]]
  $region57: #{decoder_layer.12} parent=0
    _
  %s6 = ssub.s32 1, %s4
  %s7 = scalar_select 0, %s6, %s4
  $region1: #{decoder_layer.12} parent=0
    #allocation2 [shape = 'u8[8192]{0}', space=vmem, size = 0x2000, scoped, tag = 'input window, operand 0']
    #allocation3 [shape = 's32[2]{0}', space=sflag, size = 0x8, scoped, tag = 'scoped memory for decoder_layer.12']
    #allocation4 [shape = 's32[2]{0}', space=sflag, size = 0x8, scoped, tag = 'scoped memory for decoder_layer.12']
    #allocation5 [shape = 'u8[16384]{0}', space=vmem, size = 0x4000, scoped, tag = 'input window, operand 1, single buffered']
    #allocation6 [shape = 's32[1]{0}', space=sflag, size = 0x4, scoped, tag = 'scoped memory for decoder_layer.12']
    #allocation7 [shape = 'u8[512]{0}', space=vmem, size = 0x400, scoped, tag = 'input window, operand 2, single buffered']
    #allocation8 [shape = 'u8[8192]{0}', space=vmem, size = 0x2000, scoped, tag = 'output window, operand 0']
    %8 = vsyncpa [#allocation3], 0
    %s9 = scalar_lea.sflag [#allocation3], 1
    %10 = vsyncpa %s9, 0
    %11 = vsyncpa [#allocation6], 0
    %12 = vsyncpa [#allocation4], 0
    %s13 = scalar_lea.sflag [#allocation4], 1
    %14 = vsyncpa %s13, 0
    loop: start=0, step=1, limit=4
    $region2: #{decoder_layer.12} parent=1 // loop_pre_header
      _
    $region3: #{decoder_layer.12} parent=1 // loop_header
      %s16 = sphi 0, %s20
      %p17 = scmp.ge.s32.totalorder %s16, 4
      %s23 = sphi 0, %s35
      %s24 = sphi 0, %s31
      %s25 = sphi 0, %s23
      %s26 = sphi 0, %s24
      %s27 = sphi 0, %s25
      %s28 = sphi 0, %s26
      %s38 = sphi 0, %s40
      %s41 = sphi 0, %s38
      %s42 = sphi 0, %s41
      %s58 = sphi 0, %s42
      %s64 = sphi 0, %s66
      %s67 = sphi 0, %s64
      %s68 = sphi 0, %s67
      %s84 = sphi 0, %s68
      %s90 = sphi 0, %s92
      %s93 = sphi 0, %s90
      %s94 = sphi 0, %s93
      %s110 = sphi 0, %s94
      %s118 = sphi 0, %s120
      %s121 = sphi 0, %s118
      %s122 = sphi 0, %s121
      %s138 = sphi 0, %s122
    $region4: #{decoder_layer.12} parent=1 // loop_header_branch
      %19 = sbr.rel (%p17) target = $region8
    $region5: #{decoder_layer.12} parent=1 // loop_body
      %s21 = ssub.s32 %s16, 1
      %s22 = ssub.s32 %s16, 2
      %s29 = sadd.s32 1, %s24
      %p30 = scmp.ge.s32.totalorder %s29, 1
      %s31 = scalar_select %p30, 0, %s29
      %s32 = sadd.s32 1, %s23
      %s33 = scalar_select %p30, %s32, %s23
      %p34 = scmp.ge.s32.totalorder %s33, 2
      %s35 = scalar_select %p34, 0, %s33
      %s36 = ssub.s32 %s23, %s35
      %p37 = scmp.eq.s32.totalorder %s36, 0
      %s39 = sadd.s32 %s38, 1
      %s40 = scalar_select %p37, %s38, %s39
      %p43 = pneg %p37
      %p44 = scmp.eq.s32.totalorder %s16, 1
      %p45 = por %p43, %p44
      %p46 = scmp.ne.s32.totalorder %s38, %s41
      %p47 = scmp.eq.s32.totalorder %s16, 0
      %p48 = por %p46, %p47
      %p49 = scmp.ne.s32.totalorder %s38, %s41
      %p50 = scmp.eq.s32.totalorder %s21, 1
      %p51 = por %p49, %p50
      %p52 = scmp.ne.s32.totalorder %s41, %s42
      %p53 = scmp.eq.s32.totalorder %s21, 0
      %p54 = por %p52, %p53
      %p55 = scmp.ne.s32.totalorder %s41, %s42
      %p56 = scmp.eq.s32.totalorder %s22, 1
      %p57 = por %p55, %p56
      %p59 = scmp.ne.s32.totalorder %s42, %s58
      %p60 = scmp.eq.s32.totalorder %s22, 0
      %p61 = por %p59, %p60
      %s62 = ssub.s32 %s24, %s31
      %p63 = scmp.eq.s32.totalorder %s62, 0
      %s65 = sadd.s32 %s64, 1
      %s66 = scalar_select %p63, %s64, %s65
      %p69 = pneg %p63
      %p70 = scmp.eq.s32.totalorder %s16, 1
      %p71 = por %p69, %p70
      %p72 = scmp.ne.s32.totalorder %s64, %s67
      %p73 = scmp.eq.s32.totalorder %s16, 0
      %p74 = por %p72, %p73
      %p75 = scmp.ne.s32.totalorder %s64, %s67
      %p76 = scmp.eq.s32.totalorder %s21, 1
      %p77 = por %p75, %p76
      %p78 = scmp.ne.s32.totalorder %s67, %s68
      %p79 = scmp.eq.s32.totalorder %s21, 0
      %p80 = por %p78, %p79
      %p81 = scmp.ne.s32.totalorder %s67, %s68
      %p82 = scmp.eq.s32.totalorder %s22, 1
      %p83 = por %p81, %p82
      %p85 = scmp.ne.s32.totalorder %s68, %s84
      %p86 = scmp.eq.s32.totalorder %s22, 0
      %p87 = por %p85, %p86
      %s88 = ssub.s32 %s24, %s31
      %p89 = scmp.eq.s32.totalorder %s88, 0
      %s91 = sadd.s32 %s90, 1
      %s92 = scalar_select %p89, %s90, %s91
      %p95 = pneg %p89
      %p96 = scmp.eq.s32.totalorder %s16, 1
      %p97 = por %p95, %p96
      %p98 = scmp.ne.s32.totalorder %s90, %s93
      %p99 = scmp.eq.s32.totalorder %s16, 0
      %p100 = por %p98, %p99
      %p101 = scmp.ne.s32.totalorder %s90, %s93
      %p102 = scmp.eq.s32.totalorder %s21, 1
      %p103 = por %p101, %p102
      %p104 = scmp.ne.s32.totalorder %s93, %s94
      %p105 = scmp.eq.s32.totalorder %s21, 0
      %p106 = por %p104, %p105
      %p107 = scmp.ne.s32.totalorder %s93, %s94
      %p108 = scmp.eq.s32.totalorder %s22, 1
      %p109 = por %p107, %p108
      %p111 = scmp.ne.s32.totalorder %s94, %s110
      %p112 = scmp.eq.s32.totalorder %s22, 0
      %p113 = por %p111, %p112
      %s114 = ssub.s32 %s23, %s35
      %s115 = ssub.s32 %s24, %s31
      %s116 = sor.u32 %s114, %s115
      %p117 = scmp.eq.s32.totalorder %s116, 0
      %s119 = sadd.s32 %s118, 1
      %s120 = scalar_select %p117, %s118, %s119
      %p123 = pneg %p117
      %p124 = scmp.eq.s32.totalorder %s16, 1
      %p125 = por %p123, %p124
      %p126 = scmp.ne.s32.totalorder %s118, %s121
      %p127 = scmp.eq.s32.totalorder %s16, 0
      %p128 = por %p126, %p127
      %p129 = scmp.ne.s32.totalorder %s118, %s121
      %p130 = scmp.eq.s32.totalorder %s21, 1
      %p131 = por %p129, %p130
      %p132 = scmp.ne.s32.totalorder %s121, %s122
      %p133 = scmp.eq.s32.totalorder %s21, 0
      %p134 = por %p132, %p133
      %p135 = scmp.ne.s32.totalorder %s121, %s122
      %p136 = scmp.eq.s32.totalorder %s22, 1
      %p137 = por %p135, %p136
      %p139 = scmp.ne.s32.totalorder %s122, %s138
      %p140 = scmp.eq.s32.totalorder %s22, 0
      %p141 = por %p139, %p140
      %p142 = scmp.le.s32.totalorder 1, %s16
      %p143 = scmp.lt.s32.totalorder %s16, 3
      %p144 = pnand %p142, %p143
      %p145 = pneg %p144
      // Predicated region
      $region9: #{decoder_layer.12} parent=5 // pred_check
        _
      $region10: #{decoder_layer.12} parent=5 // pred_check_branch
        %147 = sbr.rel (%p144) target = $region12
      $region11: #{decoder_layer.12} parent=5 // pred_region
        %s148 = ssub.s32 %s16, 1
        // Predicated region
        $region13: #{decoder_layer.12} parent=11 // pred_check
          %p149 = pneg %p80
        $region14: #{decoder_layer.12} parent=11 // pred_check_branch
          %151 = sbr.rel (%p149) target = $region16
        $region15: #{decoder_layer.12} parent=11 // pred_region
          %s153 = ssub.s32 512, 512
          %154 = vsyncadd [#allocation6], %s153
          %s155 = smul.addr %s26, 128
          %s156 = scalar_lea.hbm %s1, %s155
          %s157 = sshll.u32 [#allocation5], 4
          %s158 = int_to_ptr.vmem [resolvable:$true] %s157
          %163 = dma.hbm_to_vmem [thread:$0]  %s156, 512, %s158, [#allocation6], 128, 128, 8
        $region16: #{decoder_layer.12} parent=11 // pred_fallthru
          _
        // Predicated region
        $region17: #{decoder_layer.12} parent=11 // pred_check
          %p164 = pneg %p106
        $region18: #{decoder_layer.12} parent=11 // pred_check_branch
          %166 = sbr.rel (%p164) target = $region20
        $region19: #{decoder_layer.12} parent=11 // pred_region
          %s168 = ssub.s32 16, 16
          %169 = vsyncadd [#allocation6], %s168
          %s170 = smul.addr %s26, 16
          %s171 = scalar_lea.hbm %s2, %s170
          %s173 = sshll.u32 [#allocation7], 4
          %s174 = int_to_ptr.vmem [resolvable:$true] %s173
          %176 = dma.hbm_to_vmem [thread:$0]  %s171, 16, %s174, [#allocation6]
        $region20: #{decoder_layer.12} parent=11 // pred_fallthru
          _
      $region12: #{decoder_layer.12} parent=5 // pred_fallthru
        _
      %p177 = scmp.lt.s32.totalorder %s16, 2
      // Predicated region
      $region21: #{decoder_layer.12} parent=5 // pred_check
        %p178 = pneg %p177
      $region22: #{decoder_layer.12} parent=5 // pred_check_branch
        %180 = sbr.rel (%p178) target = $region24
      $region23: #{decoder_layer.12} parent=5 // pred_region
        // Predicated region
        $region25: #{decoder_layer.12} parent=23 // pred_check
          %p181 = pneg %p48
        $region26: #{decoder_layer.12} parent=23 // pred_check_branch
          %183 = sbr.rel (%p181) target = $region28
        $region27: #{decoder_layer.12} parent=23 // pred_region
          %s184 = sand.u32 %s38, 1
          %s185 = scalar_lea.sflag [#allocation3], %s184
          %s186 = sand.u32 %s38, 1
          %s187 = smul.addr %s186, 8
          %s188 = scalar_lea.vmem [#allocation2], %s187
          %s190 = ssub.s32 128, 128
          %191 = vsyncadd %s185, %s190
          %s192 = smul.addr %s23, 128
          %s193 = scalar_lea.hbm %s0, %s192
          %s195 = sshll.u32 %s188, 4
          %s196 = int_to_ptr.vmem [resolvable:$true] %s195
          %198 = dma.hbm_to_vmem [thread:$0]  %s193, 128, %s196, %s185
        $region28: #{decoder_layer.12} parent=23 // pred_fallthru
          _
      $region24: #{decoder_layer.12} parent=5 // pred_fallthru
        _
      %p199 = scmp.le.s32.totalorder 1, %s16
      %p200 = scmp.lt.s32.totalorder %s16, 3
      %p201 = pnand %p199, %p200
      %p202 = pneg %p201
      // Predicated region
      $region29: #{decoder_layer.12} parent=5 // pred_check
        _
      $region30: #{decoder_layer.12} parent=5 // pred_check_branch
        %204 = sbr.rel (%p201) target = $region32
      $region31: #{decoder_layer.12} parent=5 // pred_region
        %s205 = ssub.s32 %s16, 1
        %s206 = sand.u32 %s41, 1
        %s207 = scalar_lea.sflag [#allocation3], %s206
        %s208 = sand.u32 %s41, 1
        %s209 = smul.addr %s208, 8
        %s210 = scalar_lea.vmem [#allocation2], %s209
        // Predicated region
        $region33: #{decoder_layer.12} parent=31 // pred_check
          %p211 = pneg %p54
        $region34: #{decoder_layer.12} parent=31 // pred_check_branch
          %213 = sbr.rel (%p211) target = $region36
        $region35: #{decoder_layer.12} parent=31 // pred_region
          %214 = dma.done %s207, 128
        $region36: #{decoder_layer.12} parent=31 // pred_fallthru
          _
        // Predicated region
        $region37: #{decoder_layer.12} parent=31 // pred_check
          %p215 = pneg %p80
        $region38: #{decoder_layer.12} parent=31 // pred_check_branch
          %217 = sbr.rel (%p215) target = $region40
        $region39: #{decoder_layer.12} parent=31 // pred_region
          %218 = dma.done [#allocation6], 512
        $region40: #{decoder_layer.12} parent=31 // pred_fallthru
          _
        // Predicated region
        $region41: #{decoder_layer.12} parent=31 // pred_check
          %p219 = pneg %p106
        $region42: #{decoder_layer.12} parent=31 // pred_check_branch
          %221 = sbr.rel (%p219) target = $region44
        $region43: #{decoder_layer.12} parent=31 // pred_region
          %222 = dma.done [#allocation6], 16
        $region44: #{decoder_layer.12} parent=31 // pred_fallthru
          _
        %s223 = sand.u32 %s41, 1
        %s224 = scalar_lea.sflag [#allocation3], %s223
        %s225 = sand.u32 %s41, 1
        %s226 = smul.addr %s225, 8
        %s227 = scalar_lea.vmem [#allocation2], %s226
        %p228 = pneg %p54
        %p229 = pneg %p51
        %p230 = pneg %p80
        %p231 = pneg %p77
        %p232 = pneg %p106
        %p233 = pneg %p103
        %p234 = pneg %p134
        %p235 = pneg %p131
        %s236 = sand.u32 %s121, 1
        %s237 = scalar_lea.sflag [#allocation4], %s236
        %s238 = sand.u32 %s121, 1
        %s239 = smul.addr %s238, 8
        %s240 = scalar_lea.vmem [#allocation8], %s239
        %v241 = vld [vmem:[%s210] sm:$0xff]
        %v242 = vld [vmem:[#allocation5] sm:$0xff]
        %v243 = vld [vmem:[#allocation5 + $0x8] sm:$0xff]
        %v244 = vld [vmem:[#allocation5 + $0x10] sm:$0xff]
        %v245 = vld [vmem:[#allocation5 + $0x18] sm:$0xff]
        %v246 = vld [vmem:[#allocation7] sm:$0x1]
        %v248 = vlaneseq
        %v249 = vshrl.u32 %v248, 7
        %v250 = vsub.s32 0, %v249
        %v251 = vrot.slane %v246, %v250
        %vm253 = vcmask 261120
        %v255 = vsel %vm253, %v241, 0
        %257 = vmatprep.subr.mxu0 0.0
        %258 = vmatpush1.msra.mxu0 %v242
        %259 = vmatprep.subr.mxu0 0.0
        %260 = vmatpush1.msra.mxu0 %v243
        %261 = vmatprep.subr.mxu0 0.0
        %262 = vmatpush1.msra.mxu0 %v244
        %263 = vmatprep.subr.mxu0 0.0
        %264 = vmatpush1.msra.mxu0 %v245
        %265 = vmatprep.subr.mxu0 0.0
        %266 = vmatpush1.msra.mxu0 0.0
        %267 = vmatprep.subr.mxu0 0.0
        %268 = vmatpush1.msra.mxu0 0.0
        %269 = vmatprep.subr.mxu0 0.0
        %270 = vmatpush1.msra.mxu0 0.0
        %271 = vmatprep.subr.mxu0 0.0
        %272 = vmatpush1.msra.mxu0 0.0
        %273 = vmatprep.subr.mxu0 0.0
        %274 = vmatpush1.msra.mxu0 0.0
        %275 = vmatprep.subr.mxu0 0.0
        %276 = vmatpush1.msra.mxu0 0.0
        %277 = vmatprep.subr.mxu0 0.0
        %278 = vmatpush1.msra.mxu0 0.0
        %279 = vmatprep.subr.mxu0 0.0
        %280 = vmatpush1.msra.mxu0 0.0
        %281 = vmatprep.subr.mxu0 0.0
        %282 = vmatpush1.msra.mxu0 0.0
        %283 = vmatprep.subr.mxu0 0.0
        %284 = vmatpush1.msra.mxu0 0.0
        %285 = vmatprep.subr.mxu0 0.0
        %286 = vmatpush1.msra.mxu0 0.0
        %287 = vmatprep.subr.mxu0 0.0
        %288 = vmatpush1.msra.mxu0 0.0
        %289 = vmatprep.subr.mxu0 0.0
        %290 = vmatpush1.msra.mxu0 0.0
        %291 = vmatprep.subr.mxu0 0.0
        %292 = vmatpush1.msra.mxu0 0.0
        %293 = vmatprep.subr.mxu0 0.0
        %294 = vmatpush1.msra.mxu0 0.0
        %295 = vmatprep.subr.mxu0 0.0
        %296 = vmatpush1.msra.mxu0 0.0
        %297 = vmatprep.subr.mxu0 0.0
        %298 = vmatpush1.msra.mxu0 0.0
        %299 = vmatprep.subr.mxu0 0.0
        %300 = vmatpush1.msra.mxu0 0.0
        %301 = vmatprep.subr.mxu0 0.0
        %302 = vmatpush1.msra.mxu0 0.0
        %303 = vmatprep.subr.mxu0 0.0
        %304 = vmatpush1.msra.mxu0 0.0
        %305 = vmatprep.subr.mxu0 0.0
        %306 = vmatpush1.msra.mxu0 0.0
        %307 = vmatprep.subr.mxu0 0.0
        %308 = vmatpush1.msra.mxu0 0.0
        %309 = vmatprep.subr.mxu0 0.0
        %310 = vmatpush1.msra.mxu0 0.0
        %311 = vmatprep.subr.mxu0 0.0
        %312 = vmatpush1.msra.mxu0 0.0
        %313 = vmatprep.subr.mxu0 0.0
        %314 = vmatpush1.msra.mxu0 0.0
        %315 = vmatprep.subr.mxu0 0.0
        %316 = vmatpush1.msra.mxu0 0.0
        %317 = vmatprep.subr.mxu0 0.0
        %318 = vmatpush1.msra.mxu0 0.0
        %319 = vmatprep.subr.mxu0 0.0
        %320 = vmatpush1.msra.mxu0 0.0
        %321 = vmatprep.mubr.f32.mxu0 0.0
        %322 = vmatmul.mubr.f32.gmra.mrb[0].mxu0 %v255
        %v323 = vpop.f32.mrb[0].mxu0
        %v324 = vadd.f32 %v251, %v323
        %v325 = vpop.f32.mrb[0].mxu0
        %326 = vdwg.mxu0
        %vm327 = vcmask 523264
        %328 = vst.msk [vmem:[%s240] sm:$0xff] %vm327, %v324
        %s329 = sand.u32 %s121, 1
        %s330 = scalar_lea.sflag [#allocation4], %s329
        %s331 = sand.u32 %s121, 1
        %s332 = smul.addr %s331, 8
        %s333 = scalar_lea.vmem [#allocation8], %s332
        // Predicated region
        $region45: #{decoder_layer.12} parent=31 // pred_check
          %p334 = pneg %p131
        $region46: #{decoder_layer.12} parent=31 // pred_check_branch
          %336 = sbr.rel (%p334) target = $region48
        $region47: #{decoder_layer.12} parent=31 // pred_region
          %s338 = ssub.s32 128, 128
          %339 = vsyncadd %s330, %s338
          %s340 = sadd.s32 %s26, %s25
          %s341 = smul.addr %s340, 128
          %s342 = scalar_lea.hbm %s3, %s341
          %s344 = sshll.u32 %s333, 4
          %s345 = int_to_ptr.vmem [resolvable:$true] %s344
          %347 = dma.vmem_to_hbm [thread:$0]  %s345, 128, %s342, %s330
        $region48: #{decoder_layer.12} parent=31 // pred_fallthru
          _
      $region32: #{decoder_layer.12} parent=5 // pred_fallthru
        _
      %p348 = scmp.le.s32.totalorder 2, %s16
      // Predicated region
      $region49: #{decoder_layer.12} parent=5 // pred_check
        %p349 = pneg %p348
      $region50: #{decoder_layer.12} parent=5 // pred_check_branch
        %351 = sbr.rel (%p349) target = $region52
      $region51: #{decoder_layer.12} parent=5 // pred_region
        %s352 = ssub.s32 %s16, 2
        // Predicated region
        $region53: #{decoder_layer.12} parent=51 // pred_check
          %p353 = pneg %p137
        $region54: #{decoder_layer.12} parent=51 // pred_check_branch
          %355 = sbr.rel (%p353) target = $region56
        $region55: #{decoder_layer.12} parent=51 // pred_region
          %s356 = sand.u32 %s122, 1
          %s357 = scalar_lea.sflag [#allocation4], %s356
          %s358 = sand.u32 %s122, 1
          %s359 = smul.addr %s358, 8
          %s360 = scalar_lea.vmem [#allocation8], %s359
          %361 = dma.done %s357, 128
        $region56: #{decoder_layer.12} parent=51 // pred_fallthru
          _
      $region52: #{decoder_layer.12} parent=5 // pred_fallthru
        _
    $region6: #{decoder_layer.12} parent=1 // loop_footer
      %s20 = sadd.s32 1, %s16
    $region7: #{decoder_layer.12} parent=1 // loop_footer_branch
      %15 = sbr.rel target = $region3
    $region8: #{decoder_layer.12} parent=1 // loop_exit
      _
    %362 = vsyncpa [#allocation3], 1
    %s363 = scalar_lea.sflag [#allocation3], 1
    %364 = vsyncpa %s363, 1
    %365 = vsyncpa [#allocation6], 1
    %366 = vsyncpa [#allocation4], 1
    %s367 = scalar_lea.sflag [#allocation4], 1
    %368 = vsyncpa %s367, 1

</llo_original>
